<compile_context>
chip_gen: v7x
topology: tpu7x:2x2x1
jax: 0.10.0
libtpu: 0.0.40
codegen_flags: <defaults>
</compile_context>

<pallas_src>
import numpy as np

import jax
import jax.numpy as jnp
from jax.experimental import pallas as pl
from jax.experimental.pallas import tpu as pltpu

NEG_SLOPE = 0.01      # torch.nn.LeakyReLU default negative_slope
_NEG_BIG = -1e30      # "-inf" stand-in for masked maxima


def _leaky_relu(x):
    return jnp.where(x > 0, x, NEG_SLOPE * x)


def _dot(a, b):
    return jnp.dot(a, b, preferred_element_type=jnp.float32)


def _round_up(a, b):
    return -(-a // b) * b


def _vmem_limit_bytes():
    try:
        cap = int(pltpu.get_tpu_info().vmem_capacity_bytes)
    except Exception:
        cap = 64 * 1024 * 1024          # conservative (v7x-sized) fallback
    # ~75% of physical VMEM: ~96 MiB on v5e/v6e (128 MiB), ~48 MiB on v7x (64 MiB)
    return int(min(cap * 3 // 4, 112 * 1024 * 1024))


def _pick_edge_tile(n_pad, f, h, gh, mh, vmem_limit):
    """Edge-tile rows (multiple of 128) sized so the per-tile working set
    (bf16 one-hots S/B/S^T dominate, plus per-edge f32 slabs) fits the budget."""
    per_row = 6 * n_pad + 4 * (2 * (f + 1) + h * gh + h * mh + 256)
    tm = (vmem_limit // 3) // max(per_row, 1)
    tm = (tm // 128) * 128
    return int(min(max(tm, 128), 4096))


def message_layer_kernel(
    x_ref,           # (Npad, F+1) f32 : node features, last column = log(weight)
    selfc_ref,       # (TM, 1)  int32  : self index, column form (S, valid mask)
    selfr_ref,       # (1, TM)  int32  : self index, row form    (S^T)
    nbrc_ref,        # (TM, 1)  int32  : neighbor index, column form (B)
    gW1_ref, gb1_ref, gW2_ref, gb2_ref,     # gate MLP   (bf16, f32, bf16, f32)
    mW1_ref, mb1_ref, mW2_ref, mb2_ref,     # message MLP(bf16, f32, bf16, bf16)
    pow_ref,         # (1, H) f32
    out_ref,         # (Npad, F) f32   : resident accumulator (+ residual)
    gmax_s,          # (1, H) f32      : running global per-head logit max
    segsum_s,        # (Npad, H) f32   : running per-node softmax denominators
):
    phase = pl.program_id(0)     # 0: seg-max / seg-sum pass, 1: message pass
    tile = pl.program_id(1)

    npad, faug = x_ref.shape
    F = faug - 1
    TM = selfc_ref.shape[0]
    H = pow_ref.shape[1]
    inv_h = 1.0 / H

    x_aug = x_ref[...]                                   # f32 (resident)
    x_bf = x_aug.astype(jnp.bfloat16)
    self_c = selfc_ref[...]                              # (TM, 1)
    nbr_c = nbrc_ref[...]                                # (TM, 1)
    valid = self_c < npad                                # padded edges -> False

    # ---- one-hot gather / scatter matrices, built in-register (exact in bf16) ----
    lane_n = jax.lax.broadcasted_iota(jnp.int32, (TM, npad), 1)
    S = (lane_n == self_c).astype(jnp.bfloat16)          # (TM, Npad)
    B = (lane_n == nbr_c).astype(jnp.bfloat16)           # (TM, Npad)
    sub_n = jax.lax.broadcasted_iota(jnp.int32, (npad, TM), 0)
    ST = (sub_n == selfr_ref[...]).astype(jnp.bfloat16)  # (Npad, TM), no transpose

    # ---- gathers as MXU matmuls; log(nbr weight) folded into the same matmul ----
    self_aug = _dot(S, x_bf)                             # (TM, F+1)
    nbr_aug = _dot(B, x_bf)                              # (TM, F+1)
    self_fea = self_aug[:, :F].astype(jnp.bfloat16)
    nbr_fea = nbr_aug[:, :F].astype(jnp.bfloat16)
    log_nbr_w = nbr_aug[:, F:]                           # (TM, 1) f32

    # ---- gate MLP, all heads batched (needed by both phases) ----
    gW1 = gW1_ref[...]
    g1 = _leaky_relu(_dot(self_fea, gW1[:F]) + _dot(nbr_fea, gW1[F:]) + gb1_ref[...])
    logits = _dot(g1.astype(jnp.bfloat16), gW2_ref[...]) + gb2_ref[...]   # (TM, H)
    shift = log_nbr_w * pow_ref[...]                     # pow_h * log(w_nbr), (TM, H)

    @pl.when(jnp.logical_and(phase == 0, tile == 0))
    def _init():
        gmax_s[...] = jnp.full_like(gmax_s, _NEG_BIG)
        segsum_s[...] = jnp.zeros_like(segsum_s)
        out_ref[...] = x_aug[:, :F]                      # residual term

    @pl.when(phase == 0)
    def _pass_max_and_sum():
        # Online global per-head max (the shift cancels exactly in the softmax).
        old = gmax_s[...]
        tile_max = jnp.max(jnp.where(valid, logits, _NEG_BIG), axis=0, keepdims=True)
        new = jnp.maximum(old, tile_max)
        gmax_s[...] = new
        wexp = jnp.exp(logits - new + shift) * valid.astype(jnp.float32)   # (TM, H)
        segsum_s[...] = (segsum_s[...] * jnp.exp(old - new)
                         + _dot(ST, wexp.astype(jnp.bfloat16)))            # (Npad, H)

    @pl.when(phase == 1)
    def _pass_message():
        wexp = jnp.exp(logits - gmax_s[...] + shift) * valid.astype(jnp.float32)
        gsum = _dot(S, segsum_s[...].astype(jnp.bfloat16))                 # (TM, H)
        gate = wexp / (gsum + 1e-10)                                       # (TM, H)

        mW1 = mW1_ref[...]
        m1 = _leaky_relu(_dot(self_fea, mW1[:F]) + _dot(nbr_fea, mW1[F:])
                         + mb1_ref[...])                                   # (TM, H*Mh)
        Mh = m1.shape[1] // H
        # lane-side replication of each head's gate over its Mh columns (VPU, no MXU)
        gate_rep = jnp.concatenate(
            [jnp.broadcast_to(gate[:, h:h + 1], (TM, Mh)) for h in range(H)], axis=1)
        # sum_h gate_h*(m_h@W2_h + b2_h) == (m1*gate_rep)@W2_stack + gate@b2_stack
        weighted = (_dot((m1 * gate_rep).astype(jnp.bfloat16), mW2_ref[...])
                    + _dot(gate.astype(jnp.bfloat16), mb2_ref[...]))       # (TM, F)
        # single head-combined scatter-add into the resident output accumulator
        out_ref[...] += _dot(ST, weighted.astype(jnp.bfloat16)) * inv_h


def message_layer(elem_weights, elem_in_fea, self_fea_idx, nbr_fea_idx, params,
                  *, edge_tile=None):
    """Roost MessageLayer forward (all attention heads) as one Pallas call."""
    N, F = elem_in_fea.shape
    M = int(self_fea_idx.shape[0])
    H, _, Gh = params['gW1'].shape
    Mh = params['mW1'].shape[2]

    vmem_limit = _vmem_limit_bytes()
    n_pad = _round_up(N, 8)
    if edge_tile is None:
        edge_tile = _pick_edge_tile(n_pad, F, H, Gh, Mh, vmem_limit)
    m_pad = _round_up(M, edge_tile)
    n_tiles = m_pad // edge_tile

    # Node features + trailing log-weight column (weight gather rides B @ x_aug).
    w = jnp.reshape(elem_weights, (N,)).astype(jnp.float32)     # assumed > 0
    x = elem_in_fea.astype(jnp.float32)
    x_aug = jnp.concatenate([x, jnp.log(w)[:, None]], axis=1)   # (N, F+1)
    x_aug = jnp.pad(x_aug, ((0, n_pad - N), (0, 0)))

    # Edge indices, padded with the out-of-range value n_pad -> zero one-hot rows.
    self_i = jnp.pad(self_fea_idx.astype(jnp.int32), (0, m_pad - M),
                     constant_values=n_pad)
    nbr_i = jnp.pad(nbr_fea_idx.astype(jnp.int32), (0, m_pad - M))
    self_col = self_i[:, None]          # (m_pad, 1)
    self_row = self_i[None, :]          # (1, m_pad)  lane-dense, feeds S^T
    nbr_col = nbr_i[:, None]            # (m_pad, 1)

    # Head-batched weights; matmul operands pre-cast to bf16, biases kept f32.
    f32, bf16 = jnp.float32, jnp.bfloat16
    gW1b = jnp.transpose(params['gW1'], (1, 0, 2)).reshape(2 * F, H * Gh).astype(bf16)
    gb1b = jnp.transpose(params['gb1'], (1, 0, 2)).reshape(1, H * Gh).astype(f32)
    eye_h = jnp.eye(H, dtype=f32)
    gW2b = (params['gW2'][:, :, 0][:, :, None]
            * eye_h[:, None, :]).reshape(H * Gh, H).astype(bf16)   # block-diagonal
    gb2b = params['gb2'].reshape(1, H).astype(f32)
    mW1b = jnp.transpose(params['mW1'], (1, 0, 2)).reshape(2 * F, H * Mh).astype(bf16)
    mb1b = jnp.transpose(params['mb1'], (1, 0, 2)).reshape(1, H * Mh).astype(f32)
    mW2s = params['mW2'].reshape(H * Mh, F).astype(bf16)
    mb2s = params['mb2'].reshape(H, F).astype(bf16)
    pow_row = params['pow'].reshape(1, H).astype(f32)

    whole = lambda p, t: (0, 0)
    edge_col = lambda p, t: (t, 0)
    edge_row = lambda p, t: (0, t)
    in_specs = [
        pl.BlockSpec((n_pad, F + 1), whole),          # x_aug (resident)
        pl.BlockSpec((edge_tile, 1), edge_col),       # self_col
        pl.BlockSpec((1, edge_tile), edge_row),       # self_row
        pl.BlockSpec((edge_tile, 1), edge_col),       # nbr_col
        pl.BlockSpec((2 * F, H * Gh), whole),         # gW1b
        pl.BlockSpec((1, H * Gh), whole),             # gb1b
        pl.BlockSpec((H * Gh, H), whole),             # gW2b
        pl.BlockSpec((1, H), whole),                  # gb2b
        pl.BlockSpec((2 * F, H * Mh), whole),         # mW1b
        pl.BlockSpec((1, H * Mh), whole),             # mb1b
        pl.BlockSpec((H * Mh, F), whole),             # mW2s
        pl.BlockSpec((H, F), whole),                  # mb2s
        pl.BlockSpec((1, H), whole),                  # pow_row
    ]

    out = pl.pallas_call(
        message_layer_kernel,
        out_shape=jax.ShapeDtypeStruct((n_pad, F), jnp.float32),
        grid_spec=pltpu.PrefetchScalarGridSpec(
            num_scalar_prefetch=0,
            grid=(2, n_tiles),        # (phase, edge tile); phase 0 finishes first
            in_specs=in_specs,
            out_specs=pl.BlockSpec((n_pad, F), whole),
            scratch_shapes=[
                pltpu.VMEM((1, H), jnp.float32),      # running global per-head max
                pltpu.VMEM((n_pad, H), jnp.float32),  # per-node softmax denominators
            ],
        ),
        compiler_params=pltpu.CompilerParams(
            # Both axes carry state in scratch / the resident output -> sequential.
            dimension_semantics=("arbitrary", "arbitrary"),
            vmem_limit_bytes=vmem_limit,
        ),
    )(x_aug, self_col, self_row, nbr_col,
      gW1b, gb1b, gW2b, gb2b, mW1b, mb1b, mW2s, mb2s, pow_row)
    return out[:N]


def message_layer_ref(elem_weights, elem_in_fea, self_idx, nbr_idx, params):
    """Pure-JAX reference matching the PyTorch forward."""
    N, _ = elem_in_fea.shape
    nbr_w = elem_weights[nbr_idx]
    self_fea = elem_in_fea[self_idx]
    nbr_fea = elem_in_fea[nbr_idx]
    fea = jnp.concatenate([self_fea, nbr_fea], axis=1)
    num_heads = params['gW1'].shape[0]
    heads = []
    for h in range(num_heads):
        g = _leaky_relu(fea @ params['gW1'][h] + params['gb1'][h])
        gate = g @ params['gW2'][h] + params['gb2'][h]
        seg_max = jax.ops.segment_max(gate, self_idx, num_segments=N)
        gate = gate - seg_max[self_idx]
        gate = (nbr_w ** params['pow'][h]) * jnp.exp(gate)
        seg_sum = jax.ops.segment_sum(gate, self_idx, num_segments=N)
        gate = gate / (seg_sum[self_idx] + 1e-10)
        m = _leaky_relu(fea @ params['mW1'][h] + params['mb1'][h])
        msg = m @ params['mW2'][h] + params['mb2'][h]
        heads.append(jax.ops.segment_sum(gate * msg, self_idx, num_segments=N))
    return jnp.mean(jnp.stack(heads), axis=0) + elem_in_fea


def init_params(key, elem_fea_len, elem_heads, gate_hidden, msg_hidden):
    """Deterministic synthetic parameters (shapes follow the module __init__)."""
    ks = jax.random.split(key, 9)
    F, H = elem_fea_len, elem_heads
    s = 0.1
    return {
        # gate_nn = SimpleNetwork(2F, 1, [gate_hidden])
        'gW1': s * jax.random.normal(ks[0], (H, 2 * F, gate_hidden), jnp.float32),
        'gb1': s * jax.random.normal(ks[1], (H, 1, gate_hidden), jnp.float32),
        'gW2': s * jax.random.normal(ks[2], (H, gate_hidden, 1), jnp.float32),
        'gb2': s * jax.random.normal(ks[3], (H, 1, 1), jnp.float32),
        # message_nn = SimpleNetwork(2F, F, [msg_hidden])
        'mW1': s * jax.random.normal(ks[4], (H, 2 * F, msg_hidden), jnp.float32),
        'mb1': s * jax.random.normal(ks[5], (H, 1, msg_hidden), jnp.float32),
        'mW2': s * jax.random.normal(ks[6], (H, msg_hidden, F), jnp.float32),
        'mb2': s * jax.random.normal(ks[7], (H, 1, F), jnp.float32),
        # self.pow = nn.Parameter(torch.randn(1)) per head
        'pow': jax.random.normal(ks[8], (H, 1, 1), jnp.float32),
    }


if __name__ == "__main__":
    # Small problem: N nodes, M edges, F = elem_fea_len, H heads.
    N, F, H = 20, 32, 3
    GATE_HIDDEN, MSG_HIDDEN = 32, 32
    EDGES_PER_NODE = 16
    M = N * EDGES_PER_NODE          # 320 edges -> 3 tiles of 128 (grid (2, 3))

    key = jax.random.PRNGKey(0)
    k_w, k_x, k_nbr, k_p = jax.random.split(key, 4)

    elem_weights = jax.random.uniform(k_w, (N, 1), jnp.float32, 0.1, 1.0)
    elem_in_fea = jax.random.normal(k_x, (N, F), jnp.float32)
    self_fea_idx = jnp.repeat(jnp.arange(N, dtype=jnp.int32), EDGES_PER_NODE)   # (M,)
    nbr_fea_idx = jax.random.randint(k_nbr, (M,), 0, N, dtype=jnp.int32)        # (M,)

    params = init_params(k_p, F, H, GATE_HIDDEN, MSG_HIDDEN)

    # edge_tile=128 forces multiple edge tiles so the two-pass segment softmax
    # (running max + online-rescaled seg-sum across tiles) is actually exercised.
    out = message_layer(elem_weights, elem_in_fea, self_fea_idx, nbr_fea_idx,
                        params, edge_tile=128)
    out = jax.block_until_ready(out)

    ref = message_layer_ref(elem_weights, elem_in_fea, self_fea_idx, nbr_fea_idx,
                            params)
    # Tolerance reflects the deliberate bf16 MXU passes (f32 accumulation) in the
    # kernel vs. the default-precision pure-JAX reference.
    np.testing.assert_allclose(np.asarray(out), np.asarray(ref), rtol=3e-3, atol=2e-3)

    print("KERNEL_OK")
</pallas_src>

<mosaic_0001>
module attributes {stable_mosaic.version = 11 : i64} {
  func.func @message_layer_kernel(%arg0: i32, %arg1: i32, %arg2: memref<24x33xf32, #tpu.memory_space<vmem>>, %arg3: memref<128x1xi32, #tpu.memory_space<vmem>>, %arg4: memref<1x128xi32, #tpu.memory_space<vmem>>, %arg5: memref<128x1xi32, #tpu.memory_space<vmem>>, %arg6: memref<64x96xbf16, #tpu.memory_space<vmem>>, %arg7: memref<1x96xf32, #tpu.memory_space<vmem>>, %arg8: memref<96x3xbf16, #tpu.memory_space<vmem>>, %arg9: memref<1x3xf32, #tpu.memory_space<vmem>>, %arg10: memref<64x96xbf16, #tpu.memory_space<vmem>>, %arg11: memref<1x96xf32, #tpu.memory_space<vmem>>, %arg12: memref<96x32xbf16, #tpu.memory_space<vmem>>, %arg13: memref<3x32xbf16, #tpu.memory_space<vmem>>, %arg14: memref<1x3xf32, #tpu.memory_space<vmem>>, %arg15: memref<24x32xf32, #tpu.memory_space<vmem>>, %arg16: memref<1x3xf32, #tpu.memory_space<vmem>>, %arg17: memref<24x3xf32, #tpu.memory_space<vmem>>) attributes {dimension_semantics = [#tpu.dimension_semantics<arbitrary>, #tpu.dimension_semantics<arbitrary>], iteration_bounds = array<i64: 2, 3>, scalar_prefetch = 0 : i64, scratch_operands = 2 : i64, tpu.core_type = #tpu.core_type<tc>, window_params = [{pipeline_mode = #tpu.pipeline_mode<synchronous>, transform_indices = @transform_0, window_bounds = array<i64: 24, 33>}, {transform_indices = @transform_1, window_bounds = array<i64: 128, 1>}, {transform_indices = @transform_2, window_bounds = array<i64: 1, 128>}, {transform_indices = @transform_3, window_bounds = array<i64: 128, 1>}, {pipeline_mode = #tpu.pipeline_mode<synchronous>, transform_indices = @transform_4, window_bounds = array<i64: 64, 96>}, {pipeline_mode = #tpu.pipeline_mode<synchronous>, transform_indices = @transform_5, window_bounds = array<i64: 1, 96>}, {pipeline_mode = #tpu.pipeline_mode<synchronous>, transform_indices = @transform_6, window_bounds = array<i64: 96, 3>}, {pipeline_mode = #tpu.pipeline_mode<synchronous>, transform_indices = @transform_7, window_bounds = array<i64: 1, 3>}, {pipeline_mode = #tpu.pipeline_mode<synchronous>, transform_indices = @transform_8, window_bounds = array<i64: 64, 96>}, {pipeline_mode = #tpu.pipeline_mode<synchronous>, transform_indices = @transform_9, window_bounds = array<i64: 1, 96>}, {pipeline_mode = #tpu.pipeline_mode<synchronous>, transform_indices = @transform_10, window_bounds = array<i64: 96, 32>}, {pipeline_mode = #tpu.pipeline_mode<synchronous>, transform_indices = @transform_11, window_bounds = array<i64: 3, 32>}, {pipeline_mode = #tpu.pipeline_mode<synchronous>, transform_indices = @transform_12, window_bounds = array<i64: 1, 3>}, {pipeline_mode = #tpu.pipeline_mode<synchronous>, transform_indices = @transform_13, window_bounds = array<i64: 24, 32>}]} {
    %c0 = arith.constant 0 : index
    %c0_0 = arith.constant 0 : index
    %0 = vector.load %arg2[%c0, %c0_0] : memref<24x33xf32, #tpu.memory_space<vmem>>, vector<24x33xf32>
    %1 = arith.truncf %0 : vector<24x33xf32> to vector<24x33xbf16>
    %c0_1 = arith.constant 0 : index
    %c0_2 = arith.constant 0 : index
    %2 = vector.load %arg3[%c0_1, %c0_2] : memref<128x1xi32, #tpu.memory_space<vmem>>, vector<128x1xi32>
    %c0_3 = arith.constant 0 : index
    %c0_4 = arith.constant 0 : index
    %3 = vector.load %arg5[%c0_3, %c0_4] : memref<128x1xi32, #tpu.memory_space<vmem>>, vector<128x1xi32>
    %c24_i32 = arith.constant 24 : i32
    %4 = vector.broadcast %c24_i32 : i32 to vector<128x1xi32>
    %5 = arith.cmpi slt, %2, %4 : vector<128x1xi32>
    %6 = tpu.iota {dimensions = array<i32: 1>} : vector<128x24xi32>
    %7 = vector.broadcast %2 : vector<128x1xi32> to vector<128x24xi32>
    %8 = arith.cmpi eq, %6, %7 : vector<128x24xi32>
    %9 = arith.extui %8 : vector<128x24xi1> to vector<128x24xi32>
    %10 = arith.sitofp %9 : vector<128x24xi32> to vector<128x24xf32>
    %11 = arith.truncf %10 : vector<128x24xf32> to vector<128x24xbf16>
    %12 = vector.broadcast %3 : vector<128x1xi32> to vector<128x24xi32>
    %13 = arith.cmpi eq, %6, %12 : vector<128x24xi32>
    %14 = arith.extui %13 : vector<128x24xi1> to vector<128x24xi32>
    %15 = arith.sitofp %14 : vector<128x24xi32> to vector<128x24xf32>
    %16 = arith.truncf %15 : vector<128x24xf32> to vector<128x24xbf16>
    %17 = tpu.iota {dimensions = array<i32: 0>} : vector<24x128xi32>
    %c0_5 = arith.constant 0 : index
    %c0_6 = arith.constant 0 : index
    %18 = vector.load %arg4[%c0_5, %c0_6] : memref<1x128xi32, #tpu.memory_space<vmem>>, vector<1x128xi32>
    %19 = vector.broadcast %18 : vector<1x128xi32> to vector<24x128xi32>
    %20 = arith.cmpi eq, %17, %19 : vector<24x128xi32>
    %21 = arith.extui %20 : vector<24x128xi1> to vector<24x128xi32>
    %22 = arith.sitofp %21 : vector<24x128xi32> to vector<24x128xf32>
    %23 = arith.truncf %22 : vector<24x128xf32> to vector<24x128xbf16>
    %cst = arith.constant dense<0.000000e+00> : vector<128x33xf32>
    %24 = tpu.matmul %11, %1, %cst {dimension_numbers = #tpu.dot_dimension_numbers<[1], [0], [0], [1], [0, 0, 1, 1], [], []>} : vector<128x24xbf16>, vector<24x33xbf16>, vector<128x33xf32> -> vector<128x33xf32>
    %cst_7 = arith.constant dense<0.000000e+00> : vector<128x33xf32>
    %25 = tpu.matmul %16, %1, %cst_7 {dimension_numbers = #tpu.dot_dimension_numbers<[1], [0], [0], [1], [0, 0, 1, 1], [], []>} : vector<128x24xbf16>, vector<24x33xbf16>, vector<128x33xf32> -> vector<128x33xf32>
    %26 = vector.extract_strided_slice %24 {offsets = [0, 0], sizes = [128, 32], strides = [1, 1]} : vector<128x33xf32> to vector<128x32xf32>
    %27 = arith.truncf %26 : vector<128x32xf32> to vector<128x32xbf16>
    %28 = vector.extract_strided_slice %25 {offsets = [0, 0], sizes = [128, 32], strides = [1, 1]} : vector<128x33xf32> to vector<128x32xf32>
    %29 = arith.truncf %28 : vector<128x32xf32> to vector<128x32xbf16>
    %30 = vector.extract_strided_slice %25 {offsets = [0, 32], sizes = [128, 1], strides = [1, 1]} : vector<128x33xf32> to vector<128x1xf32>
    %c0_8 = arith.constant 0 : index
    %c0_9 = arith.constant 0 : index
    %31 = vector.load %arg6[%c0_8, %c0_9] : memref<64x96xbf16, #tpu.memory_space<vmem>>, vector<64x96xbf16>
    %32 = vector.extract_strided_slice %31 {offsets = [0, 0], sizes = [32, 96], strides = [1, 1]} : vector<64x96xbf16> to vector<32x96xbf16>
    %cst_10 = arith.constant dense<0.000000e+00> : vector<128x96xf32>
    %33 = tpu.matmul %27, %32, %cst_10 {dimension_numbers = #tpu.dot_dimension_numbers<[1], [0], [0], [1], [0, 0, 1, 1], [], []>} : vector<128x32xbf16>, vector<32x96xbf16>, vector<128x96xf32> -> vector<128x96xf32>
    %34 = vector.extract_strided_slice %31 {offsets = [32, 0], sizes = [32, 96], strides = [1, 1]} : vector<64x96xbf16> to vector<32x96xbf16>
    %cst_11 = arith.constant dense<0.000000e+00> : vector<128x96xf32>
    %35 = tpu.matmul %29, %34, %cst_11 {dimension_numbers = #tpu.dot_dimension_numbers<[1], [0], [0], [1], [0, 0, 1, 1], [], []>} : vector<128x32xbf16>, vector<32x96xbf16>, vector<128x96xf32> -> vector<128x96xf32>
    %36 = arith.addf %33, %35 : vector<128x96xf32>
    %c0_12 = arith.constant 0 : index
    %c0_13 = arith.constant 0 : index
    %37 = vector.load %arg7[%c0_12, %c0_13] : memref<1x96xf32, #tpu.memory_space<vmem>>, vector<1x96xf32>
    %38 = vector.broadcast %37 : vector<1x96xf32> to vector<128x96xf32>
    %39 = arith.addf %36, %38 : vector<128x96xf32>
    %cst_14 = arith.constant 0.000000e+00 : f32
    %40 = vector.broadcast %cst_14 : f32 to vector<128x96xf32>
    %41 = arith.cmpf ogt, %39, %40 : vector<128x96xf32>
    %cst_15 = arith.constant 0.00999999977 : f32
    %42 = vector.broadcast %cst_15 : f32 to vector<128x96xf32>
    %43 = arith.mulf %42, %39 : vector<128x96xf32>
    %44 = arith.select %41, %39, %43 : vector<128x96xi1>, vector<128x96xf32>
    %45 = arith.truncf %44 : vector<128x96xf32> to vector<128x96xbf16>
    %c0_16 = arith.constant 0 : index
    %c0_17 = arith.constant 0 : index
    %46 = vector.load %arg8[%c0_16, %c0_17] : memref<96x3xbf16, #tpu.memory_space<vmem>>, vector<96x3xbf16>
    %cst_18 = arith.constant dense<0.000000e+00> : vector<128x3xf32>
    %47 = tpu.matmul %45, %46, %cst_18 {dimension_numbers = #tpu.dot_dimension_numbers<[1], [0], [0], [1], [0, 0, 1, 1], [], []>} : vector<128x96xbf16>, vector<96x3xbf16>, vector<128x3xf32> -> vector<128x3xf32>
    %c0_19 = arith.constant 0 : index
    %c0_20 = arith.constant 0 : index
    %48 = vector.load %arg9[%c0_19, %c0_20] : memref<1x3xf32, #tpu.memory_space<vmem>>, vector<1x3xf32>
    %49 = vector.broadcast %48 : vector<1x3xf32> to vector<128x3xf32>
    %50 = arith.addf %47, %49 : vector<128x3xf32>
    %c0_21 = arith.constant 0 : index
    %c0_22 = arith.constant 0 : index
    %51 = vector.load %arg14[%c0_21, %c0_22] : memref<1x3xf32, #tpu.memory_space<vmem>>, vector<1x3xf32>
    %52 = vector.broadcast %30 : vector<128x1xf32> to vector<128x3xf32>
    %53 = vector.broadcast %51 : vector<1x3xf32> to vector<128x3xf32>
    %54 = arith.mulf %52, %53 : vector<128x3xf32>
    %c0_i32 = arith.constant 0 : i32
    %55 = arith.cmpi eq, %arg0, %c0_i32 : i32
    %c0_i32_23 = arith.constant 0 : i32
    %56 = arith.cmpi eq, %arg1, %c0_i32_23 : i32
    %57 = arith.andi %55, %56 : i1
    %58 = arith.extui %57 : i1 to i32
    %c0_i32_24 = arith.constant 0 : i32
    %59 = arith.cmpi ne, %58, %c0_i32_24 : i32
    scf.if %59 {
      %cst_28 = arith.constant -1.000000e+30 : f32
      %66 = vector.broadcast %cst_28 : f32 to vector<1x3xf32>
      %c0_29 = arith.constant 0 : index
      %c0_30 = arith.constant 0 : index
      %67 = vector.load %arg16[%c0_29, %c0_30] : memref<1x3xf32, #tpu.memory_space<vmem>>, vector<1x3xf32>
      tpu.vector_store %arg16[%c0_29, %c0_30], %66 {strides = array<i32>} : memref<1x3xf32, #tpu.memory_space<vmem>>, vector<1x3xf32>,
      %cst_31 = arith.constant 0.000000e+00 : f32
      %68 = vector.broadcast %cst_31 : f32 to vector<24x3xf32>
      %c0_32 = arith.constant 0 : index
      %c0_33 = arith.constant 0 : index
      %69 = vector.load %arg17[%c0_32, %c0_33] : memref<24x3xf32, #tpu.memory_space<vmem>>, vector<24x3xf32>
      tpu.vector_store %arg17[%c0_32, %c0_33], %68 {strides = array<i32>} : memref<24x3xf32, #tpu.memory_space<vmem>>, vector<24x3xf32>,
      %70 = vector.extract_strided_slice %0 {offsets = [0, 0], sizes = [24, 32], strides = [1, 1]} : vector<24x33xf32> to vector<24x32xf32>
      %c0_34 = arith.constant 0 : index
      %c0_35 = arith.constant 0 : index
      %71 = vector.load %arg15[%c0_34, %c0_35] : memref<24x32xf32, #tpu.memory_space<vmem>>, vector<24x32xf32>
      tpu.vector_store %arg15[%c0_34, %c0_35], %70 {strides = array<i32>} : memref<24x32xf32, #tpu.memory_space<vmem>>, vector<24x32xf32>,
    } else {
    }
    %c0_i32_25 = arith.constant 0 : i32
    %60 = arith.cmpi eq, %arg0, %c0_i32_25 : i32
    %61 = arith.extui %60 : i1 to i32
    %c0_i32_26 = arith.constant 0 : i32
    %62 = arith.cmpi ne, %61, %c0_i32_26 : i32
    scf.if %62 {
      %c0_28 = arith.constant 0 : index
      %c0_29 = arith.constant 0 : index
      %66 = vector.load %arg16[%c0_28, %c0_29] : memref<1x3xf32, #tpu.memory_space<vmem>>, vector<1x3xf32>
      %cst_30 = arith.constant -1.000000e+30 : f32
      %67 = vector.shape_cast %5 : vector<128x1xi1> to vector<128x1xi1>
      %68 = vector.broadcast %67 : vector<128x1xi1> to vector<128x3xi1>
      %69 = vector.broadcast %cst_30 : f32 to vector<128x3xf32>
      %70 = arith.select %68, %50, %69 : vector<128x3xi1>, vector<128x3xf32>
      %cst_31 = arith.constant dense<0xFF800000> : vector<3xf32>
      %71 = vector.multi_reduction <maximumf>, %70, %cst_31 [0] : vector<128x3xf32> to vector<3xf32>
      %72 = vector.shape_cast %71 : vector<3xf32> to vector<1x3xf32>
      %73 = arith.maximumf %66, %72 : vector<1x3xf32>
      %c0_32 = arith.constant 0 : index
      %c0_33 = arith.constant 0 : index
      %74 = vector.load %arg16[%c0_32, %c0_33] : memref<1x3xf32, #tpu.memory_space<vmem>>, vector<1x3xf32>
      tpu.vector_store %arg16[%c0_32, %c0_33], %73 {strides = array<i32>} : memref<1x3xf32, #tpu.memory_space<vmem>>, vector<1x3xf32>,
      %75 = vector.broadcast %73 : vector<1x3xf32> to vector<128x3xf32>
      %76 = arith.subf %50, %75 : vector<128x3xf32>
      %77 = arith.addf %76, %54 : vector<128x3xf32>
      %78 = math.exp %77 : vector<128x3xf32>
      %79 = arith.extui %5 : vector<128x1xi1> to vector<128x1xi32>
      %80 = arith.sitofp %79 : vector<128x1xi32> to vector<128x1xf32>
      %81 = vector.broadcast %80 : vector<128x1xf32> to vector<128x3xf32>
      %82 = arith.mulf %78, %81 : vector<128x3xf32>
      %c0_34 = arith.constant 0 : index
      %c0_35 = arith.constant 0 : index
      %83 = vector.load %arg17[%c0_34, %c0_35] : memref<24x3xf32, #tpu.memory_space<vmem>>, vector<24x3xf32>
      %84 = arith.subf %66, %73 : vector<1x3xf32>
      %85 = math.exp %84 : vector<1x3xf32>
      %86 = vector.broadcast %85 : vector<1x3xf32> to vector<24x3xf32>
      %87 = arith.mulf %83, %86 : vector<24x3xf32>
      %88 = arith.truncf %82 : vector<128x3xf32> to vector<128x3xbf16>
      %cst_36 = arith.constant dense<0.000000e+00> : vector<24x3xf32>
      %89 = tpu.matmul %23, %88, %cst_36 {dimension_numbers = #tpu.dot_dimension_numbers<[1], [0], [0], [1], [0, 0, 1, 1], [], []>} : vector<24x128xbf16>, vector<128x3xbf16>, vector<24x3xf32> -> vector<24x3xf32>
      %90 = arith.addf %87, %89 : vector<24x3xf32>
      %c0_37 = arith.constant 0 : index
      %c0_38 = arith.constant 0 : index
      %91 = vector.load %arg17[%c0_37, %c0_38] : memref<24x3xf32, #tpu.memory_space<vmem>>, vector<24x3xf32>
      tpu.vector_store %arg17[%c0_37, %c0_38], %90 {strides = array<i32>} : memref<24x3xf32, #tpu.memory_space<vmem>>, vector<24x3xf32>,
    } else {
    }
    %c1_i32 = arith.constant 1 : i32
    %63 = arith.cmpi eq, %arg0, %c1_i32 : i32
    %64 = arith.extui %63 : i1 to i32
    %c0_i32_27 = arith.constant 0 : i32
    %65 = arith.cmpi ne, %64, %c0_i32_27 : i32
    scf.if %65 {
      %c0_28 = arith.constant 0 : index
      %c0_29 = arith.constant 0 : index
      %66 = vector.load %arg16[%c0_28, %c0_29] : memref<1x3xf32, #tpu.memory_space<vmem>>, vector<1x3xf32>
      %67 = vector.broadcast %66 : vector<1x3xf32> to vector<128x3xf32>
      %68 = arith.subf %50, %67 : vector<128x3xf32>
      %69 = arith.addf %68, %54 : vector<128x3xf32>
      %70 = math.exp %69 : vector<128x3xf32>
      %71 = arith.extui %5 : vector<128x1xi1> to vector<128x1xi32>
      %72 = arith.sitofp %71 : vector<128x1xi32> to vector<128x1xf32>
      %73 = vector.broadcast %72 : vector<128x1xf32> to vector<128x3xf32>
      %74 = arith.mulf %70, %73 : vector<128x3xf32>
      %c0_30 = arith.constant 0 : index
      %c0_31 = arith.constant 0 : index
      %75 = vector.load %arg17[%c0_30, %c0_31] : memref<24x3xf32, #tpu.memory_space<vmem>>, vector<24x3xf32>
      %76 = arith.truncf %75 : vector<24x3xf32> to vector<24x3xbf16>
      %cst_32 = arith.constant dense<0.000000e+00> : vector<128x3xf32>
      %77 = tpu.matmul %11, %76, %cst_32 {dimension_numbers = #tpu.dot_dimension_numbers<[1], [0], [0], [1], [0, 0, 1, 1], [], []>} : vector<128x24xbf16>, vector<24x3xbf16>, vector<128x3xf32> -> vector<128x3xf32>
      %cst_33 = arith.constant 1.000000e-10 : f32
      %78 = vector.broadcast %cst_33 : f32 to vector<128x3xf32>
      %79 = arith.addf %77, %78 : vector<128x3xf32>
      %80 = arith.divf %74, %79 : vector<128x3xf32>
      %c0_34 = arith.constant 0 : index
      %c0_35 = arith.constant 0 : index
      %81 = vector.load %arg10[%c0_34, %c0_35] : memref<64x96xbf16, #tpu.memory_space<vmem>>, vector<64x96xbf16>
      %82 = vector.extract_strided_slice %81 {offsets = [0, 0], sizes = [32, 96], strides = [1, 1]} : vector<64x96xbf16> to vector<32x96xbf16>
      %cst_36 = arith.constant dense<0.000000e+00> : vector<128x96xf32>
      %83 = tpu.matmul %27, %82, %cst_36 {dimension_numbers = #tpu.dot_dimension_numbers<[1], [0], [0], [1], [0, 0, 1, 1], [], []>} : vector<128x32xbf16>, vector<32x96xbf16>, vector<128x96xf32> -> vector<128x96xf32>
      %84 = vector.extract_strided_slice %81 {offsets = [32, 0], sizes = [32, 96], strides = [1, 1]} : vector<64x96xbf16> to vector<32x96xbf16>
      %cst_37 = arith.constant dense<0.000000e+00> : vector<128x96xf32>
      %85 = tpu.matmul %29, %84, %cst_37 {dimension_numbers = #tpu.dot_dimension_numbers<[1], [0], [0], [1], [0, 0, 1, 1], [], []>} : vector<128x32xbf16>, vector<32x96xbf16>, vector<128x96xf32> -> vector<128x96xf32>
      %86 = arith.addf %83, %85 : vector<128x96xf32>
      %c0_38 = arith.constant 0 : index
      %c0_39 = arith.constant 0 : index
      %87 = vector.load %arg11[%c0_38, %c0_39] : memref<1x96xf32, #tpu.memory_space<vmem>>, vector<1x96xf32>
      %88 = vector.broadcast %87 : vector<1x96xf32> to vector<128x96xf32>
      %89 = arith.addf %86, %88 : vector<128x96xf32>
      %cst_40 = arith.constant 0.000000e+00 : f32
      %90 = vector.broadcast %cst_40 : f32 to vector<128x96xf32>
      %91 = arith.cmpf ogt, %89, %90 : vector<128x96xf32>
      %cst_41 = arith.constant 0.00999999977 : f32
      %92 = vector.broadcast %cst_41 : f32 to vector<128x96xf32>
      %93 = arith.mulf %92, %89 : vector<128x96xf32>
      %94 = arith.select %91, %89, %93 : vector<128x96xi1>, vector<128x96xf32>
      %95 = vector.extract_strided_slice %80 {offsets = [0, 0], sizes = [128, 1], strides = [1, 1]} : vector<128x3xf32> to vector<128x1xf32>
      %96 = vector.shape_cast %95 : vector<128x1xf32> to vector<128x1xf32>
      %97 = vector.broadcast %96 : vector<128x1xf32> to vector<128x32xf32>
      %98 = vector.extract_strided_slice %80 {offsets = [0, 1], sizes = [128, 1], strides = [1, 1]} : vector<128x3xf32> to vector<128x1xf32>
      %99 = vector.shape_cast %98 : vector<128x1xf32> to vector<128x1xf32>
      %100 = vector.broadcast %99 : vector<128x1xf32> to vector<128x32xf32>
      %101 = vector.extract_strided_slice %80 {offsets = [0, 2], sizes = [128, 1], strides = [1, 1]} : vector<128x3xf32> to vector<128x1xf32>
      %102 = vector.shape_cast %101 : vector<128x1xf32> to vector<128x1xf32>
      %103 = vector.broadcast %102 : vector<128x1xf32> to vector<128x32xf32>
      %104 = tpu.concatenate %97, %100, %103 in 1 : vector<128x32xf32>, vector<128x32xf32>, vector<128x32xf32> -> vector<128x96xf32>
      %105 = arith.mulf %94, %104 : vector<128x96xf32>
      %106 = arith.truncf %105 : vector<128x96xf32> to vector<128x96xbf16>
      %c0_42 = arith.constant 0 : index
      %c0_43 = arith.constant 0 : index
      %107 = vector.load %arg12[%c0_42, %c0_43] : memref<96x32xbf16, #tpu.memory_space<vmem>>, vector<96x32xbf16>
      %cst_44 = arith.constant dense<0.000000e+00> : vector<128x32xf32>
      %108 = tpu.matmul %106, %107, %cst_44 {dimension_numbers = #tpu.dot_dimension_numbers<[1], [0], [0], [1], [0, 0, 1, 1], [], []>} : vector<128x96xbf16>, vector<96x32xbf16>, vector<128x32xf32> -> vector<128x32xf32>
      %109 = arith.truncf %80 : vector<128x3xf32> to vector<128x3xbf16>
      %c0_45 = arith.constant 0 : index
      %c0_46 = arith.constant 0 : index
      %110 = vector.load %arg13[%c0_45, %c0_46] : memref<3x32xbf16, #tpu.memory_space<vmem>>, vector<3x32xbf16>
      %cst_47 = arith.constant dense<0.000000e+00> : vector<128x32xf32>
      %111 = tpu.matmul %109, %110, %cst_47 {dimension_numbers = #tpu.dot_dimension_numbers<[1], [0], [0], [1], [0, 0, 1, 1], [], []>} : vector<128x3xbf16>, vector<3x32xbf16>, vector<128x32xf32> -> vector<128x32xf32>
      %112 = arith.addf %108, %111 : vector<128x32xf32>
      %c0_48 = arith.constant 0 : index
      %c0_49 = arith.constant 0 : index
      %113 = vector.load %arg15[%c0_48, %c0_49] : memref<24x32xf32, #tpu.memory_space<vmem>>, vector<24x32xf32>
      %114 = arith.truncf %112 : vector<128x32xf32> to vector<128x32xbf16>
      %cst_50 = arith.constant dense<0.000000e+00> : vector<24x32xf32>
      %115 = tpu.matmul %23, %114, %cst_50 {dimension_numbers = #tpu.dot_dimension_numbers<[1], [0], [0], [1], [0, 0, 1, 1], [], []>} : vector<24x128xbf16>, vector<128x32xbf16>, vector<24x32xf32> -> vector<24x32xf32>
      %cst_51 = arith.constant 0.333333343 : f32
      %116 = vector.broadcast %cst_51 : f32 to vector<24x32xf32>
      %117 = arith.mulf %115, %116 : vector<24x32xf32>
      %118 = arith.addf %113, %117 : vector<24x32xf32>
      %c0_52 = arith.constant 0 : index
      %c0_53 = arith.constant 0 : index
      %119 = vector.load %arg15[%c0_52, %c0_53] : memref<24x32xf32, #tpu.memory_space<vmem>>, vector<24x32xf32>
      tpu.vector_store %arg15[%c0_52, %c0_53], %118 {strides = array<i32>} : memref<24x32xf32, #tpu.memory_space<vmem>>, vector<24x32xf32>,
    } else {
    }
    return
  }
  func.func @transform_0(%arg0: i32, %arg1: i32) -> (i32, i32) {
    %c0_i32 = arith.constant 0 : i32
    %c0_i32_0 = arith.constant 0 : i32
    %c0_i32_1 = arith.constant 0 : i32
    return %c0_i32, %c0_i32_0 : i32, i32
  }
  func.func @transform_1(%arg0: i32, %arg1: i32) -> (i32, i32) {
    %c0_i32 = arith.constant 0 : i32
    %c0_i32_0 = arith.constant 0 : i32
    return %arg1, %c0_i32 : i32, i32
  }
  func.func @transform_2(%arg0: i32, %arg1: i32) -> (i32, i32) {
    %c0_i32 = arith.constant 0 : i32
    %c0_i32_0 = arith.constant 0 : i32
    return %c0_i32, %arg1 : i32, i32
  }
  func.func @transform_3(%arg0: i32, %arg1: i32) -> (i32, i32) {
    %c0_i32 = arith.constant 0 : i32
    %c0_i32_0 = arith.constant 0 : i32
    return %arg1, %c0_i32 : i32, i32
  }
  func.func @transform_4(%arg0: i32, %arg1: i32) -> (i32, i32) {
    %c0_i32 = arith.constant 0 : i32
    %c0_i32_0 = arith.constant 0 : i32
    %c0_i32_1 = arith.constant 0 : i32
    return %c0_i32, %c0_i32_0 : i32, i32
  }
  func.func @transform_5(%arg0: i32, %arg1: i32) -> (i32, i32) {
    %c0_i32 = arith.constant 0 : i32
    %c0_i32_0 = arith.constant 0 : i32
    %c0_i32_1 = arith.constant 0 : i32
    return %c0_i32, %c0_i32_0 : i32, i32
  }
  func.func @transform_6(%arg0: i32, %arg1: i32) -> (i32, i32) {
    %c0_i32 = arith.constant 0 : i32
    %c0_i32_0 = arith.constant 0 : i32
    %c0_i32_1 = arith.constant 0 : i32
    return %c0_i32, %c0_i32_0 : i32, i32
  }
  func.func @transform_7(%arg0: i32, %arg1: i32) -> (i32, i32) {
    %c0_i32 = arith.constant 0 : i32
    %c0_i32_0 = arith.constant 0 : i32
    %c0_i32_1 = arith.constant 0 : i32
    return %c0_i32, %c0_i32_0 : i32, i32
  }
  func.func @transform_8(%arg0: i32, %arg1: i32) -> (i32, i32) {
    %c0_i32 = arith.constant 0 : i32
    %c0_i32_0 = arith.constant 0 : i32
    %c0_i32_1 = arith.constant 0 : i32
    return %c0_i32, %c0_i32_0 : i32, i32
  }
  func.func @transform_9(%arg0: i32, %arg1: i32) -> (i32, i32) {
    %c0_i32 = arith.constant 0 : i32
    %c0_i32_0 = arith.constant 0 : i32
    %c0_i32_1 = arith.constant 0 : i32
    return %c0_i32, %c0_i32_0 : i32, i32
  }
  func.func @transform_10(%arg0: i32, %arg1: i32) -> (i32, i32) {
    %c0_i32 = arith.constant 0 : i32
    %c0_i32_0 = arith.constant 0 : i32
    %c0_i32_1 = arith.constant 0 : i32
    return %c0_i32, %c0_i32_0 : i32, i32
  }
  func.func @transform_11(%arg0: i32, %arg1: i32) -> (i32, i32) {
    %c0_i32 = arith.constant 0 : i32
    %c0_i32_0 = arith.constant 0 : i32
    %c0_i32_1 = arith.constant 0 : i32
    return %c0_i32, %c0_i32_0 : i32, i32
  }
  func.func @transform_12(%arg0: i32, %arg1: i32) -> (i32, i32) {
    %c0_i32 = arith.constant 0 : i32
    %c0_i32_0 = arith.constant 0 : i32
    %c0_i32_1 = arith.constant 0 : i32
    return %c0_i32, %c0_i32_0 : i32, i32
  }
  func.func @transform_13(%arg0: i32, %arg1: i32) -> (i32, i32) {
    %c0_i32 = arith.constant 0 : i32
    %c0_i32_0 = arith.constant 0 : i32
    %c0_i32_1 = arith.constant 0 : i32
    return %c0_i32, %c0_i32_0 : i32, i32
  }
}

</mosaic_0001>

<llo_original>
// kernel: tpu_custom_call.1
$region0: #{tpu_custom_call.1}
  #allocation0 [shape = 'u32[]', space=smem, size = 0x4, offset = 0x4, fixed_abs, tag = 'smem constant byte address 0x4 - core index']
  #allocation1 [shape = 'u32[144,128]{1,0:T(1,128)}', space=vmem, size = 0x12000, scoped, tag = 'internal scratch']
  #allocation2 [shape = 'f32[1,3]{1,0:T(1,128)}', space=vmem, size = 0x200, scoped, tag = 'scratch operand']
  #allocation3 [shape = 'f32[24,3]{1,0:T(8,128)}', space=vmem, size = 0x3000, scoped, tag = 'scratch operand']
  %s0 = inlined_call_operand.vmem [shape: f32[24,33], index: 0, kind: input, shape index: {}]
  %s1 = inlined_call_operand.vmem [shape: s32[384,1], index: 1, kind: input, shape index: {}]
  %s2 = inlined_call_operand.vmem [shape: s32[1,384], index: 2, kind: input, shape index: {}]
  %s3 = inlined_call_operand.vmem [shape: s32[384,1], index: 3, kind: input, shape index: {}]
  %s4 = inlined_call_operand.vmem [shape: bf16[64,96], index: 4, kind: input, shape index: {}]
  %s5 = inlined_call_operand.vmem [shape: f32[1,96], index: 5, kind: input, shape index: {}]
  %s6 = inlined_call_operand.vmem [shape: bf16[96,3], index: 6, kind: input, shape index: {}]
  %s7 = inlined_call_operand.vmem [shape: f32[1,3], index: 7, kind: input, shape index: {}]
  %s8 = inlined_call_operand.vmem [shape: bf16[64,96], index: 8, kind: input, shape index: {}]
  %s9 = inlined_call_operand.vmem [shape: f32[1,96], index: 9, kind: input, shape index: {}]
  %s10 = inlined_call_operand.vmem [shape: bf16[96,32], index: 10, kind: input, shape index: {}]
  %s11 = inlined_call_operand.vmem [shape: bf16[3,32], index: 11, kind: input, shape index: {}]
  %s12 = inlined_call_operand.vmem [shape: f32[1,3], index: 12, kind: input, shape index: {}]
  %s13 = inlined_call_operand.hbm [shape: f32[24,32], index: 13, kind: output, shape index: {}]
  %s14 = sld [smem:[#allocation0]]
  $region97: #{tpu_custom_call.1} parent=0
    _
  %s16 = ssub.s32 1, %s14
  %s17 = scalar_select 0, %s16, %s14
  $region1: #{tpu_custom_call.1} parent=0
    #allocation4 [shape = 'u8[12288]{0}', space=vmem, size = 0x3000, scoped, tag = 'output window, operand 0, single buffered']
    #allocation5 [shape = 's32[2]{0}', space=sflag, size = 0x8, scoped, tag = 'scoped memory for tpu_custom_call.1']
    %18 = vsyncpa [#allocation5], 0
    loop: start=0, step=1, limit=8
    $region2: #{tpu_custom_call.1} parent=1 // loop_pre_header
      _
    $region3: #{tpu_custom_call.1} parent=1 // loop_header
      %s20 = sphi 0, %s24
      %p21 = scmp.ge.s32.totalorder %s20, 8
      %s27 = sphi 0, %s39
      %s28 = sphi 0, %s35
      %s29 = sphi 0, %s27
      %s30 = sphi 0, %s28
      %s31 = sphi 0, %s29
      %s32 = sphi 0, %s30
      %s40 = sphi 0, %s40
      %s42 = sphi 0, %s40
      %s43 = sphi 0, %s42
      %s57 = sphi 0, %s43
      %s63 = sphi 0, %s65
      %s66 = sphi 0, %s63
      %s67 = sphi 0, %s66
      %s83 = sphi 0, %s67
      %s89 = sphi 0, %s91
      %s92 = sphi 0, %s89
      %s93 = sphi 0, %s92
      %s109 = sphi 0, %s93
      %s115 = sphi 0, %s117
      %s118 = sphi 0, %s115
      %s119 = sphi 0, %s118
      %s135 = sphi 0, %s119
      %s139 = sphi 0, %s139
      %s141 = sphi 0, %s139
      %s142 = sphi 0, %s141
      %s156 = sphi 0, %s142
      %s160 = sphi 0, %s160
      %s162 = sphi 0, %s160
      %s163 = sphi 0, %s162
      %s177 = sphi 0, %s163
      %s181 = sphi 0, %s181
      %s183 = sphi 0, %s181
      %s184 = sphi 0, %s183
      %s198 = sphi 0, %s184
      %s202 = sphi 0, %s202
      %s204 = sphi 0, %s202
      %s205 = sphi 0, %s204
      %s219 = sphi 0, %s205
      %s223 = sphi 0, %s223
      %s225 = sphi 0, %s223
      %s226 = sphi 0, %s225
      %s240 = sphi 0, %s226
      %s244 = sphi 0, %s244
      %s246 = sphi 0, %s244
      %s247 = sphi 0, %s246
      %s261 = sphi 0, %s247
      %s265 = sphi 0, %s265
      %s267 = sphi 0, %s265
      %s268 = sphi 0, %s267
      %s282 = sphi 0, %s268
      %s286 = sphi 0, %s286
      %s288 = sphi 0, %s286
      %s289 = sphi 0, %s288
      %s303 = sphi 0, %s289
      %s307 = sphi 0, %s307
      %s309 = sphi 0, %s307
      %s310 = sphi 0, %s309
      %s324 = sphi 0, %s310
      %s328 = sphi 0, %s328
      %s330 = sphi 0, %s328
      %s331 = sphi 0, %s330
      %s345 = sphi 0, %s331
    $region4: #{tpu_custom_call.1} parent=1 // loop_header_branch
      %23 = sbr.rel (%p21) target = $region8
    $region5: #{tpu_custom_call.1} parent=1 // loop_body
      %s25 = ssub.s32 %s20, 1
      %s26 = ssub.s32 %s20, 2
      %s33 = sadd.s32 1, %s28
      %p34 = scmp.ge.s32.totalorder %s33, 3
      %s35 = scalar_select %p34, 0, %s33
      %s36 = sadd.s32 1, %s27
      %s37 = scalar_select %p34, %s36, %s27
      %p38 = scmp.ge.s32.totalorder %s37, 2
      %s39 = scalar_select %p38, 0, %s37
      %s41 = sadd.s32 %s40, 1
      %p44 = scmp.eq.s32.totalorder %s20, 5
      %p45 = scmp.ne.s32.totalorder %s40, %s42
      %p46 = scmp.eq.s32.totalorder %s20, 0
      %p47 = por %p45, %p46
      %p48 = scmp.ne.s32.totalorder %s40, %s42
      %p49 = scmp.eq.s32.totalorder %s25, 5
      %p50 = por %p48, %p49
      %p51 = scmp.ne.s32.totalorder %s42, %s43
      %p52 = scmp.eq.s32.totalorder %s25, 0
      %p53 = por %p51, %p52
      %p54 = scmp.ne.s32.totalorder %s42, %s43
      %p55 = scmp.eq.s32.totalorder %s26, 5
      %p56 = por %p54, %p55
      %p58 = scmp.ne.s32.totalorder %s43, %s57
      %p59 = scmp.eq.s32.totalorder %s26, 0
      %p60 = por %p58, %p59
      %s61 = ssub.s32 %s28, %s35
      %p62 = scmp.eq.s32.totalorder %s61, 0
      %s64 = sadd.s32 %s63, 1
      %s65 = scalar_select %p62, %s63, %s64
      %p68 = pneg %p62
      %p69 = scmp.eq.s32.totalorder %s20, 5
      %p70 = por %p68, %p69
      %p71 = scmp.ne.s32.totalorder %s63, %s66
      %p72 = scmp.eq.s32.totalorder %s20, 0
      %p73 = por %p71, %p72
      %p74 = scmp.ne.s32.totalorder %s63, %s66
      %p75 = scmp.eq.s32.totalorder %s25, 5
      %p76 = por %p74, %p75
      %p77 = scmp.ne.s32.totalorder %s66, %s67
      %p78 = scmp.eq.s32.totalorder %s25, 0
      %p79 = por %p77, %p78
      %p80 = scmp.ne.s32.totalorder %s66, %s67
      %p81 = scmp.eq.s32.totalorder %s26, 5
      %p82 = por %p80, %p81
      %p84 = scmp.ne.s32.totalorder %s67, %s83
      %p85 = scmp.eq.s32.totalorder %s26, 0
      %p86 = por %p84, %p85
      %s87 = ssub.s32 %s28, %s35
      %p88 = scmp.eq.s32.totalorder %s87, 0
      %s90 = sadd.s32 %s89, 1
      %s91 = scalar_select %p88, %s89, %s90
      %p94 = pneg %p88
      %p95 = scmp.eq.s32.totalorder %s20, 5
      %p96 = por %p94, %p95
      %p97 = scmp.ne.s32.totalorder %s89, %s92
      %p98 = scmp.eq.s32.totalorder %s20, 0
      %p99 = por %p97, %p98
      %p100 = scmp.ne.s32.totalorder %s89, %s92
      %p101 = scmp.eq.s32.totalorder %s25, 5
      %p102 = por %p100, %p101
      %p103 = scmp.ne.s32.totalorder %s92, %s93
      %p104 = scmp.eq.s32.totalorder %s25, 0
      %p105 = por %p103, %p104
      %p106 = scmp.ne.s32.totalorder %s92, %s93
      %p107 = scmp.eq.s32.totalorder %s26, 5
      %p108 = por %p106, %p107
      %p110 = scmp.ne.s32.totalorder %s93, %s109
      %p111 = scmp.eq.s32.totalorder %s26, 0
      %p112 = por %p110, %p111
      %s113 = ssub.s32 %s28, %s35
      %p114 = scmp.eq.s32.totalorder %s113, 0
      %s116 = sadd.s32 %s115, 1
      %s117 = scalar_select %p114, %s115, %s116
      %p120 = pneg %p114
      %p121 = scmp.eq.s32.totalorder %s20, 5
      %p122 = por %p120, %p121
      %p123 = scmp.ne.s32.totalorder %s115, %s118
      %p124 = scmp.eq.s32.totalorder %s20, 0
      %p125 = por %p123, %p124
      %p126 = scmp.ne.s32.totalorder %s115, %s118
      %p127 = scmp.eq.s32.totalorder %s25, 5
      %p128 = por %p126, %p127
      %p129 = scmp.ne.s32.totalorder %s118, %s119
      %p130 = scmp.eq.s32.totalorder %s25, 0
      %p131 = por %p129, %p130
      %p132 = scmp.ne.s32.totalorder %s118, %s119
      %p133 = scmp.eq.s32.totalorder %s26, 5
      %p134 = por %p132, %p133
      %p136 = scmp.ne.s32.totalorder %s119, %s135
      %p137 = scmp.eq.s32.totalorder %s26, 0
      %p138 = por %p136, %p137
      %s140 = sadd.s32 %s139, 1
      %p143 = scmp.eq.s32.totalorder %s20, 5
      %p144 = scmp.ne.s32.totalorder %s139, %s141
      %p145 = scmp.eq.s32.totalorder %s20, 0
      %p146 = por %p144, %p145
      %p147 = scmp.ne.s32.totalorder %s139, %s141
      %p148 = scmp.eq.s32.totalorder %s25, 5
      %p149 = por %p147, %p148
      %p150 = scmp.ne.s32.totalorder %s141, %s142
      %p151 = scmp.eq.s32.totalorder %s25, 0
      %p152 = por %p150, %p151
      %p153 = scmp.ne.s32.totalorder %s141, %s142
      %p154 = scmp.eq.s32.totalorder %s26, 5
      %p155 = por %p153, %p154
      %p157 = scmp.ne.s32.totalorder %s142, %s156
      %p158 = scmp.eq.s32.totalorder %s26, 0
      %p159 = por %p157, %p158
      %s161 = sadd.s32 %s160, 1
      %p164 = scmp.eq.s32.totalorder %s20, 5
      %p165 = scmp.ne.s32.totalorder %s160, %s162
      %p166 = scmp.eq.s32.totalorder %s20, 0
      %p167 = por %p165, %p166
      %p168 = scmp.ne.s32.totalorder %s160, %s162
      %p169 = scmp.eq.s32.totalorder %s25, 5
      %p170 = por %p168, %p169
      %p171 = scmp.ne.s32.totalorder %s162, %s163
      %p172 = scmp.eq.s32.totalorder %s25, 0
      %p173 = por %p171, %p172
      %p174 = scmp.ne.s32.totalorder %s162, %s163
      %p175 = scmp.eq.s32.totalorder %s26, 5
      %p176 = por %p174, %p175
      %p178 = scmp.ne.s32.totalorder %s163, %s177
      %p179 = scmp.eq.s32.totalorder %s26, 0
      %p180 = por %p178, %p179
      %s182 = sadd.s32 %s181, 1
      %p185 = scmp.eq.s32.totalorder %s20, 5
      %p186 = scmp.ne.s32.totalorder %s181, %s183
      %p187 = scmp.eq.s32.totalorder %s20, 0
      %p188 = por %p186, %p187
      %p189 = scmp.ne.s32.totalorder %s181, %s183
      %p190 = scmp.eq.s32.totalorder %s25, 5
      %p191 = por %p189, %p190
      %p192 = scmp.ne.s32.totalorder %s183, %s184
      %p193 = scmp.eq.s32.totalorder %s25, 0
      %p194 = por %p192, %p193
      %p195 = scmp.ne.s32.totalorder %s183, %s184
      %p196 = scmp.eq.s32.totalorder %s26, 5
      %p197 = por %p195, %p196
      %p199 = scmp.ne.s32.totalorder %s184, %s198
      %p200 = scmp.eq.s32.totalorder %s26, 0
      %p201 = por %p199, %p200
      %s203 = sadd.s32 %s202, 1
      %p206 = scmp.eq.s32.totalorder %s20, 5
      %p207 = scmp.ne.s32.totalorder %s202, %s204
      %p208 = scmp.eq.s32.totalorder %s20, 0
      %p209 = por %p207, %p208
      %p210 = scmp.ne.s32.totalorder %s202, %s204
      %p211 = scmp.eq.s32.totalorder %s25, 5
      %p212 = por %p210, %p211
      %p213 = scmp.ne.s32.totalorder %s204, %s205
      %p214 = scmp.eq.s32.totalorder %s25, 0
      %p215 = por %p213, %p214
      %p216 = scmp.ne.s32.totalorder %s204, %s205
      %p217 = scmp.eq.s32.totalorder %s26, 5
      %p218 = por %p216, %p217
      %p220 = scmp.ne.s32.totalorder %s205, %s219
      %p221 = scmp.eq.s32.totalorder %s26, 0
      %p222 = por %p220, %p221
      %s224 = sadd.s32 %s223, 1
      %p227 = scmp.eq.s32.totalorder %s20, 5
      %p228 = scmp.ne.s32.totalorder %s223, %s225
      %p229 = scmp.eq.s32.totalorder %s20, 0
      %p230 = por %p228, %p229
      %p231 = scmp.ne.s32.totalorder %s223, %s225
      %p232 = scmp.eq.s32.totalorder %s25, 5
      %p233 = por %p231, %p232
      %p234 = scmp.ne.s32.totalorder %s225, %s226
      %p235 = scmp.eq.s32.totalorder %s25, 0
      %p236 = por %p234, %p235
      %p237 = scmp.ne.s32.totalorder %s225, %s226
      %p238 = scmp.eq.s32.totalorder %s26, 5
      %p239 = por %p237, %p238
      %p241 = scmp.ne.s32.totalorder %s226, %s240
      %p242 = scmp.eq.s32.totalorder %s26, 0
      %p243 = por %p241, %p242
      %s245 = sadd.s32 %s244, 1
      %p248 = scmp.eq.s32.totalorder %s20, 5
      %p249 = scmp.ne.s32.totalorder %s244, %s246
      %p250 = scmp.eq.s32.totalorder %s20, 0
      %p251 = por %p249, %p250
      %p252 = scmp.ne.s32.totalorder %s244, %s246
      %p253 = scmp.eq.s32.totalorder %s25, 5
      %p254 = por %p252, %p253
      %p255 = scmp.ne.s32.totalorder %s246, %s247
      %p256 = scmp.eq.s32.totalorder %s25, 0
      %p257 = por %p255, %p256
      %p258 = scmp.ne.s32.totalorder %s246, %s247
      %p259 = scmp.eq.s32.totalorder %s26, 5
      %p260 = por %p258, %p259
      %p262 = scmp.ne.s32.totalorder %s247, %s261
      %p263 = scmp.eq.s32.totalorder %s26, 0
      %p264 = por %p262, %p263
      %s266 = sadd.s32 %s265, 1
      %p269 = scmp.eq.s32.totalorder %s20, 5
      %p270 = scmp.ne.s32.totalorder %s265, %s267
      %p271 = scmp.eq.s32.totalorder %s20, 0
      %p272 = por %p270, %p271
      %p273 = scmp.ne.s32.totalorder %s265, %s267
      %p274 = scmp.eq.s32.totalorder %s25, 5
      %p275 = por %p273, %p274
      %p276 = scmp.ne.s32.totalorder %s267, %s268
      %p277 = scmp.eq.s32.totalorder %s25, 0
      %p278 = por %p276, %p277
      %p279 = scmp.ne.s32.totalorder %s267, %s268
      %p280 = scmp.eq.s32.totalorder %s26, 5
      %p281 = por %p279, %p280
      %p283 = scmp.ne.s32.totalorder %s268, %s282
      %p284 = scmp.eq.s32.totalorder %s26, 0
      %p285 = por %p283, %p284
      %s287 = sadd.s32 %s286, 1
      %p290 = scmp.eq.s32.totalorder %s20, 5
      %p291 = scmp.ne.s32.totalorder %s286, %s288
      %p292 = scmp.eq.s32.totalorder %s20, 0
      %p293 = por %p291, %p292
      %p294 = scmp.ne.s32.totalorder %s286, %s288
      %p295 = scmp.eq.s32.totalorder %s25, 5
      %p296 = por %p294, %p295
      %p297 = scmp.ne.s32.totalorder %s288, %s289
      %p298 = scmp.eq.s32.totalorder %s25, 0
      %p299 = por %p297, %p298
      %p300 = scmp.ne.s32.totalorder %s288, %s289
      %p301 = scmp.eq.s32.totalorder %s26, 5
      %p302 = por %p300, %p301
      %p304 = scmp.ne.s32.totalorder %s289, %s303
      %p305 = scmp.eq.s32.totalorder %s26, 0
      %p306 = por %p304, %p305
      %s308 = sadd.s32 %s307, 1
      %p311 = scmp.eq.s32.totalorder %s20, 5
      %p312 = scmp.ne.s32.totalorder %s307, %s309
      %p313 = scmp.eq.s32.totalorder %s20, 0
      %p314 = por %p312, %p313
      %p315 = scmp.ne.s32.totalorder %s307, %s309
      %p316 = scmp.eq.s32.totalorder %s25, 5
      %p317 = por %p315, %p316
      %p318 = scmp.ne.s32.totalorder %s309, %s310
      %p319 = scmp.eq.s32.totalorder %s25, 0
      %p320 = por %p318, %p319
      %p321 = scmp.ne.s32.totalorder %s309, %s310
      %p322 = scmp.eq.s32.totalorder %s26, 5
      %p323 = por %p321, %p322
      %p325 = scmp.ne.s32.totalorder %s310, %s324
      %p326 = scmp.eq.s32.totalorder %s26, 0
      %p327 = por %p325, %p326
      %s329 = sadd.s32 %s328, 1
      %p332 = scmp.eq.s32.totalorder %s20, 5
      %p333 = scmp.ne.s32.totalorder %s328, %s330
      %p334 = scmp.eq.s32.totalorder %s20, 0
      %p335 = por %p333, %p334
      %p336 = scmp.ne.s32.totalorder %s328, %s330
      %p337 = scmp.eq.s32.totalorder %s25, 5
      %p338 = por %p336, %p337
      %p339 = scmp.ne.s32.totalorder %s330, %s331
      %p340 = scmp.eq.s32.totalorder %s25, 0
      %p341 = por %p339, %p340
      %p342 = scmp.ne.s32.totalorder %s330, %s331
      %p343 = scmp.eq.s32.totalorder %s26, 5
      %p344 = por %p342, %p343
      %p346 = scmp.ne.s32.totalorder %s331, %s345
      %p347 = scmp.eq.s32.totalorder %s26, 0
      %p348 = por %p346, %p347
      %p349 = scmp.le.s32.totalorder 1, %s20
      %p350 = scmp.lt.s32.totalorder %s20, 7
      %p351 = pnand %p349, %p350
      %p352 = pneg %p351
      // Predicated region
      $region9: #{tpu_custom_call.1} parent=5 // pred_check
        _
      $region10: #{tpu_custom_call.1} parent=5 // pred_check_branch
        %354 = sbr.rel (%p351) target = $region12
      $region11: #{tpu_custom_call.1} parent=5 // pred_region
        %s355 = ssub.s32 %s20, 1
        // Predicated region
        $region13: #{tpu_custom_call.1} parent=11 // pred_check
          %p356 = pneg %p53
        $region14: #{tpu_custom_call.1} parent=11 // pred_check_branch
          %358 = sbr.rel (%p356) target = $region16
        $region15: #{tpu_custom_call.1} parent=11 // pred_region
          _
        $region16: #{tpu_custom_call.1} parent=11 // pred_fallthru
          _
        // Predicated region
        $region17: #{tpu_custom_call.1} parent=11 // pred_check
          %p359 = pneg %p152
        $region18: #{tpu_custom_call.1} parent=11 // pred_check_branch
          %361 = sbr.rel (%p359) target = $region20
        $region19: #{tpu_custom_call.1} parent=11 // pred_region
          _
        $region20: #{tpu_custom_call.1} parent=11 // pred_fallthru
          _
        // Predicated region
        $region21: #{tpu_custom_call.1} parent=11 // pred_check
          %p362 = pneg %p173
        $region22: #{tpu_custom_call.1} parent=11 // pred_check_branch
          %364 = sbr.rel (%p362) target = $region24
        $region23: #{tpu_custom_call.1} parent=11 // pred_region
          _
        $region24: #{tpu_custom_call.1} parent=11 // pred_fallthru
          _
        // Predicated region
        $region25: #{tpu_custom_call.1} parent=11 // pred_check
          %p365 = pneg %p194
        $region26: #{tpu_custom_call.1} parent=11 // pred_check_branch
          %367 = sbr.rel (%p365) target = $region28
        $region27: #{tpu_custom_call.1} parent=11 // pred_region
          _
        $region28: #{tpu_custom_call.1} parent=11 // pred_fallthru
          _
        // Predicated region
        $region29: #{tpu_custom_call.1} parent=11 // pred_check
          %p368 = pneg %p215
        $region30: #{tpu_custom_call.1} parent=11 // pred_check_branch
          %370 = sbr.rel (%p368) target = $region32
        $region31: #{tpu_custom_call.1} parent=11 // pred_region
          _
        $region32: #{tpu_custom_call.1} parent=11 // pred_fallthru
          _
        // Predicated region
        $region33: #{tpu_custom_call.1} parent=11 // pred_check
          %p371 = pneg %p236
        $region34: #{tpu_custom_call.1} parent=11 // pred_check_branch
          %373 = sbr.rel (%p371) target = $region36
        $region35: #{tpu_custom_call.1} parent=11 // pred_region
          _
        $region36: #{tpu_custom_call.1} parent=11 // pred_fallthru
          _
        // Predicated region
        $region37: #{tpu_custom_call.1} parent=11 // pred_check
          %p374 = pneg %p257
        $region38: #{tpu_custom_call.1} parent=11 // pred_check_branch
          %376 = sbr.rel (%p374) target = $region40
        $region39: #{tpu_custom_call.1} parent=11 // pred_region
          _
        $region40: #{tpu_custom_call.1} parent=11 // pred_fallthru
          _
        // Predicated region
        $region41: #{tpu_custom_call.1} parent=11 // pred_check
          %p377 = pneg %p278
        $region42: #{tpu_custom_call.1} parent=11 // pred_check_branch
          %379 = sbr.rel (%p377) target = $region44
        $region43: #{tpu_custom_call.1} parent=11 // pred_region
          _
        $region44: #{tpu_custom_call.1} parent=11 // pred_fallthru
          _
        // Predicated region
        $region45: #{tpu_custom_call.1} parent=11 // pred_check
          %p380 = pneg %p299
        $region46: #{tpu_custom_call.1} parent=11 // pred_check_branch
          %382 = sbr.rel (%p380) target = $region48
        $region47: #{tpu_custom_call.1} parent=11 // pred_region
          _
        $region48: #{tpu_custom_call.1} parent=11 // pred_fallthru
          _
        // Predicated region
        $region49: #{tpu_custom_call.1} parent=11 // pred_check
          %p383 = pneg %p320
        $region50: #{tpu_custom_call.1} parent=11 // pred_check_branch
          %385 = sbr.rel (%p383) target = $region52
        $region51: #{tpu_custom_call.1} parent=11 // pred_region
          _
        $region52: #{tpu_custom_call.1} parent=11 // pred_fallthru
          _
      $region12: #{tpu_custom_call.1} parent=5 // pred_fallthru
        _
      %p386 = scmp.lt.s32.totalorder %s20, 6
      // Predicated region
      $region53: #{tpu_custom_call.1} parent=5 // pred_check
        %p387 = pneg %p386
      $region54: #{tpu_custom_call.1} parent=5 // pred_check_branch
        %389 = sbr.rel (%p387) target = $region56
      $region55: #{tpu_custom_call.1} parent=5 // pred_region
        // Predicated region
        $region57: #{tpu_custom_call.1} parent=55 // pred_check
          %p390 = pneg %p73
        $region58: #{tpu_custom_call.1} parent=55 // pred_check_branch
          %392 = sbr.rel (%p390) target = $region60
        $region59: #{tpu_custom_call.1} parent=55 // pred_region
          %s393 = smul.u32 16, %s28
          %p394 = scmp.lt.s32.totalorder %s393, 47
          %s395 = scalar_select %p394, %s393, 47
          %s396 = smul.addr %s395, 8
          %s397 = scalar_lea.vmem %s1, %s396
          %s398 = smul.u32 16, %s28
        $region60: #{tpu_custom_call.1} parent=55 // pred_fallthru
          _
        // Predicated region
        $region61: #{tpu_custom_call.1} parent=55 // pred_check
          %p399 = pneg %p99
        $region62: #{tpu_custom_call.1} parent=55 // pred_check_branch
          %401 = sbr.rel (%p399) target = $region64
        $region63: #{tpu_custom_call.1} parent=55 // pred_region
          %p402 = scmp.lt.s32.totalorder %s28, 2
          %s403 = scalar_select %p402, %s28, 2
          %s404 = scalar_lea.vmem %s2, %s403
        $region64: #{tpu_custom_call.1} parent=55 // pred_fallthru
          _
        // Predicated region
        $region65: #{tpu_custom_call.1} parent=55 // pred_check
          %p405 = pneg %p125
        $region66: #{tpu_custom_call.1} parent=55 // pred_check_branch
          %407 = sbr.rel (%p405) target = $region68
        $region67: #{tpu_custom_call.1} parent=55 // pred_region
          %s408 = smul.u32 16, %s28
          %p409 = scmp.lt.s32.totalorder %s408, 47
          %s410 = scalar_select %p409, %s408, 47
          %s411 = smul.addr %s410, 8
          %s412 = scalar_lea.vmem %s3, %s411
          %s413 = smul.u32 16, %s28
        $region68: #{tpu_custom_call.1} parent=55 // pred_fallthru
          _
      $region56: #{tpu_custom_call.1} parent=5 // pred_fallthru
        _
      %p414 = scmp.le.s32.totalorder 1, %s20
      %p415 = scmp.lt.s32.totalorder %s20, 7
      %p416 = pnand %p414, %p415
      %p417 = pneg %p416
      // Predicated region
      $region69: #{tpu_custom_call.1} parent=5 // pred_check
        _
      $region70: #{tpu_custom_call.1} parent=5 // pred_check_branch
        %419 = sbr.rel (%p416) target = $region72
      $region71: #{tpu_custom_call.1} parent=5 // pred_region
        %s420 = ssub.s32 %s20, 1
        %p421 = pneg %p53
        %p422 = pneg %p50
        %s423 = smul.u32 16, %s30
        %p424 = scmp.lt.s32.totalorder %s423, 47
        %s425 = scalar_select %p424, %s423, 47
        %s426 = smul.addr %s425, 8
        %s427 = scalar_lea.vmem %s1, %s426
        %p428 = pneg %p79
        %p429 = pneg %p76
        %p430 = scmp.lt.s32.totalorder %s30, 2
        %s431 = scalar_select %p430, %s30, 2
        %s432 = scalar_lea.vmem %s2, %s431
        %p433 = pneg %p105
        %p434 = pneg %p102
        %s435 = smul.u32 16, %s30
        %p436 = scmp.lt.s32.totalorder %s435, 47
        %s437 = scalar_select %p436, %s435, 47
        %s438 = smul.addr %s437, 8
        %s439 = scalar_lea.vmem %s3, %s438
        %p440 = pneg %p131
        %p441 = pneg %p128
        %p442 = pneg %p152
        %p443 = pneg %p149
        %p444 = pneg %p173
        %p445 = pneg %p170
        %p446 = pneg %p194
        %p447 = pneg %p191
        %p448 = pneg %p215
        %p449 = pneg %p212
        %p450 = pneg %p236
        %p451 = pneg %p233
        %p452 = pneg %p257
        %p453 = pneg %p254
        %p454 = pneg %p278
        %p455 = pneg %p275
        %p456 = pneg %p299
        %p457 = pneg %p296
        %p458 = pneg %p320
        %p459 = pneg %p317
        %p460 = pneg %p341
        %p461 = pneg %p338
        %s462 = smul.u32 16, %s30
        %p463 = scmp.lt.s32.totalorder %s462, 47
        %s464 = scalar_select %p463, %s462, 47
        %s465 = smul.addr %s464, 8
        %s466 = scalar_lea.vmem %s1, %s465
        %s467 = smul.u32 16, %s30
        %p468 = scmp.lt.s32.totalorder %s30, 2
        %s469 = scalar_select %p468, %s30, 2
        %s470 = scalar_lea.vmem %s2, %s469
        %s471 = smul.u32 16, %s30
        %p472 = scmp.lt.s32.totalorder %s471, 47
        %s473 = scalar_select %p472, %s471, 47
        %s474 = smul.addr %s473, 8
        %s475 = scalar_lea.vmem %s3, %s474
        %s476 = smul.u32 16, %s30
        %v478 = vld [vmem:[%s0] sm:$0xff]
        %v479 = vld [vmem:[%s0 + $0x8] sm:$0xff]
        %v480 = vld [vmem:[%s0 + $0x10] sm:$0xff]
        %v481 = vpack.c.bf16 %v479, %v478
        %v482 = vpack.c.bf16 %v480, %v480
        %v483 = vld [vmem:[%s466] sm:$0xff]
        %v484 = vld [vmem:[%s466 + $0x8] sm:$0xff]
        %v485 = vld [vmem:[%s466 + $0x10] sm:$0xff]
        %v486 = vld [vmem:[%s466 + $0x18] sm:$0xff]
        %v487 = vld [vmem:[%s466 + $0x20] sm:$0xff]
        %v488 = vld [vmem:[%s466 + $0x28] sm:$0xff]
        %v489 = vld [vmem:[%s466 + $0x30] sm:$0xff]
        %v490 = vld [vmem:[%s466 + $0x38] sm:$0xff]
        %v491 = vld [vmem:[%s466 + $0x40] sm:$0xff]
        %v492 = vld [vmem:[%s466 + $0x48] sm:$0xff]
        %v493 = vld [vmem:[%s466 + $0x50] sm:$0xff]
        %v494 = vld [vmem:[%s466 + $0x58] sm:$0xff]
        %v495 = vld [vmem:[%s466 + $0x60] sm:$0xff]
        %v496 = vld [vmem:[%s466 + $0x68] sm:$0xff]
        %v497 = vld [vmem:[%s466 + $0x70] sm:$0xff]
        %v498 = vld [vmem:[%s466 + $0x78] sm:$0xff]
        %v499 = vld [vmem:[%s475] sm:$0xff]
        %v500 = vld [vmem:[%s475 + $0x8] sm:$0xff]
        %v501 = vld [vmem:[%s475 + $0x10] sm:$0xff]
        %v502 = vld [vmem:[%s475 + $0x18] sm:$0xff]
        %v503 = vld [vmem:[%s475 + $0x20] sm:$0xff]
        %v504 = vld [vmem:[%s475 + $0x28] sm:$0xff]
        %v505 = vld [vmem:[%s475 + $0x30] sm:$0xff]
        %v506 = vld [vmem:[%s475 + $0x38] sm:$0xff]
        %v507 = vld [vmem:[%s475 + $0x40] sm:$0xff]
        %v508 = vld [vmem:[%s475 + $0x48] sm:$0xff]
        %v509 = vld [vmem:[%s475 + $0x50] sm:$0xff]
        %v510 = vld [vmem:[%s475 + $0x58] sm:$0xff]
        %v511 = vld [vmem:[%s475 + $0x60] sm:$0xff]
        %v512 = vld [vmem:[%s475 + $0x68] sm:$0xff]
        %v513 = vld [vmem:[%s475 + $0x70] sm:$0xff]
        %v514 = vld [vmem:[%s475 + $0x78] sm:$0xff]
        %vm515 = vcmp.lt.s32.totalorder %v483, 24
        %vm516 = vcmp.lt.s32.totalorder %v484, 24
        %vm517 = vcmp.lt.s32.totalorder %v485, 24
        %vm518 = vcmp.lt.s32.totalorder %v486, 24
        %vm519 = vcmp.lt.s32.totalorder %v487, 24
        %vm520 = vcmp.lt.s32.totalorder %v488, 24
        %vm521 = vcmp.lt.s32.totalorder %v489, 24
        %vm522 = vcmp.lt.s32.totalorder %v490, 24
        %vm523 = vcmp.lt.s32.totalorder %v491, 24
        %vm524 = vcmp.lt.s32.totalorder %v492, 24
        %vm525 = vcmp.lt.s32.totalorder %v493, 24
        %vm526 = vcmp.lt.s32.totalorder %v494, 24
        %vm527 = vcmp.lt.s32.totalorder %v495, 24
        %vm528 = vcmp.lt.s32.totalorder %v496, 24
        %vm529 = vcmp.lt.s32.totalorder %v497, 24
        %vm530 = vcmp.lt.s32.totalorder %v498, 24
        %v531 = vlaneseq
        %v532 = vand.u32 %v531, 127
        %533 = vset.pattern.permute.xlu0 0
        %534 = vperm.xlu0 %533, %v483
        %v535 = vpop.permute.xlu0 %534
        %536 = vset.pattern.permute.xlu0 0
        %537 = vperm.xlu0 %536, %v484
        %v538 = vpop.permute.xlu0 %537
        %539 = vset.pattern.permute.xlu0 0
        %540 = vperm.xlu0 %539, %v485
        %v541 = vpop.permute.xlu0 %540
        %542 = vset.pattern.permute.xlu0 0
        %543 = vperm.xlu0 %542, %v486
        %v544 = vpop.permute.xlu0 %543
        %545 = vset.pattern.permute.xlu0 0
        %546 = vperm.xlu0 %545, %v487
        %v547 = vpop.permute.xlu0 %546
        %548 = vset.pattern.permute.xlu0 0
        %549 = vperm.xlu0 %548, %v488
        %v550 = vpop.permute.xlu0 %549
        %551 = vset.pattern.permute.xlu0 0
        %552 = vperm.xlu0 %551, %v489
        %v553 = vpop.permute.xlu0 %552
        %554 = vset.pattern.permute.xlu0 0
        %555 = vperm.xlu0 %554, %v490
        %v556 = vpop.permute.xlu0 %555
        %557 = vset.pattern.permute.xlu0 0
        %558 = vperm.xlu0 %557, %v491
        %v559 = vpop.permute.xlu0 %558
        %560 = vset.pattern.permute.xlu0 0
        %561 = vperm.xlu0 %560, %v492
        %v562 = vpop.permute.xlu0 %561
        %563 = vset.pattern.permute.xlu0 0
        %564 = vperm.xlu0 %563, %v493
        %v565 = vpop.permute.xlu0 %564
        %566 = vset.pattern.permute.xlu0 0
        %567 = vperm.xlu0 %566, %v494
        %v568 = vpop.permute.xlu0 %567
        %569 = vset.pattern.permute.xlu0 0
        %570 = vperm.xlu0 %569, %v495
        %v571 = vpop.permute.xlu0 %570
        %572 = vset.pattern.permute.xlu0 0
        %573 = vperm.xlu0 %572, %v496
        %v574 = vpop.permute.xlu0 %573
        %575 = vset.pattern.permute.xlu0 0
        %576 = vperm.xlu0 %575, %v497
        %v577 = vpop.permute.xlu0 %576
        %578 = vset.pattern.permute.xlu0 0
        %579 = vperm.xlu0 %578, %v498
        %v580 = vpop.permute.xlu0 %579
        %vm581 = vcmp.eq.s32.totalorder %v532, %v535
        %vm582 = vcmp.eq.s32.totalorder %v532, %v538
        %vm583 = vcmp.eq.s32.totalorder %v532, %v541
        %vm584 = vcmp.eq.s32.totalorder %v532, %v544
        %vm585 = vcmp.eq.s32.totalorder %v532, %v547
        %vm586 = vcmp.eq.s32.totalorder %v532, %v550
        %vm587 = vcmp.eq.s32.totalorder %v532, %v553
        %vm588 = vcmp.eq.s32.totalorder %v532, %v556
        %vm589 = vcmp.eq.s32.totalorder %v532, %v559
        %vm590 = vcmp.eq.s32.totalorder %v532, %v562
        %vm591 = vcmp.eq.s32.totalorder %v532, %v565
        %vm592 = vcmp.eq.s32.totalorder %v532, %v568
        %vm593 = vcmp.eq.s32.totalorder %v532, %v571
        %vm594 = vcmp.eq.s32.totalorder %v532, %v574
        %vm595 = vcmp.eq.s32.totalorder %v532, %v577
        %vm596 = vcmp.eq.s32.totalorder %v532, %v580
        %v597 = vsel %vm581, 1, 0
        %v598 = vsel %vm582, 1, 0
        %v599 = vsel %vm583, 1, 0
        %v600 = vsel %vm584, 1, 0
        %v601 = vsel %vm585, 1, 0
        %v602 = vsel %vm586, 1, 0
        %v603 = vsel %vm587, 1, 0
        %v604 = vsel %vm588, 1, 0
        %v605 = vsel %vm589, 1, 0
        %v606 = vsel %vm590, 1, 0
        %v607 = vsel %vm591, 1, 0
        %v608 = vsel %vm592, 1, 0
        %v609 = vsel %vm593, 1, 0
        %v610 = vsel %vm594, 1, 0
        %v611 = vsel %vm595, 1, 0
        %v612 = vsel %vm596, 1, 0
        %v613 = vcvt.s32.f32 %v597
        %v614 = vcvt.s32.f32 %v598
        %v615 = vcvt.s32.f32 %v599
        %v616 = vcvt.s32.f32 %v600
        %v617 = vcvt.s32.f32 %v601
        %v618 = vcvt.s32.f32 %v602
        %v619 = vcvt.s32.f32 %v603
        %v620 = vcvt.s32.f32 %v604
        %v621 = vcvt.s32.f32 %v605
        %v622 = vcvt.s32.f32 %v606
        %v623 = vcvt.s32.f32 %v607
        %v624 = vcvt.s32.f32 %v608
        %v625 = vcvt.s32.f32 %v609
        %v626 = vcvt.s32.f32 %v610
        %v627 = vcvt.s32.f32 %v611
        %v628 = vcvt.s32.f32 %v612
        %v629 = vpack.c.bf16 %v614, %v613
        %v630 = vpack.c.bf16 %v616, %v615
        %v631 = vpack.c.bf16 %v618, %v617
        %v632 = vpack.c.bf16 %v620, %v619
        %v633 = vpack.c.bf16 %v622, %v621
        %v634 = vpack.c.bf16 %v624, %v623
        %v635 = vpack.c.bf16 %v626, %v625
        %v636 = vpack.c.bf16 %v628, %v627
        %637 = vset.pattern.permute.xlu0 0
        %638 = vperm.xlu0 %637, %v499
        %v639 = vpop.permute.xlu0 %638
        %640 = vset.pattern.permute.xlu0 0
        %641 = vperm.xlu0 %640, %v500
        %v642 = vpop.permute.xlu0 %641
        %643 = vset.pattern.permute.xlu0 0
        %644 = vperm.xlu0 %643, %v501
        %v645 = vpop.permute.xlu0 %644
        %646 = vset.pattern.permute.xlu0 0
        %647 = vperm.xlu0 %646, %v502
        %v648 = vpop.permute.xlu0 %647
        %649 = vset.pattern.permute.xlu0 0
        %650 = vperm.xlu0 %649, %v503
        %v651 = vpop.permute.xlu0 %650
        %652 = vset.pattern.permute.xlu0 0
        %653 = vperm.xlu0 %652, %v504
        %v654 = vpop.permute.xlu0 %653
        %655 = vset.pattern.permute.xlu0 0
        %656 = vperm.xlu0 %655, %v505
        %v657 = vpop.permute.xlu0 %656
        %658 = vset.pattern.permute.xlu0 0
        %659 = vperm.xlu0 %658, %v506
        %v660 = vpop.permute.xlu0 %659
        %661 = vset.pattern.permute.xlu0 0
        %662 = vperm.xlu0 %661, %v507
        %v663 = vpop.permute.xlu0 %662
        %664 = vset.pattern.permute.xlu0 0
        %665 = vperm.xlu0 %664, %v508
        %v666 = vpop.permute.xlu0 %665
        %667 = vset.pattern.permute.xlu0 0
        %668 = vperm.xlu0 %667, %v509
        %v669 = vpop.permute.xlu0 %668
        %670 = vset.pattern.permute.xlu0 0
        %671 = vperm.xlu0 %670, %v510
        %v672 = vpop.permute.xlu0 %671
        %673 = vset.pattern.permute.xlu0 0
        %674 = vperm.xlu0 %673, %v511
        %v675 = vpop.permute.xlu0 %674
        %676 = vset.pattern.permute.xlu0 0
        %677 = vperm.xlu0 %676, %v512
        %v678 = vpop.permute.xlu0 %677
        %679 = vset.pattern.permute.xlu0 0
        %680 = vperm.xlu0 %679, %v513
        %v681 = vpop.permute.xlu0 %680
        %682 = vset.pattern.permute.xlu0 0
        %683 = vperm.xlu0 %682, %v514
        %v684 = vpop.permute.xlu0 %683
        %vm685 = vcmp.eq.s32.totalorder %v532, %v639
        %vm686 = vcmp.eq.s32.totalorder %v532, %v642
        %vm687 = vcmp.eq.s32.totalorder %v532, %v645
        %vm688 = vcmp.eq.s32.totalorder %v532, %v648
        %vm689 = vcmp.eq.s32.totalorder %v532, %v651
        %vm690 = vcmp.eq.s32.totalorder %v532, %v654
        %vm691 = vcmp.eq.s32.totalorder %v532, %v657
        %vm692 = vcmp.eq.s32.totalorder %v532, %v660
        %vm693 = vcmp.eq.s32.totalorder %v532, %v663
        %vm694 = vcmp.eq.s32.totalorder %v532, %v666
        %vm695 = vcmp.eq.s32.totalorder %v532, %v669
        %vm696 = vcmp.eq.s32.totalorder %v532, %v672
        %vm697 = vcmp.eq.s32.totalorder %v532, %v675
        %vm698 = vcmp.eq.s32.totalorder %v532, %v678
        %vm699 = vcmp.eq.s32.totalorder %v532, %v681
        %vm700 = vcmp.eq.s32.totalorder %v532, %v684
        %v701 = vsel %vm685, 1, 0
        %v702 = vsel %vm686, 1, 0
        %v703 = vsel %vm687, 1, 0
        %v704 = vsel %vm688, 1, 0
        %v705 = vsel %vm689, 1, 0
        %v706 = vsel %vm690, 1, 0
        %v707 = vsel %vm691, 1, 0
        %v708 = vsel %vm692, 1, 0
        %v709 = vsel %vm693, 1, 0
        %v710 = vsel %vm694, 1, 0
        %v711 = vsel %vm695, 1, 0
        %v712 = vsel %vm696, 1, 0
        %v713 = vsel %vm697, 1, 0
        %v714 = vsel %vm698, 1, 0
        %v715 = vsel %vm699, 1, 0
        %v716 = vsel %vm700, 1, 0
        %v717 = vcvt.s32.f32 %v701
        %v718 = vcvt.s32.f32 %v702
        %v719 = vcvt.s32.f32 %v703
        %v720 = vcvt.s32.f32 %v704
        %v721 = vcvt.s32.f32 %v705
        %v722 = vcvt.s32.f32 %v706
        %v723 = vcvt.s32.f32 %v707
        %v724 = vcvt.s32.f32 %v708
        %v725 = vcvt.s32.f32 %v709
        %v726 = vcvt.s32.f32 %v710
        %v727 = vcvt.s32.f32 %v711
        %v728 = vcvt.s32.f32 %v712
        %v729 = vcvt.s32.f32 %v713
        %v730 = vcvt.s32.f32 %v714
        %v731 = vcvt.s32.f32 %v715
        %v732 = vcvt.s32.f32 %v716
        %v733 = vpack.c.bf16 %v718, %v717
        %v734 = vpack.c.bf16 %v720, %v719
        %v735 = vpack.c.bf16 %v722, %v721
        %v736 = vpack.c.bf16 %v724, %v723
        %v737 = vpack.c.bf16 %v726, %v725
        %v738 = vpack.c.bf16 %v728, %v727
        %v739 = vpack.c.bf16 %v730, %v729
        %v740 = vpack.c.bf16 %v732, %v731
        %v741 = vlaneseq
        %v742 = vshrl.u32 %v741, 7
        %v743 = vadd.s32 %v742, 8
        %v744 = vadd.s32 %v742, 16
        %v745 = vld [vmem:[%s470] sm:$0x1]
        %v746 = vlaneseq
        %v747 = vshrl.u32 %v746, 7
        %v748 = vsub.s32 0, %v747
        %v749 = vrot.slane %v745, %v748
        %vm750 = vcmp.eq.s32.totalorder %v742, %v749
        %vm751 = vcmp.eq.s32.totalorder %v743, %v749
        %vm752 = vcmp.eq.s32.totalorder %v744, %v749
        %v753 = vsel %vm750, 1, 0
        %v754 = vsel %vm751, 1, 0
        %v755 = vsel %vm752, 1, 0
        %v756 = vcvt.s32.f32 %v753
        %v757 = vcvt.s32.f32 %v754
        %v758 = vcvt.s32.f32 %v755
        %v759 = vpack.c.bf16 %v757, %v756
        %v760 = vpack.c.bf16 %v758, %v758
        %vm761 = vcmask 195584
        %v763 = vsel %vm761, %v629, 0
        %v766 = vsel %vm761, %v630, 0
        %v769 = vsel %vm761, %v631, 0
        %v772 = vsel %vm761, %v632, 0
        %v775 = vsel %vm761, %v633, 0
        %v778 = vsel %vm761, %v634, 0
        %v781 = vsel %vm761, %v635, 0
        %v784 = vsel %vm761, %v636, 0
        %vm786 = vcmask 1043456
        %v788 = vsel %vm786, %v482, 0
        %790 = vmatprep.subr.bf16.mxu0 0
        %791 = vmatpush1.bf16.msra.mxu0 %v481
        %792 = vmatprep.subr.bf16.mxu0 0
        %793 = vmatpush1.bf16.msra.mxu0 %v788
        %794 = vmatprep.subr.bf16.mxu0 0
        %795 = vmatpush1.bf16.msra.mxu0 0
        %796 = vmatprep.subr.bf16.mxu0 0
        %797 = vmatpush1.bf16.msra.mxu0 0
        %798 = vmatprep.subr.bf16.mxu0 0
        %799 = vmatpush1.bf16.msra.mxu0 0
        %800 = vmatprep.subr.bf16.mxu0 0
        %801 = vmatpush1.bf16.msra.mxu0 0
        %802 = vmatprep.subr.bf16.mxu0 0
        %803 = vmatpush1.bf16.msra.mxu0 0
        %804 = vmatprep.subr.bf16.mxu0 0
        %805 = vmatpush1.bf16.msra.mxu0 0
        %806 = vmatprep.subr.bf16.mxu0 0
        %807 = vmatpush1.bf16.msra.mxu0 0
        %808 = vmatprep.subr.bf16.mxu0 0
        %809 = vmatpush1.bf16.msra.mxu0 0
        %810 = vmatprep.subr.bf16.mxu0 0
        %811 = vmatpush1.bf16.msra.mxu0 0
        %812 = vmatprep.subr.bf16.mxu0 0
        %813 = vmatpush1.bf16.msra.mxu0 0
        %814 = vmatprep.subr.bf16.mxu0 0
        %815 = vmatpush1.bf16.msra.mxu0 0
        %816 = vmatprep.subr.bf16.mxu0 0
        %817 = vmatpush1.bf16.msra.mxu0 0
        %818 = vmatprep.subr.bf16.mxu0 0
        %819 = vmatpush1.bf16.msra.mxu0 0
        %820 = vmatprep.subr.bf16.mxu0 0
        %821 = vmatpush1.bf16.msra.mxu0 0
        %822 = vmatprep.mubr.bf16.mxu0 0
        %823 = vmatmul.mubr.bf16.gmra.mrb[0].mxu0 %v763
        %v824 = vpop.f32.mrb[0].mxu0
        %v825 = vadd.f32 0.0, %v824
        %v826 = vpop.f32.mrb[0].mxu0
        %v827 = vpop.f32.mrb[0].mxu0
        %v828 = vadd.f32 0.0, %v827
        %v829 = vpop.f32.mrb[0].mxu0
        %830 = vmatprep.mubr.bf16.mxu0 0
        %831 = vmatmul.mubr.bf16.gmra.mrb[0].mxu0 %v766
        %v832 = vpop.f32.mrb[0].mxu0
        %v833 = vadd.f32 0.0, %v832
        %v834 = vpop.f32.mrb[0].mxu0
        %v835 = vpop.f32.mrb[0].mxu0
        %v836 = vadd.f32 0.0, %v835
        %v837 = vpop.f32.mrb[0].mxu0
        %838 = vmatprep.mubr.bf16.mxu0 0
        %839 = vmatmul.mubr.bf16.gmra.mrb[0].mxu0 %v769
        %v840 = vpop.f32.mrb[0].mxu0
        %v841 = vadd.f32 0.0, %v840
        %v842 = vpop.f32.mrb[0].mxu0
        %v843 = vpop.f32.mrb[0].mxu0
        %v844 = vadd.f32 0.0, %v843
        %v845 = vpop.f32.mrb[0].mxu0
        %846 = vmatprep.mubr.bf16.mxu0 0
        %847 = vmatmul.mubr.bf16.gmra.mrb[0].mxu0 %v772
        %v848 = vpop.f32.mrb[0].mxu0
        %v849 = vadd.f32 0.0, %v848
        %v850 = vpop.f32.mrb[0].mxu0
        %v851 = vpop.f32.mrb[0].mxu0
        %v852 = vadd.f32 0.0, %v851
        %v853 = vpop.f32.mrb[0].mxu0
        %854 = vmatprep.mubr.bf16.mxu0 0
        %855 = vmatmul.mubr.bf16.gmra.mrb[0].mxu0 %v775
        %v856 = vpop.f32.mrb[0].mxu0
        %v857 = vadd.f32 0.0, %v856
        %v858 = vpop.f32.mrb[0].mxu0
        %v859 = vpop.f32.mrb[0].mxu0
        %v860 = vadd.f32 0.0, %v859
        %v861 = vpop.f32.mrb[0].mxu0
        %862 = vmatprep.mubr.bf16.mxu0 0
        %863 = vmatmul.mubr.bf16.gmra.mrb[0].mxu0 %v778
        %v864 = vpop.f32.mrb[0].mxu0
        %v865 = vadd.f32 0.0, %v864
        %v866 = vpop.f32.mrb[0].mxu0
        %v867 = vpop.f32.mrb[0].mxu0
        %v868 = vadd.f32 0.0, %v867
        %v869 = vpop.f32.mrb[0].mxu0
        %870 = vmatprep.mubr.bf16.mxu0 0
        %871 = vmatmul.mubr.bf16.gmra.mrb[0].mxu0 %v781
        %v872 = vpop.f32.mrb[0].mxu0
        %v873 = vadd.f32 0.0, %v872
        %v874 = vpop.f32.mrb[0].mxu0
        %v875 = vpop.f32.mrb[0].mxu0
        %v876 = vadd.f32 0.0, %v875
        %v877 = vpop.f32.mrb[0].mxu0
        %878 = vmatprep.mubr.bf16.mxu0 0
        %879 = vmatmul.mubr.bf16.gmra.mrb[0].mxu0 %v784
        %v880 = vpop.f32.mrb[0].mxu0
        %v881 = vadd.f32 0.0, %v880
        %v882 = vpop.f32.mrb[0].mxu0
        %v883 = vpop.f32.mrb[0].mxu0
        %v884 = vadd.f32 0.0, %v883
        %v885 = vpop.f32.mrb[0].mxu0
        %886 = vdwg.mxu0
        %v888 = vsel %vm761, %v733, 0
        %v891 = vsel %vm761, %v734, 0
        %v894 = vsel %vm761, %v735, 0
        %v897 = vsel %vm761, %v736, 0
        %v900 = vsel %vm761, %v737, 0
        %v903 = vsel %vm761, %v738, 0
        %v906 = vsel %vm761, %v739, 0
        %v909 = vsel %vm761, %v740, 0
        %911 = vmatprep.subr.bf16.mxu0 0
        %912 = vmatpush1.bf16.msra.mxu0 %v481
        %913 = vmatprep.subr.bf16.mxu0 0
        %914 = vmatpush1.bf16.msra.mxu0 %v788
        %915 = vmatprep.subr.bf16.mxu0 0
        %916 = vmatpush1.bf16.msra.mxu0 0
        %917 = vmatprep.subr.bf16.mxu0 0
        %918 = vmatpush1.bf16.msra.mxu0 0
        %919 = vmatprep.subr.bf16.mxu0 0
        %920 = vmatpush1.bf16.msra.mxu0 0
        %921 = vmatprep.subr.bf16.mxu0 0
        %922 = vmatpush1.bf16.msra.mxu0 0
        %923 = vmatprep.subr.bf16.mxu0 0
        %924 = vmatpush1.bf16.msra.mxu0 0
        %925 = vmatprep.subr.bf16.mxu0 0
        %926 = vmatpush1.bf16.msra.mxu0 0
        %927 = vmatprep.subr.bf16.mxu0 0
        %928 = vmatpush1.bf16.msra.mxu0 0
        %929 = vmatprep.subr.bf16.mxu0 0
        %930 = vmatpush1.bf16.msra.mxu0 0
        %931 = vmatprep.subr.bf16.mxu0 0
        %932 = vmatpush1.bf16.msra.mxu0 0
        %933 = vmatprep.subr.bf16.mxu0 0
        %934 = vmatpush1.bf16.msra.mxu0 0
        %935 = vmatprep.subr.bf16.mxu0 0
        %936 = vmatpush1.bf16.msra.mxu0 0
        %937 = vmatprep.subr.bf16.mxu0 0
        %938 = vmatpush1.bf16.msra.mxu0 0
        %939 = vmatprep.subr.bf16.mxu0 0
        %940 = vmatpush1.bf16.msra.mxu0 0
        %941 = vmatprep.subr.bf16.mxu0 0
        %942 = vmatpush1.bf16.msra.mxu0 0
        %943 = vmatprep.mubr.bf16.mxu0 0
        %944 = vmatmul.mubr.bf16.gmra.mrb[0].mxu0 %v888
        %v945 = vpop.f32.mrb[0].mxu0
        %v946 = vadd.f32 0.0, %v945
        %v947 = vpop.f32.mrb[0].mxu0
        %v948 = vpop.f32.mrb[0].mxu0
        %v949 = vadd.f32 0.0, %v948
        %v950 = vpop.f32.mrb[0].mxu0
        %951 = vmatprep.mubr.bf16.mxu0 0
        %952 = vmatmul.mubr.bf16.gmra.mrb[0].mxu0 %v891
        %v953 = vpop.f32.mrb[0].mxu0
        %v954 = vadd.f32 0.0, %v953
        %v955 = vpop.f32.mrb[0].mxu0
        %v956 = vpop.f32.mrb[0].mxu0
        %v957 = vadd.f32 0.0, %v956
        %v958 = vpop.f32.mrb[0].mxu0
        %959 = vmatprep.mubr.bf16.mxu0 0
        %960 = vmatmul.mubr.bf16.gmra.mrb[0].mxu0 %v894
        %v961 = vpop.f32.mrb[0].mxu0
        %v962 = vadd.f32 0.0, %v961
        %v963 = vpop.f32.mrb[0].mxu0
        %v964 = vpop.f32.mrb[0].mxu0
        %v965 = vadd.f32 0.0, %v964
        %v966 = vpop.f32.mrb[0].mxu0
        %967 = vmatprep.mubr.bf16.mxu0 0
        %968 = vmatmul.mubr.bf16.gmra.mrb[0].mxu0 %v897
        %v969 = vpop.f32.mrb[0].mxu0
        %v970 = vadd.f32 0.0, %v969
        %v971 = vpop.f32.mrb[0].mxu0
        %v972 = vpop.f32.mrb[0].mxu0
        %v973 = vadd.f32 0.0, %v972
        %v974 = vpop.f32.mrb[0].mxu0
        %975 = vmatprep.mubr.bf16.mxu0 0
        %976 = vmatmul.mubr.bf16.gmra.mrb[0].mxu0 %v900
        %v977 = vpop.f32.mrb[0].mxu0
        %v978 = vadd.f32 0.0, %v977
        %v979 = vpop.f32.mrb[0].mxu0
        %v980 = vpop.f32.mrb[0].mxu0
        %v981 = vadd.f32 0.0, %v980
        %v982 = vpop.f32.mrb[0].mxu0
        %983 = vmatprep.mubr.bf16.mxu0 0
        %984 = vmatmul.mubr.bf16.gmra.mrb[0].mxu0 %v903
        %v985 = vpop.f32.mrb[0].mxu0
        %v986 = vadd.f32 0.0, %v985
        %v987 = vpop.f32.mrb[0].mxu0
        %v988 = vpop.f32.mrb[0].mxu0
        %v989 = vadd.f32 0.0, %v988
        %v990 = vpop.f32.mrb[0].mxu0
        %991 = vmatprep.mubr.bf16.mxu0 0
        %992 = vmatmul.mubr.bf16.gmra.mrb[0].mxu0 %v906
        %v993 = vpop.f32.mrb[0].mxu0
        %v994 = vadd.f32 0.0, %v993
        %v995 = vpop.f32.mrb[0].mxu0
        %v996 = vpop.f32.mrb[0].mxu0
        %v997 = vadd.f32 0.0, %v996
        %v998 = vpop.f32.mrb[0].mxu0
        %999 = vmatprep.mubr.bf16.mxu0 0
        %1000 = vmatmul.mubr.bf16.gmra.mrb[0].mxu0 %v909
        %v1001 = vpop.f32.mrb[0].mxu0
        %v1002 = vadd.f32 0.0, %v1001
        %v1003 = vpop.f32.mrb[0].mxu0
        %v1004 = vpop.f32.mrb[0].mxu0
        %v1005 = vadd.f32 0.0, %v1004
        %v1006 = vpop.f32.mrb[0].mxu0
        %1007 = vdwg.mxu0
        %v1008 = vpack.c.bf16 %v828, %v825
        %v1009 = vpack.c.bf16 %v836, %v833
        %v1010 = vpack.c.bf16 %v844, %v841
        %v1011 = vpack.c.bf16 %v852, %v849
        %v1012 = vpack.c.bf16 %v860, %v857
        %v1013 = vpack.c.bf16 %v868, %v865
        %v1014 = vpack.c.bf16 %v876, %v873
        %v1015 = vpack.c.bf16 %v884, %v881
        %v1016 = vpack.c.bf16 %v949, %v946
        %v1017 = vpack.c.bf16 %v957, %v954
        %v1018 = vpack.c.bf16 %v965, %v962
        %v1019 = vpack.c.bf16 %v973, %v970
        %v1020 = vpack.c.bf16 %v981, %v978
        %v1021 = vpack.c.bf16 %v989, %v986
        %v1022 = vpack.c.bf16 %v997, %v994
        %v1023 = vpack.c.bf16 %v1005, %v1002
        %v1024 = vld [vmem:[%s4] sm:$0xf]
        %v1025 = vld [vmem:[%s4 + $0x4] sm:$0xf]
        %v1026 = vld [vmem:[%s4 + $0x8] sm:$0xf]
        %v1027 = vld [vmem:[%s4 + $0xc] sm:$0xf]
        %v1028 = vld [vmem:[%s4 + $0x10] sm:$0xf]
        %v1029 = vld [vmem:[%s4 + $0x14] sm:$0xf]
        %v1030 = vld [vmem:[%s4 + $0x18] sm:$0xf]
        %v1031 = vld [vmem:[%s4 + $0x1c] sm:$0xf]
        %v1036 = vunpack.c.l.b16 %v1028
        %v1037 = vunpack.c.l.b16 %v1029
        %v1038 = vunpack.c.l.b16 %v1030
        %v1039 = vunpack.c.l.b16 %v1031
        %v1040 = vpack.c.b16 %v1037, %v1036
        %v1041 = vpack.c.b16 %v1039, %v1038
        %vm1044 = vcmask 261120
        %v1046 = vsel %vm1044, %v1016, 0
        %v1049 = vsel %vm1044, %v1017, 0
        %v1052 = vsel %vm1044, %v1018, 0
        %v1055 = vsel %vm1044, %v1019, 0
        %v1058 = vsel %vm1044, %v1020, 0
        %v1061 = vsel %vm1044, %v1021, 0
        %v1064 = vsel %vm1044, %v1022, 0
        %v1067 = vsel %vm1044, %v1023, 0
        %1069 = vmatprep.subr.bf16.mxu0 0
        %1070 = vmatpush1.bf16.msra.mxu0 %v1040
        %1071 = vmatprep.subr.bf16.mxu0 0
        %1072 = vmatpush1.bf16.msra.mxu0 %v1041
        %1073 = vmatprep.subr.bf16.mxu0 0
        %1074 = vmatpush1.bf16.msra.mxu0 0
        %1075 = vmatprep.subr.bf16.mxu0 0
        %1076 = vmatpush1.bf16.msra.mxu0 0
        %1077 = vmatprep.subr.bf16.mxu0 0
        %1078 = vmatpush1.bf16.msra.mxu0 0
        %1079 = vmatprep.subr.bf16.mxu0 0
        %1080 = vmatpush1.bf16.msra.mxu0 0
        %1081 = vmatprep.subr.bf16.mxu0 0
        %1082 = vmatpush1.bf16.msra.mxu0 0
        %1083 = vmatprep.subr.bf16.mxu0 0
        %1084 = vmatpush1.bf16.msra.mxu0 0
        %1085 = vmatprep.subr.bf16.mxu0 0
        %1086 = vmatpush1.bf16.msra.mxu0 0
        %1087 = vmatprep.subr.bf16.mxu0 0
        %1088 = vmatpush1.bf16.msra.mxu0 0
        %1089 = vmatprep.subr.bf16.mxu0 0
        %1090 = vmatpush1.bf16.msra.mxu0 0
        %1091 = vmatprep.subr.bf16.mxu0 0
        %1092 = vmatpush1.bf16.msra.mxu0 0
        %1093 = vmatprep.subr.bf16.mxu0 0
        %1094 = vmatpush1.bf16.msra.mxu0 0
        %1095 = vmatprep.subr.bf16.mxu0 0
        %1096 = vmatpush1.bf16.msra.mxu0 0
        %1097 = vmatprep.subr.bf16.mxu0 0
        %1098 = vmatpush1.bf16.msra.mxu0 0
        %1099 = vmatprep.subr.bf16.mxu0 0
        %1100 = vmatpush1.bf16.msra.mxu0 0
        %1101 = vmatprep.mubr.bf16.mxu0 0
        %1102 = vmatmul.mubr.bf16.gmra.mrb[0].mxu0 %v1046
        %v1103 = vpop.f32.mrb[0].mxu0
        %v1104 = vadd.f32 0.0, %v1103
        %v1105 = vpop.f32.mrb[0].mxu0
        %v1106 = vpop.f32.mrb[0].mxu0
        %v1107 = vadd.f32 0.0, %v1106
        %v1108 = vpop.f32.mrb[0].mxu0
        %1109 = vmatprep.mubr.bf16.mxu0 0
        %1110 = vmatmul.mubr.bf16.gmra.mrb[0].mxu0 %v1049
        %v1111 = vpop.f32.mrb[0].mxu0
        %v1112 = vadd.f32 0.0, %v1111
        %v1113 = vpop.f32.mrb[0].mxu0
        %v1114 = vpop.f32.mrb[0].mxu0
        %v1115 = vadd.f32 0.0, %v1114
        %v1116 = vpop.f32.mrb[0].mxu0
        %1117 = vmatprep.mubr.bf16.mxu0 0
        %1118 = vmatmul.mubr.bf16.gmra.mrb[0].mxu0 %v1052
        %v1119 = vpop.f32.mrb[0].mxu0
        %v1120 = vadd.f32 0.0, %v1119
        %v1121 = vpop.f32.mrb[0].mxu0
        %v1122 = vpop.f32.mrb[0].mxu0
        %v1123 = vadd.f32 0.0, %v1122
        %v1124 = vpop.f32.mrb[0].mxu0
        %1125 = vmatprep.mubr.bf16.mxu0 0
        %1126 = vmatmul.mubr.bf16.gmra.mrb[0].mxu0 %v1055
        %v1127 = vpop.f32.mrb[0].mxu0
        %v1128 = vadd.f32 0.0, %v1127
        %v1129 = vpop.f32.mrb[0].mxu0
        %v1130 = vpop.f32.mrb[0].mxu0
        %v1131 = vadd.f32 0.0, %v1130
        %v1132 = vpop.f32.mrb[0].mxu0
        %1133 = vmatprep.mubr.bf16.mxu0 0
        %1134 = vmatmul.mubr.bf16.gmra.mrb[0].mxu0 %v1058
        %v1135 = vpop.f32.mrb[0].mxu0
        %v1136 = vadd.f32 0.0, %v1135
        %v1137 = vpop.f32.mrb[0].mxu0
        %v1138 = vpop.f32.mrb[0].mxu0
        %v1139 = vadd.f32 0.0, %v1138
        %v1140 = vpop.f32.mrb[0].mxu0
        %1141 = vmatprep.mubr.bf16.mxu0 0
        %1142 = vmatmul.mubr.bf16.gmra.mrb[0].mxu0 %v1061
        %v1143 = vpop.f32.mrb[0].mxu0
        %v1144 = vadd.f32 0.0, %v1143
        %v1145 = vpop.f32.mrb[0].mxu0
        %v1146 = vpop.f32.mrb[0].mxu0
        %v1147 = vadd.f32 0.0, %v1146
        %v1148 = vpop.f32.mrb[0].mxu0
        %1149 = vmatprep.mubr.bf16.mxu0 0
        %1150 = vmatmul.mubr.bf16.gmra.mrb[0].mxu0 %v1064
        %v1151 = vpop.f32.mrb[0].mxu0
        %v1152 = vadd.f32 0.0, %v1151
        %v1153 = vpop.f32.mrb[0].mxu0
        %v1154 = vpop.f32.mrb[0].mxu0
        %v1155 = vadd.f32 0.0, %v1154
        %v1156 = vpop.f32.mrb[0].mxu0
        %1157 = vmatprep.mubr.bf16.mxu0 0
        %1158 = vmatmul.mubr.bf16.gmra.mrb[0].mxu0 %v1067
        %v1159 = vpop.f32.mrb[0].mxu0
        %v1160 = vadd.f32 0.0, %v1159
        %v1161 = vpop.f32.mrb[0].mxu0
        %v1162 = vpop.f32.mrb[0].mxu0
        %v1163 = vadd.f32 0.0, %v1162
        %v1164 = vpop.f32.mrb[0].mxu0
        %1165 = vdwg.mxu0
        %v1170 = vunpack.c.l.b16 %v1024
        %v1171 = vunpack.c.l.b16 %v1025
        %v1172 = vunpack.c.l.b16 %v1026
        %v1173 = vunpack.c.l.b16 %v1027
        %v1174 = vpack.c.b16 %v1171, %v1170
        %v1175 = vpack.c.b16 %v1173, %v1172
        %v1179 = vsel %vm1044, %v1008, 0
        %v1182 = vsel %vm1044, %v1009, 0
        %v1185 = vsel %vm1044, %v1010, 0
        %v1188 = vsel %vm1044, %v1011, 0
        %v1191 = vsel %vm1044, %v1012, 0
        %v1194 = vsel %vm1044, %v1013, 0
        %v1197 = vsel %vm1044, %v1014, 0
        %v1200 = vsel %vm1044, %v1015, 0
        %1202 = vmatprep.subr.bf16.mxu0 0
        %1203 = vmatpush1.bf16.msra.mxu0 %v1174
        %1204 = vmatprep.subr.bf16.mxu0 0
        %1205 = vmatpush1.bf16.msra.mxu0 %v1175
        %1206 = vmatprep.subr.bf16.mxu0 0
        %1207 = vmatpush1.bf16.msra.mxu0 0
        %1208 = vmatprep.subr.bf16.mxu0 0
        %1209 = vmatpush1.bf16.msra.mxu0 0
        %1210 = vmatprep.subr.bf16.mxu0 0
        %1211 = vmatpush1.bf16.msra.mxu0 0
        %1212 = vmatprep.subr.bf16.mxu0 0
        %1213 = vmatpush1.bf16.msra.mxu0 0
        %1214 = vmatprep.subr.bf16.mxu0 0
        %1215 = vmatpush1.bf16.msra.mxu0 0
        %1216 = vmatprep.subr.bf16.mxu0 0
        %1217 = vmatpush1.bf16.msra.mxu0 0
        %1218 = vmatprep.subr.bf16.mxu0 0
        %1219 = vmatpush1.bf16.msra.mxu0 0
        %1220 = vmatprep.subr.bf16.mxu0 0
        %1221 = vmatpush1.bf16.msra.mxu0 0
        %1222 = vmatprep.subr.bf16.mxu0 0
        %1223 = vmatpush1.bf16.msra.mxu0 0
        %1224 = vmatprep.subr.bf16.mxu0 0
        %1225 = vmatpush1.bf16.msra.mxu0 0
        %1226 = vmatprep.subr.bf16.mxu0 0
        %1227 = vmatpush1.bf16.msra.mxu0 0
        %1228 = vmatprep.subr.bf16.mxu0 0
        %1229 = vmatpush1.bf16.msra.mxu0 0
        %1230 = vmatprep.subr.bf16.mxu0 0
        %1231 = vmatpush1.bf16.msra.mxu0 0
        %1232 = vmatprep.subr.bf16.mxu0 0
        %1233 = vmatpush1.bf16.msra.mxu0 0
        %1234 = vmatprep.mubr.bf16.mxu0 0
        %1235 = vmatmul.mubr.bf16.gmra.mrb[0].mxu0 %v1179
        %v1236 = vpop.f32.mrb[0].mxu0
        %v1237 = vadd.f32 %v1104, %v1236
        %v1238 = vpop.f32.mrb[0].mxu0
        %v1239 = vpop.f32.mrb[0].mxu0
        %v1240 = vadd.f32 %v1107, %v1239
        %v1241 = vpop.f32.mrb[0].mxu0
        %1242 = vmatprep.mubr.bf16.mxu0 0
        %1243 = vmatmul.mubr.bf16.gmra.mrb[0].mxu0 %v1182
        %v1244 = vpop.f32.mrb[0].mxu0
        %v1245 = vadd.f32 %v1112, %v1244
        %v1246 = vpop.f32.mrb[0].mxu0
        %v1247 = vpop.f32.mrb[0].mxu0
        %v1248 = vadd.f32 %v1115, %v1247
        %v1249 = vpop.f32.mrb[0].mxu0
        %1250 = vmatprep.mubr.bf16.mxu0 0
        %1251 = vmatmul.mubr.bf16.gmra.mrb[0].mxu0 %v1185
        %v1252 = vpop.f32.mrb[0].mxu0
        %v1253 = vadd.f32 %v1120, %v1252
        %v1254 = vpop.f32.mrb[0].mxu0
        %v1255 = vpop.f32.mrb[0].mxu0
        %v1256 = vadd.f32 %v1123, %v1255
        %v1257 = vpop.f32.mrb[0].mxu0
        %1258 = vmatprep.mubr.bf16.mxu0 0
        %1259 = vmatmul.mubr.bf16.gmra.mrb[0].mxu0 %v1188
        %v1260 = vpop.f32.mrb[0].mxu0
        %v1261 = vadd.f32 %v1128, %v1260
        %v1262 = vpop.f32.mrb[0].mxu0
        %v1263 = vpop.f32.mrb[0].mxu0
        %v1264 = vadd.f32 %v1131, %v1263
        %v1265 = vpop.f32.mrb[0].mxu0
        %1266 = vmatprep.mubr.bf16.mxu0 0
        %1267 = vmatmul.mubr.bf16.gmra.mrb[0].mxu0 %v1191
        %v1268 = vpop.f32.mrb[0].mxu0
        %v1269 = vadd.f32 %v1136, %v1268
        %v1270 = vpop.f32.mrb[0].mxu0
        %v1271 = vpop.f32.mrb[0].mxu0
        %v1272 = vadd.f32 %v1139, %v1271
        %v1273 = vpop.f32.mrb[0].mxu0
        %1274 = vmatprep.mubr.bf16.mxu0 0
        %1275 = vmatmul.mubr.bf16.gmra.mrb[0].mxu0 %v1194
        %v1276 = vpop.f32.mrb[0].mxu0
        %v1277 = vadd.f32 %v1144, %v1276
        %v1278 = vpop.f32.mrb[0].mxu0
        %v1279 = vpop.f32.mrb[0].mxu0
        %v1280 = vadd.f32 %v1147, %v1279
        %v1281 = vpop.f32.mrb[0].mxu0
        %1282 = vmatprep.mubr.bf16.mxu0 0
        %1283 = vmatmul.mubr.bf16.gmra.mrb[0].mxu0 %v1197
        %v1284 = vpop.f32.mrb[0].mxu0
        %v1285 = vadd.f32 %v1152, %v1284
        %v1286 = vpop.f32.mrb[0].mxu0
        %v1287 = vpop.f32.mrb[0].mxu0
        %v1288 = vadd.f32 %v1155, %v1287
        %v1289 = vpop.f32.mrb[0].mxu0
        %1290 = vmatprep.mubr.bf16.mxu0 0
        %1291 = vmatmul.mubr.bf16.gmra.mrb[0].mxu0 %v1200
        %v1292 = vpop.f32.mrb[0].mxu0
        %v1293 = vadd.f32 %v1160, %v1292
        %v1294 = vpop.f32.mrb[0].mxu0
        %v1295 = vpop.f32.mrb[0].mxu0
        %v1296 = vadd.f32 %v1163, %v1295
        %v1297 = vpop.f32.mrb[0].mxu0
        %1298 = vdwg.mxu0
        %v1299 = vld [vmem:[%s5] sm:$0x1]
        %v1301 = vlaneseq
        %v1302 = vshrl.u32 %v1301, 7
        %v1303 = vsub.s32 0, %v1302
        %v1304 = vrot.slane %v1299, %v1303
        %v1306 = vadd.f32 %v1237, %v1304
        %v1307 = vadd.f32 %v1240, %v1304
        %v1308 = vadd.f32 %v1245, %v1304
        %v1309 = vadd.f32 %v1248, %v1304
        %v1310 = vadd.f32 %v1253, %v1304
        %v1311 = vadd.f32 %v1256, %v1304
        %v1312 = vadd.f32 %v1261, %v1304
        %v1313 = vadd.f32 %v1264, %v1304
        %v1314 = vadd.f32 %v1269, %v1304
        %v1315 = vadd.f32 %v1272, %v1304
        %v1316 = vadd.f32 %v1277, %v1304
        %v1317 = vadd.f32 %v1280, %v1304
        %v1318 = vadd.f32 %v1285, %v1304
        %v1319 = vadd.f32 %v1288, %v1304
        %v1320 = vadd.f32 %v1293, %v1304
        %v1321 = vadd.f32 %v1296, %v1304
        %vm1322 = vcmp.gt.f32.partialorder %v1306, 0.0
        %vm1323 = vcmp.gt.f32.partialorder %v1307, 0.0
        %vm1324 = vcmp.gt.f32.partialorder %v1308, 0.0
        %vm1325 = vcmp.gt.f32.partialorder %v1309, 0.0
        %vm1326 = vcmp.gt.f32.partialorder %v1310, 0.0
        %vm1327 = vcmp.gt.f32.partialorder %v1311, 0.0
        %vm1328 = vcmp.gt.f32.partialorder %v1312, 0.0
        %vm1329 = vcmp.gt.f32.partialorder %v1313, 0.0
        %vm1330 = vcmp.gt.f32.partialorder %v1314, 0.0
        %vm1331 = vcmp.gt.f32.partialorder %v1315, 0.0
        %vm1332 = vcmp.gt.f32.partialorder %v1316, 0.0
        %vm1333 = vcmp.gt.f32.partialorder %v1317, 0.0
        %vm1334 = vcmp.gt.f32.partialorder %v1318, 0.0
        %vm1335 = vcmp.gt.f32.partialorder %v1319, 0.0
        %vm1336 = vcmp.gt.f32.partialorder %v1320, 0.0
        %vm1337 = vcmp.gt.f32.partialorder %v1321, 0.0
        %v1338 = vmul.f32 %v1306, 0.01
        %v1339 = vmul.f32 %v1307, 0.01
        %v1340 = vmul.f32 %v1308, 0.01
        %v1341 = vmul.f32 %v1309, 0.01
        %v1342 = vmul.f32 %v1310, 0.01
        %v1343 = vmul.f32 %v1311, 0.01
        %v1344 = vmul.f32 %v1312, 0.01
        %v1345 = vmul.f32 %v1313, 0.01
        %v1346 = vmul.f32 %v1314, 0.01
        %v1347 = vmul.f32 %v1315, 0.01
        %v1348 = vmul.f32 %v1316, 0.01
        %v1349 = vmul.f32 %v1317, 0.01
        %v1350 = vmul.f32 %v1318, 0.01
        %v1351 = vmul.f32 %v1319, 0.01
        %v1352 = vmul.f32 %v1320, 0.01
        %v1353 = vmul.f32 %v1321, 0.01
        %v1354 = vsel %vm1322, %v1306, %v1338
        %v1355 = vsel %vm1323, %v1307, %v1339
        %v1356 = vsel %vm1324, %v1308, %v1340
        %v1357 = vsel %vm1325, %v1309, %v1341
        %v1358 = vsel %vm1326, %v1310, %v1342
        %v1359 = vsel %vm1327, %v1311, %v1343
        %v1360 = vsel %vm1328, %v1312, %v1344
        %v1361 = vsel %vm1329, %v1313, %v1345
        %v1362 = vsel %vm1330, %v1314, %v1346
        %v1363 = vsel %vm1331, %v1315, %v1347
        %v1364 = vsel %vm1332, %v1316, %v1348
        %v1365 = vsel %vm1333, %v1317, %v1349
        %v1366 = vsel %vm1334, %v1318, %v1350
        %v1367 = vsel %vm1335, %v1319, %v1351
        %v1368 = vsel %vm1336, %v1320, %v1352
        %v1369 = vsel %vm1337, %v1321, %v1353
        %v1370 = vpack.c.bf16 %v1355, %v1354
        %v1371 = vpack.c.bf16 %v1357, %v1356
        %v1372 = vpack.c.bf16 %v1359, %v1358
        %v1373 = vpack.c.bf16 %v1361, %v1360
        %v1374 = vpack.c.bf16 %v1363, %v1362
        %v1375 = vpack.c.bf16 %v1365, %v1364
        %v1376 = vpack.c.bf16 %v1367, %v1366
        %v1377 = vpack.c.bf16 %v1369, %v1368
        %v1378 = vld [vmem:[%s6] sm:$0xf]
        %v1379 = vld [vmem:[%s6 + $0x4] sm:$0xf]
        %v1380 = vld [vmem:[%s6 + $0x8] sm:$0xf]
        %v1381 = vld [vmem:[%s6 + $0xc] sm:$0xf]
        %v1382 = vld [vmem:[%s6 + $0x10] sm:$0xf]
        %v1383 = vld [vmem:[%s6 + $0x14] sm:$0xf]
        %v1384 = vld [vmem:[%s6 + $0x18] sm:$0xf]
        %v1385 = vld [vmem:[%s6 + $0x1c] sm:$0xf]
        %v1386 = vld [vmem:[%s6 + $0x20] sm:$0xf]
        %v1387 = vld [vmem:[%s6 + $0x24] sm:$0xf]
        %v1388 = vld [vmem:[%s6 + $0x28] sm:$0xf]
        %v1389 = vld [vmem:[%s6 + $0x2c] sm:$0xf]
        %v1390 = vld [vmem:[%s7] sm:$0x1]
        %v1392 = vlaneseq
        %v1393 = vshrl.u32 %v1392, 7
        %v1394 = vsub.s32 0, %v1393
        %v1395 = vrot.slane %v1390, %v1394
        %v1409 = vunpack.c.l.b16 %v1378
        %v1410 = vunpack.c.l.b16 %v1379
        %v1411 = vunpack.c.l.b16 %v1380
        %v1412 = vunpack.c.l.b16 %v1381
        %v1413 = vunpack.c.l.b16 %v1382
        %v1414 = vunpack.c.l.b16 %v1383
        %v1415 = vunpack.c.l.b16 %v1384
        %v1416 = vunpack.c.l.b16 %v1385
        %v1417 = vunpack.c.l.b16 %v1386
        %v1418 = vunpack.c.l.b16 %v1387
        %v1419 = vunpack.c.l.b16 %v1388
        %v1420 = vunpack.c.l.b16 %v1389
        %v1421 = vpack.c.b16 %v1410, %v1409
        %v1422 = vpack.c.b16 %v1412, %v1411
        %v1423 = vpack.c.b16 %v1414, %v1413
        %v1424 = vpack.c.b16 %v1416, %v1415
        %v1425 = vpack.c.b16 %v1418, %v1417
        %v1426 = vpack.c.b16 %v1420, %v1419
        %vm1433 = vcmask 785408
        %v1435 = vsel %vm1433, %v1370, 0
        %v1438 = vsel %vm1433, %v1371, 0
        %v1441 = vsel %vm1433, %v1372, 0
        %v1444 = vsel %vm1433, %v1373, 0
        %v1447 = vsel %vm1433, %v1374, 0
        %v1450 = vsel %vm1433, %v1375, 0
        %v1453 = vsel %vm1433, %v1376, 0
        %v1456 = vsel %vm1433, %v1377, 0
        %1458 = vmatprep.subr.bf16.mxu0 0
        %1459 = vmatpush1.bf16.msra.mxu0 %v1421
        %1460 = vmatprep.subr.bf16.mxu0 0
        %1461 = vmatpush1.bf16.msra.mxu0 %v1422
        %1462 = vmatprep.subr.bf16.mxu0 0
        %1463 = vmatpush1.bf16.msra.mxu0 %v1423
        %1464 = vmatprep.subr.bf16.mxu0 0
        %1465 = vmatpush1.bf16.msra.mxu0 %v1424
        %1466 = vmatprep.subr.bf16.mxu0 0
        %1467 = vmatpush1.bf16.msra.mxu0 %v1425
        %1468 = vmatprep.subr.bf16.mxu0 0
        %1469 = vmatpush1.bf16.msra.mxu0 %v1426
        %1470 = vmatprep.subr.bf16.mxu0 0
        %1471 = vmatpush1.bf16.msra.mxu0 0
        %1472 = vmatprep.subr.bf16.mxu0 0
        %1473 = vmatpush1.bf16.msra.mxu0 0
        %1474 = vmatprep.subr.bf16.mxu0 0
        %1475 = vmatpush1.bf16.msra.mxu0 0
        %1476 = vmatprep.subr.bf16.mxu0 0
        %1477 = vmatpush1.bf16.msra.mxu0 0
        %1478 = vmatprep.subr.bf16.mxu0 0
        %1479 = vmatpush1.bf16.msra.mxu0 0
        %1480 = vmatprep.subr.bf16.mxu0 0
        %1481 = vmatpush1.bf16.msra.mxu0 0
        %1482 = vmatprep.subr.bf16.mxu0 0
        %1483 = vmatpush1.bf16.msra.mxu0 0
        %1484 = vmatprep.subr.bf16.mxu0 0
        %1485 = vmatpush1.bf16.msra.mxu0 0
        %1486 = vmatprep.subr.bf16.mxu0 0
        %1487 = vmatpush1.bf16.msra.mxu0 0
        %1488 = vmatprep.subr.bf16.mxu0 0
        %1489 = vmatpush1.bf16.msra.mxu0 0
        %1490 = vmatprep.mubr.bf16.mxu0 0
        %1491 = vmatmul.mubr.bf16.gmra.mrb[0].mxu0 %v1435
        %v1492 = vpop.f32.mrb[0].mxu0
        %v1493 = vadd.f32 %v1395, %v1492
        %v1494 = vpop.f32.mrb[0].mxu0
        %v1495 = vpop.f32.mrb[0].mxu0
        %v1496 = vadd.f32 %v1395, %v1495
        %v1497 = vpop.f32.mrb[0].mxu0
        %1498 = vmatprep.mubr.bf16.mxu0 0
        %1499 = vmatmul.mubr.bf16.gmra.mrb[0].mxu0 %v1438
        %v1500 = vpop.f32.mrb[0].mxu0
        %v1501 = vadd.f32 %v1395, %v1500
        %v1502 = vpop.f32.mrb[0].mxu0
        %v1503 = vpop.f32.mrb[0].mxu0
        %v1504 = vadd.f32 %v1395, %v1503
        %v1505 = vpop.f32.mrb[0].mxu0
        %1506 = vmatprep.mubr.bf16.mxu0 0
        %1507 = vmatmul.mubr.bf16.gmra.mrb[0].mxu0 %v1441
        %v1508 = vpop.f32.mrb[0].mxu0
        %v1509 = vadd.f32 %v1395, %v1508
        %v1510 = vpop.f32.mrb[0].mxu0
        %v1511 = vpop.f32.mrb[0].mxu0
        %v1512 = vadd.f32 %v1395, %v1511
        %v1513 = vpop.f32.mrb[0].mxu0
        %1514 = vmatprep.mubr.bf16.mxu0 0
        %1515 = vmatmul.mubr.bf16.gmra.mrb[0].mxu0 %v1444
        %v1516 = vpop.f32.mrb[0].mxu0
        %v1517 = vadd.f32 %v1395, %v1516
        %v1518 = vpop.f32.mrb[0].mxu0
        %v1519 = vpop.f32.mrb[0].mxu0
        %v1520 = vadd.f32 %v1395, %v1519
        %v1521 = vpop.f32.mrb[0].mxu0
        %1522 = vmatprep.mubr.bf16.mxu0 0
        %1523 = vmatmul.mubr.bf16.gmra.mrb[0].mxu0 %v1447
        %v1524 = vpop.f32.mrb[0].mxu0
        %v1525 = vadd.f32 %v1395, %v1524
        %v1526 = vpop.f32.mrb[0].mxu0
        %v1527 = vpop.f32.mrb[0].mxu0
        %v1528 = vadd.f32 %v1395, %v1527
        %v1529 = vpop.f32.mrb[0].mxu0
        %1530 = vmatprep.mubr.bf16.mxu0 0
        %1531 = vmatmul.mubr.bf16.gmra.mrb[0].mxu0 %v1450
        %v1532 = vpop.f32.mrb[0].mxu0
        %v1533 = vadd.f32 %v1395, %v1532
        %v1534 = vpop.f32.mrb[0].mxu0
        %v1535 = vpop.f32.mrb[0].mxu0
        %v1536 = vadd.f32 %v1395, %v1535
        %v1537 = vpop.f32.mrb[0].mxu0
        %1538 = vmatprep.mubr.bf16.mxu0 0
        %1539 = vmatmul.mubr.bf16.gmra.mrb[0].mxu0 %v1453
        %v1540 = vpop.f32.mrb[0].mxu0
        %v1541 = vadd.f32 %v1395, %v1540
        %v1542 = vpop.f32.mrb[0].mxu0
        %v1543 = vpop.f32.mrb[0].mxu0
        %v1544 = vadd.f32 %v1395, %v1543
        %v1545 = vpop.f32.mrb[0].mxu0
        %1546 = vmatprep.mubr.bf16.mxu0 0
        %1547 = vmatmul.mubr.bf16.gmra.mrb[0].mxu0 %v1456
        %v1548 = vpop.f32.mrb[0].mxu0
        %v1549 = vadd.f32 %v1395, %v1548
        %v1550 = vpop.f32.mrb[0].mxu0
        %v1551 = vpop.f32.mrb[0].mxu0
        %v1552 = vadd.f32 %v1395, %v1551
        %v1553 = vpop.f32.mrb[0].mxu0
        %1554 = vdwg.mxu0
        %v1555 = vld [vmem:[%s12] sm:$0x1]
        %1557 = vset.pattern.permute.xlu0 32
        %1558 = vperm.xlu0 %1557, %v946
        %v1559 = vpop.permute.xlu0 %1558
        %1562 = vset.pattern.permute.xlu0 32
        %1563 = vperm.xlu0 %1562, %v949
        %v1564 = vpop.permute.xlu0 %1563
        %1567 = vset.pattern.permute.xlu0 32
        %1568 = vperm.xlu0 %1567, %v954
        %v1569 = vpop.permute.xlu0 %1568
        %1572 = vset.pattern.permute.xlu0 32
        %1573 = vperm.xlu0 %1572, %v957
        %v1574 = vpop.permute.xlu0 %1573
        %1577 = vset.pattern.permute.xlu0 32
        %1578 = vperm.xlu0 %1577, %v962
        %v1579 = vpop.permute.xlu0 %1578
        %1582 = vset.pattern.permute.xlu0 32
        %1583 = vperm.xlu0 %1582, %v965
        %v1584 = vpop.permute.xlu0 %1583
        %1587 = vset.pattern.permute.xlu0 32
        %1588 = vperm.xlu0 %1587, %v970
        %v1589 = vpop.permute.xlu0 %1588
        %1592 = vset.pattern.permute.xlu0 32
        %1593 = vperm.xlu0 %1592, %v973
        %v1594 = vpop.permute.xlu0 %1593
        %1597 = vset.pattern.permute.xlu0 32
        %1598 = vperm.xlu0 %1597, %v978
        %v1599 = vpop.permute.xlu0 %1598
        %1602 = vset.pattern.permute.xlu0 32
        %1603 = vperm.xlu0 %1602, %v981
        %v1604 = vpop.permute.xlu0 %1603
        %1607 = vset.pattern.permute.xlu0 32
        %1608 = vperm.xlu0 %1607, %v986
        %v1609 = vpop.permute.xlu0 %1608
        %1612 = vset.pattern.permute.xlu0 32
        %1613 = vperm.xlu0 %1612, %v989
        %v1614 = vpop.permute.xlu0 %1613
        %1617 = vset.pattern.permute.xlu0 32
        %1618 = vperm.xlu0 %1617, %v994
        %v1619 = vpop.permute.xlu0 %1618
        %1622 = vset.pattern.permute.xlu0 32
        %1623 = vperm.xlu0 %1622, %v997
        %v1624 = vpop.permute.xlu0 %1623
        %1627 = vset.pattern.permute.xlu0 32
        %1628 = vperm.xlu0 %1627, %v1002
        %v1629 = vpop.permute.xlu0 %1628
        %1632 = vset.pattern.permute.xlu0 32
        %1633 = vperm.xlu0 %1632, %v1005
        %v1634 = vpop.permute.xlu0 %1633
        %v1637 = vlaneseq
        %v1638 = vshrl.u32 %v1637, 7
        %v1639 = vsub.s32 0, %v1638
        %v1640 = vrot.slane %v1555, %v1639
        %v1642 = vmul.f32 %v1559, %v1640
        %v1643 = vmul.f32 %v1564, %v1640
        %v1644 = vmul.f32 %v1569, %v1640
        %v1645 = vmul.f32 %v1574, %v1640
        %v1646 = vmul.f32 %v1579, %v1640
        %v1647 = vmul.f32 %v1584, %v1640
        %v1648 = vmul.f32 %v1589, %v1640
        %v1649 = vmul.f32 %v1594, %v1640
        %v1650 = vmul.f32 %v1599, %v1640
        %v1651 = vmul.f32 %v1604, %v1640
        %v1652 = vmul.f32 %v1609, %v1640
        %v1653 = vmul.f32 %v1614, %v1640
        %v1654 = vmul.f32 %v1619, %v1640
        %v1655 = vmul.f32 %v1624, %v1640
        %v1656 = vmul.f32 %v1629, %v1640
        %v1657 = vmul.f32 %v1634, %v1640
        %p1658 = scmp.eq.s32.totalorder %s29, 0
        %p1659 = scmp.eq.s32.totalorder %s30, 0
        %p1660 = pnand %p1658, %p1659
        %p1661 = pneg %p1660
        // Predicated region
        $region73: #{tpu_custom_call.1} parent=71 // pred_check
          _
        $region74: #{tpu_custom_call.1} parent=71 // pred_check_branch
          %1663 = sbr.rel (%p1660) target = $region76
        $region75: #{tpu_custom_call.1} parent=71 // pred_region
          %vm1664 = vcmask 16384
          %1665 = vst.msk [vmem:[#allocation2] sm:$0x1] %vm1664, -1e+30
          %vm1666 = vcmask 23552
          %1667 = vst.msk [vmem:[#allocation3] sm:$0xff] %vm1666, 0.0
          %1668 = vst.msk [vmem:[#allocation3 + $0x8] sm:$0xff] %vm1666, 0.0
          %1669 = vst.msk [vmem:[#allocation3 + $0x10] sm:$0xff] %vm1666, 0.0
          %1670 = vst.msk [vmem:[#allocation4] sm:$0xff] %vm1044, %v478
          %1671 = vst.msk [vmem:[#allocation4 + $0x8] sm:$0xff] %vm1044, %v479
          %1672 = vst.msk [vmem:[#allocation4 + $0x10] sm:$0xff] %vm1044, %v480
        $region76: #{tpu_custom_call.1} parent=71 // pred_fallthru
          _
        // Predicated region
        $region77: #{tpu_custom_call.1} parent=71 // pred_check
          %p1673 = pneg %p1658
        $region78: #{tpu_custom_call.1} parent=71 // pred_check_branch
          %1675 = sbr.rel (%p1673) target = $region80
        $region79: #{tpu_custom_call.1} parent=71 // pred_region
          %v1676 = vld [vmem:[#allocation2] sm:$0x1]
          %v1677 = vsel %vm515, 1, 0
          %v1678 = vsel %vm516, 1, 0
          %v1679 = vsel %vm517, 1, 0
          %v1680 = vsel %vm518, 1, 0
          %v1681 = vsel %vm519, 1, 0
          %v1682 = vsel %vm520, 1, 0
          %v1683 = vsel %vm521, 1, 0
          %v1684 = vsel %vm522, 1, 0
          %v1685 = vsel %vm523, 1, 0
          %v1686 = vsel %vm524, 1, 0
          %v1687 = vsel %vm525, 1, 0
          %v1688 = vsel %vm526, 1, 0
          %v1689 = vsel %vm527, 1, 0
          %v1690 = vsel %vm528, 1, 0
          %v1691 = vsel %vm529, 1, 0
          %v1692 = vsel %vm530, 1, 0
          %1693 = vset.pattern.permute.xlu0 0
          %1694 = vperm.xlu0 %1693, %v1677
          %v1695 = vpop.permute.xlu0 %1694
          %1696 = vset.pattern.permute.xlu0 0
          %1697 = vperm.xlu0 %1696, %v1678
          %v1698 = vpop.permute.xlu0 %1697
          %1699 = vset.pattern.permute.xlu0 0
          %1700 = vperm.xlu0 %1699, %v1679
          %v1701 = vpop.permute.xlu0 %1700
          %1702 = vset.pattern.permute.xlu0 0
          %1703 = vperm.xlu0 %1702, %v1680
          %v1704 = vpop.permute.xlu0 %1703
          %1705 = vset.pattern.permute.xlu0 0
          %1706 = vperm.xlu0 %1705, %v1681
          %v1707 = vpop.permute.xlu0 %1706
          %1708 = vset.pattern.permute.xlu0 0
          %1709 = vperm.xlu0 %1708, %v1682
          %v1710 = vpop.permute.xlu0 %1709
          %1711 = vset.pattern.permute.xlu0 0
          %1712 = vperm.xlu0 %1711, %v1683
          %v1713 = vpop.permute.xlu0 %1712
          %1714 = vset.pattern.permute.xlu0 0
          %1715 = vperm.xlu0 %1714, %v1684
          %v1716 = vpop.permute.xlu0 %1715
          %1717 = vset.pattern.permute.xlu0 0
          %1718 = vperm.xlu0 %1717, %v1685
          %v1719 = vpop.permute.xlu0 %1718
          %1720 = vset.pattern.permute.xlu0 0
          %1721 = vperm.xlu0 %1720, %v1686
          %v1722 = vpop.permute.xlu0 %1721
          %1723 = vset.pattern.permute.xlu0 0
          %1724 = vperm.xlu0 %1723, %v1687
          %v1725 = vpop.permute.xlu0 %1724
          %1726 = vset.pattern.permute.xlu0 0
          %1727 = vperm.xlu0 %1726, %v1688
          %v1728 = vpop.permute.xlu0 %1727
          %1729 = vset.pattern.permute.xlu0 0
          %1730 = vperm.xlu0 %1729, %v1689
          %v1731 = vpop.permute.xlu0 %1730
          %1732 = vset.pattern.permute.xlu0 0
          %1733 = vperm.xlu0 %1732, %v1690
          %v1734 = vpop.permute.xlu0 %1733
          %1735 = vset.pattern.permute.xlu0 0
          %1736 = vperm.xlu0 %1735, %v1691
          %v1737 = vpop.permute.xlu0 %1736
          %1738 = vset.pattern.permute.xlu0 0
          %1739 = vperm.xlu0 %1738, %v1692
          %v1740 = vpop.permute.xlu0 %1739
          %vm1741 = vcmp.eq.s32.totalorder %v1695, 1
          %vm1742 = vcmp.eq.s32.totalorder %v1698, 1
          %vm1743 = vcmp.eq.s32.totalorder %v1701, 1
          %vm1744 = vcmp.eq.s32.totalorder %v1704, 1
          %vm1745 = vcmp.eq.s32.totalorder %v1707, 1
          %vm1746 = vcmp.eq.s32.totalorder %v1710, 1
          %vm1747 = vcmp.eq.s32.totalorder %v1713, 1
          %vm1748 = vcmp.eq.s32.totalorder %v1716, 1
          %vm1749 = vcmp.eq.s32.totalorder %v1719, 1
          %vm1750 = vcmp.eq.s32.totalorder %v1722, 1
          %vm1751 = vcmp.eq.s32.totalorder %v1725, 1
          %vm1752 = vcmp.eq.s32.totalorder %v1728, 1
          %vm1753 = vcmp.eq.s32.totalorder %v1731, 1
          %vm1754 = vcmp.eq.s32.totalorder %v1734, 1
          %vm1755 = vcmp.eq.s32.totalorder %v1737, 1
          %vm1756 = vcmp.eq.s32.totalorder %v1740, 1
          %v1757 = vsel %vm1741, %v1493, -1e+30
          %v1758 = vsel %vm1742, %v1496, -1e+30
          %v1759 = vsel %vm1743, %v1501, -1e+30
          %v1760 = vsel %vm1744, %v1504, -1e+30
          %v1761 = vsel %vm1745, %v1509, -1e+30
          %v1762 = vsel %vm1746, %v1512, -1e+30
          %v1763 = vsel %vm1747, %v1517, -1e+30
          %v1764 = vsel %vm1748, %v1520, -1e+30
          %v1765 = vsel %vm1749, %v1525, -1e+30
          %v1766 = vsel %vm1750, %v1528, -1e+30
          %v1767 = vsel %vm1751, %v1533, -1e+30
          %v1768 = vsel %vm1752, %v1536, -1e+30
          %v1769 = vsel %vm1753, %v1541, -1e+30
          %v1770 = vsel %vm1754, %v1544, -1e+30
          %v1771 = vsel %vm1755, %v1549, -1e+30
          %v1772 = vsel %vm1756, %v1552, -1e+30
          %vm1773 = vcmask 23552
          %v1774 = vsel %vm1773, %v1757, -inf
          %v1775 = vsel %vm1773, %v1758, -inf
          %v1776 = vsel %vm1773, %v1759, -inf
          %v1777 = vsel %vm1773, %v1760, -inf
          %v1778 = vsel %vm1773, %v1761, -inf
          %v1779 = vmax.f32 %v1774, %v1778
          %v1780 = vsel %vm1773, %v1762, -inf
          %v1781 = vmax.f32 %v1775, %v1780
          %v1782 = vsel %vm1773, %v1763, -inf
          %v1783 = vmax.f32 %v1776, %v1782
          %v1784 = vsel %vm1773, %v1764, -inf
          %v1785 = vmax.f32 %v1777, %v1784
          %v1786 = vsel %vm1773, %v1765, -inf
          %v1787 = vmax.f32 %v1779, %v1786
          %v1788 = vsel %vm1773, %v1766, -inf
          %v1789 = vmax.f32 %v1781, %v1788
          %v1790 = vsel %vm1773, %v1767, -inf
          %v1791 = vmax.f32 %v1783, %v1790
          %v1792 = vsel %vm1773, %v1768, -inf
          %v1793 = vmax.f32 %v1785, %v1792
          %v1794 = vsel %vm1773, %v1769, -inf
          %v1795 = vmax.f32 %v1787, %v1794
          %v1796 = vsel %vm1773, %v1770, -inf
          %v1797 = vmax.f32 %v1789, %v1796
          %v1798 = vsel %vm1773, %v1771, -inf
          %v1799 = vmax.f32 %v1791, %v1798
          %v1800 = vsel %vm1773, %v1772, -inf
          %v1801 = vmax.f32 %v1793, %v1800
          %v1802 = vmax.f32 %v1795, %v1797
          %v1803 = vmax.f32 %v1799, %v1801
          %v1804 = vmax.f32 %v1802, %v1803
          %v1805 = vrot.slane %v1804, 4
          %v1806 = vmax.f32 %v1804, %v1805
          %v1807 = vrot.slane %v1806, 2
          %v1808 = vmax.f32 %v1806, %v1807
          %v1809 = vrot.slane %v1808, 1
          %v1810 = vmax.f32 %v1808, %v1809
          %v1811 = vmax.f32 %v1676, %v1810
          %vm1812 = vcmask 16384
          %1813 = vst.msk [vmem:[#allocation2] sm:$0x1] %vm1812, %v1811
          %v1815 = vlaneseq
          %v1816 = vshrl.u32 %v1815, 7
          %v1817 = vsub.s32 0, %v1816
          %v1818 = vrot.slane %v1811, %v1817
          %v1820 = vsub.f32 %v1493, %v1818
          %v1821 = vsub.f32 %v1496, %v1818
          %v1822 = vsub.f32 %v1501, %v1818
          %v1823 = vsub.f32 %v1504, %v1818
          %v1824 = vsub.f32 %v1509, %v1818
          %v1825 = vsub.f32 %v1512, %v1818
          %v1826 = vsub.f32 %v1517, %v1818
          %v1827 = vsub.f32 %v1520, %v1818
          %v1828 = vsub.f32 %v1525, %v1818
          %v1829 = vsub.f32 %v1528, %v1818
          %v1830 = vsub.f32 %v1533, %v1818
          %v1831 = vsub.f32 %v1536, %v1818
          %v1832 = vsub.f32 %v1541, %v1818
          %v1833 = vsub.f32 %v1544, %v1818
          %v1834 = vsub.f32 %v1549, %v1818
          %v1835 = vsub.f32 %v1552, %v1818
          %v1836 = vadd.f32 %v1820, %v1642
          %v1837 = vadd.f32 %v1821, %v1643
          %v1838 = vadd.f32 %v1822, %v1644
          %v1839 = vadd.f32 %v1823, %v1645
          %v1840 = vadd.f32 %v1824, %v1646
          %v1841 = vadd.f32 %v1825, %v1647
          %v1842 = vadd.f32 %v1826, %v1648
          %v1843 = vadd.f32 %v1827, %v1649
          %v1844 = vadd.f32 %v1828, %v1650
          %v1845 = vadd.f32 %v1829, %v1651
          %v1846 = vadd.f32 %v1830, %v1652
          %v1847 = vadd.f32 %v1831, %v1653
          %v1848 = vadd.f32 %v1832, %v1654
          %v1849 = vadd.f32 %v1833, %v1655
          %v1850 = vadd.f32 %v1834, %v1656
          %v1851 = vadd.f32 %v1835, %v1657
          %v1852 = vmul.f32 %v1836, 1.442695
          %v1853 = vpow.pop %v1852
          %v1854 = vmul.f32 %v1837, 1.442695
          %v1855 = vpow.pop %v1854
          %v1856 = vmul.f32 %v1838, 1.442695
          %v1857 = vpow.pop %v1856
          %v1858 = vmul.f32 %v1839, 1.442695
          %v1859 = vpow.pop %v1858
          %v1860 = vmul.f32 %v1840, 1.442695
          %v1861 = vpow.pop %v1860
          %v1862 = vmul.f32 %v1841, 1.442695
          %v1863 = vpow.pop %v1862
          %v1864 = vmul.f32 %v1842, 1.442695
          %v1865 = vpow.pop %v1864
          %v1866 = vmul.f32 %v1843, 1.442695
          %v1867 = vpow.pop %v1866
          %v1868 = vmul.f32 %v1844, 1.442695
          %v1869 = vpow.pop %v1868
          %v1870 = vmul.f32 %v1845, 1.442695
          %v1871 = vpow.pop %v1870
          %v1872 = vmul.f32 %v1846, 1.442695
          %v1873 = vpow.pop %v1872
          %v1874 = vmul.f32 %v1847, 1.442695
          %v1875 = vpow.pop %v1874
          %v1876 = vmul.f32 %v1848, 1.442695
          %v1877 = vpow.pop %v1876
          %v1878 = vmul.f32 %v1849, 1.442695
          %v1879 = vpow.pop %v1878
          %v1880 = vmul.f32 %v1850, 1.442695
          %v1881 = vpow.pop %v1880
          %v1882 = vmul.f32 %v1851, 1.442695
          %v1883 = vpow.pop %v1882
          %v1884 = vcvt.s32.f32 %v1677
          %v1885 = vcvt.s32.f32 %v1678
          %v1886 = vcvt.s32.f32 %v1679
          %v1887 = vcvt.s32.f32 %v1680
          %v1888 = vcvt.s32.f32 %v1681
          %v1889 = vcvt.s32.f32 %v1682
          %v1890 = vcvt.s32.f32 %v1683
          %v1891 = vcvt.s32.f32 %v1684
          %v1892 = vcvt.s32.f32 %v1685
          %v1893 = vcvt.s32.f32 %v1686
          %v1894 = vcvt.s32.f32 %v1687
          %v1895 = vcvt.s32.f32 %v1688
          %v1896 = vcvt.s32.f32 %v1689
          %v1897 = vcvt.s32.f32 %v1690
          %v1898 = vcvt.s32.f32 %v1691
          %v1899 = vcvt.s32.f32 %v1692
          %1901 = vset.pattern.permute.xlu0 0
          %1902 = vperm.xlu0 %1901, %v1884
          %v1903 = vpop.permute.xlu0 %1902
          %1906 = vset.pattern.permute.xlu0 0
          %1907 = vperm.xlu0 %1906, %v1885
          %v1908 = vpop.permute.xlu0 %1907
          %1911 = vset.pattern.permute.xlu0 0
          %1912 = vperm.xlu0 %1911, %v1886
          %v1913 = vpop.permute.xlu0 %1912
          %1916 = vset.pattern.permute.xlu0 0
          %1917 = vperm.xlu0 %1916, %v1887
          %v1918 = vpop.permute.xlu0 %1917
          %1921 = vset.pattern.permute.xlu0 0
          %1922 = vperm.xlu0 %1921, %v1888
          %v1923 = vpop.permute.xlu0 %1922
          %1926 = vset.pattern.permute.xlu0 0
          %1927 = vperm.xlu0 %1926, %v1889
          %v1928 = vpop.permute.xlu0 %1927
          %1931 = vset.pattern.permute.xlu0 0
          %1932 = vperm.xlu0 %1931, %v1890
          %v1933 = vpop.permute.xlu0 %1932
          %1936 = vset.pattern.permute.xlu0 0
          %1937 = vperm.xlu0 %1936, %v1891
          %v1938 = vpop.permute.xlu0 %1937
          %1941 = vset.pattern.permute.xlu0 0
          %1942 = vperm.xlu0 %1941, %v1892
          %v1943 = vpop.permute.xlu0 %1942
          %1946 = vset.pattern.permute.xlu0 0
          %1947 = vperm.xlu0 %1946, %v1893
          %v1948 = vpop.permute.xlu0 %1947
          %1951 = vset.pattern.permute.xlu0 0
          %1952 = vperm.xlu0 %1951, %v1894
          %v1953 = vpop.permute.xlu0 %1952
          %1956 = vset.pattern.permute.xlu0 0
          %1957 = vperm.xlu0 %1956, %v1895
          %v1958 = vpop.permute.xlu0 %1957
          %1961 = vset.pattern.permute.xlu0 0
          %1962 = vperm.xlu0 %1961, %v1896
          %v1963 = vpop.permute.xlu0 %1962
          %1966 = vset.pattern.permute.xlu0 0
          %1967 = vperm.xlu0 %1966, %v1897
          %v1968 = vpop.permute.xlu0 %1967
          %1971 = vset.pattern.permute.xlu0 0
          %1972 = vperm.xlu0 %1971, %v1898
          %v1973 = vpop.permute.xlu0 %1972
          %1976 = vset.pattern.permute.xlu0 0
          %1977 = vperm.xlu0 %1976, %v1899
          %v1978 = vpop.permute.xlu0 %1977
          %v1980 = vmul.f32 %v1853, %v1903
          %v1981 = vmul.f32 %v1855, %v1908
          %v1982 = vmul.f32 %v1857, %v1913
          %v1983 = vmul.f32 %v1859, %v1918
          %v1984 = vmul.f32 %v1861, %v1923
          %v1985 = vmul.f32 %v1863, %v1928
          %v1986 = vmul.f32 %v1865, %v1933
          %v1987 = vmul.f32 %v1867, %v1938
          %v1988 = vmul.f32 %v1869, %v1943
          %v1989 = vmul.f32 %v1871, %v1948
          %v1990 = vmul.f32 %v1873, %v1953
          %v1991 = vmul.f32 %v1875, %v1958
          %v1992 = vmul.f32 %v1877, %v1963
          %v1993 = vmul.f32 %v1879, %v1968
          %v1994 = vmul.f32 %v1881, %v1973
          %v1995 = vmul.f32 %v1883, %v1978
          %v1996 = vld [vmem:[#allocation3] sm:$0xff]
          %v1997 = vld [vmem:[#allocation3 + $0x8] sm:$0xff]
          %v1998 = vld [vmem:[#allocation3 + $0x10] sm:$0xff]
          %v1999 = vsub.f32 %v1676, %v1811
          %v2000 = vmul.f32 %v1999, 1.442695
          %v2001 = vpow.pop %v2000
          %v2003 = vlaneseq
          %v2004 = vshrl.u32 %v2003, 7
          %v2005 = vsub.s32 0, %v2004
          %v2006 = vrot.slane %v2001, %v2005
          %v2008 = vmul.f32 %v1996, %v2006
          %v2009 = vmul.f32 %v1997, %v2006
          %v2010 = vmul.f32 %v1998, %v2006
          %v2011 = vpack.c.bf16 %v1981, %v1980
          %v2012 = vpack.c.bf16 %v1983, %v1982
          %v2013 = vpack.c.bf16 %v1985, %v1984
          %v2014 = vpack.c.bf16 %v1987, %v1986
          %v2015 = vpack.c.bf16 %v1989, %v1988
          %v2016 = vpack.c.bf16 %v1991, %v1990
          %v2017 = vpack.c.bf16 %v1993, %v1992
          %v2018 = vpack.c.bf16 %v1995, %v1994
          %2019 = vmatprep.subr.bf16.mxu0 0
          %2020 = vmatpush1.bf16.msra.mxu0 %v2011
          %2021 = vmatprep.subr.bf16.mxu0 0
          %2022 = vmatpush1.bf16.msra.mxu0 %v2012
          %2023 = vmatprep.subr.bf16.mxu0 0
          %2024 = vmatpush1.bf16.msra.mxu0 %v2013
          %2025 = vmatprep.subr.bf16.mxu0 0
          %2026 = vmatpush1.bf16.msra.mxu0 %v2014
          %2027 = vmatprep.subr.bf16.mxu0 0
          %2028 = vmatpush1.bf16.msra.mxu0 %v2015
          %2029 = vmatprep.subr.bf16.mxu0 0
          %2030 = vmatpush1.bf16.msra.mxu0 %v2016
          %2031 = vmatprep.subr.bf16.mxu0 0
          %2032 = vmatpush1.bf16.msra.mxu0 %v2017
          %2033 = vmatprep.subr.bf16.mxu0 0
          %2034 = vmatpush1.bf16.msra.mxu0 %v2018
          %2035 = vmatprep.subr.bf16.mxu0 0
          %2036 = vmatpush1.bf16.msra.mxu0 0
          %2037 = vmatprep.subr.bf16.mxu0 0
          %2038 = vmatpush1.bf16.msra.mxu0 0
          %2039 = vmatprep.subr.bf16.mxu0 0
          %2040 = vmatpush1.bf16.msra.mxu0 0
          %2041 = vmatprep.subr.bf16.mxu0 0
          %2042 = vmatpush1.bf16.msra.mxu0 0
          %2043 = vmatprep.subr.bf16.mxu0 0
          %2044 = vmatpush1.bf16.msra.mxu0 0
          %2045 = vmatprep.subr.bf16.mxu0 0
          %2046 = vmatpush1.bf16.msra.mxu0 0
          %2047 = vmatprep.subr.bf16.mxu0 0
          %2048 = vmatpush1.bf16.msra.mxu0 0
          %2049 = vmatprep.subr.bf16.mxu0 0
          %2050 = vmatpush1.bf16.msra.mxu0 0
          %2051 = vmatprep.mubr.bf16.mxu0 0
          %2052 = vmatmul.mubr.bf16.gmra.mrb[0].mxu0 %v759
          %v2053 = vpop.f32.mrb[0].mxu0
          %v2054 = vadd.f32 0.0, %v2053
          %v2055 = vpop.f32.mrb[0].mxu0
          %v2056 = vpop.f32.mrb[0].mxu0
          %v2057 = vadd.f32 0.0, %v2056
          %v2058 = vpop.f32.mrb[0].mxu0
          %2059 = vmatprep.mubr.bf16.mxu0 0
          %2060 = vmatmul.mubr.bf16.gmra.mrb[0].mxu0 %v760
          %v2061 = vpop.f32.mrb[0].mxu0
          %v2062 = vadd.f32 0.0, %v2061
          %v2063 = vpop.f32.mrb[0].mxu0
          %v2064 = vpop.f32.mrb[0].mxu0
          %v2065 = vpop.f32.mrb[0].mxu0
          %2066 = vdwg.mxu0
          %v2067 = vadd.f32 %v2008, %v2054
          %v2068 = vadd.f32 %v2009, %v2057
          %v2069 = vadd.f32 %v2010, %v2062
          %2070 = vst.msk [vmem:[#allocation3] sm:$0xff] %vm1773, %v2067
          %2071 = vst.msk [vmem:[#allocation3 + $0x8] sm:$0xff] %vm1773, %v2068
          %2072 = vst.msk [vmem:[#allocation3 + $0x10] sm:$0xff] %vm1773, %v2069
        $region80: #{tpu_custom_call.1} parent=71 // pred_fallthru
          _
        %p2073 = scmp.eq.s32.totalorder %s29, 1
        // Predicated region
        $region81: #{tpu_custom_call.1} parent=71 // pred_check
          %p2074 = pneg %p2073
        $region82: #{tpu_custom_call.1} parent=71 // pred_check_branch
          %2076 = sbr.rel (%p2074) target = $region84
        $region83: #{tpu_custom_call.1} parent=71 // pred_region
          %v2077 = vld [vmem:[#allocation2] sm:$0x1]
          %v2079 = vlaneseq
          %v2080 = vshrl.u32 %v2079, 7
          %v2081 = vsub.s32 0, %v2080
          %v2082 = vrot.slane %v2077, %v2081
          %v2084 = vsub.f32 %v1493, %v2082
          %v2085 = vsub.f32 %v1496, %v2082
          %v2086 = vsub.f32 %v1501, %v2082
          %v2087 = vsub.f32 %v1504, %v2082
          %v2088 = vsub.f32 %v1509, %v2082
          %v2089 = vsub.f32 %v1512, %v2082
          %v2090 = vsub.f32 %v1517, %v2082
          %v2091 = vsub.f32 %v1520, %v2082
          %v2092 = vsub.f32 %v1525, %v2082
          %v2093 = vsub.f32 %v1528, %v2082
          %v2094 = vsub.f32 %v1533, %v2082
          %v2095 = vsub.f32 %v1536, %v2082
          %v2096 = vsub.f32 %v1541, %v2082
          %v2097 = vsub.f32 %v1544, %v2082
          %v2098 = vsub.f32 %v1549, %v2082
          %v2099 = vsub.f32 %v1552, %v2082
          %v2100 = vadd.f32 %v2084, %v1642
          %v2101 = vadd.f32 %v2085, %v1643
          %v2102 = vadd.f32 %v2086, %v1644
          %v2103 = vadd.f32 %v2087, %v1645
          %v2104 = vadd.f32 %v2088, %v1646
          %v2105 = vadd.f32 %v2089, %v1647
          %v2106 = vadd.f32 %v2090, %v1648
          %v2107 = vadd.f32 %v2091, %v1649
          %v2108 = vadd.f32 %v2092, %v1650
          %v2109 = vadd.f32 %v2093, %v1651
          %v2110 = vadd.f32 %v2094, %v1652
          %v2111 = vadd.f32 %v2095, %v1653
          %v2112 = vadd.f32 %v2096, %v1654
          %v2113 = vadd.f32 %v2097, %v1655
          %v2114 = vadd.f32 %v2098, %v1656
          %v2115 = vadd.f32 %v2099, %v1657
          %v2116 = vmul.f32 %v2100, 1.442695
          %v2117 = vpow.pop %v2116
          %v2118 = vmul.f32 %v2101, 1.442695
          %v2119 = vpow.pop %v2118
          %v2120 = vmul.f32 %v2102, 1.442695
          %v2121 = vpow.pop %v2120
          %v2122 = vmul.f32 %v2103, 1.442695
          %v2123 = vpow.pop %v2122
          %v2124 = vmul.f32 %v2104, 1.442695
          %v2125 = vpow.pop %v2124
          %v2126 = vmul.f32 %v2105, 1.442695
          %v2127 = vpow.pop %v2126
          %v2128 = vmul.f32 %v2106, 1.442695
          %v2129 = vpow.pop %v2128
          %v2130 = vmul.f32 %v2107, 1.442695
          %v2131 = vpow.pop %v2130
          %v2132 = vmul.f32 %v2108, 1.442695
          %v2133 = vpow.pop %v2132
          %v2134 = vmul.f32 %v2109, 1.442695
          %v2135 = vpow.pop %v2134
          %v2136 = vmul.f32 %v2110, 1.442695
          %v2137 = vpow.pop %v2136
          %v2138 = vmul.f32 %v2111, 1.442695
          %v2139 = vpow.pop %v2138
          %v2140 = vmul.f32 %v2112, 1.442695
          %v2141 = vpow.pop %v2140
          %v2142 = vmul.f32 %v2113, 1.442695
          %v2143 = vpow.pop %v2142
          %v2144 = vmul.f32 %v2114, 1.442695
          %v2145 = vpow.pop %v2144
          %v2146 = vmul.f32 %v2115, 1.442695
          %v2147 = vpow.pop %v2146
          %v2148 = vsel %vm515, 1, 0
          %v2149 = vsel %vm516, 1, 0
          %v2150 = vsel %vm517, 1, 0
          %v2151 = vsel %vm518, 1, 0
          %v2152 = vsel %vm519, 1, 0
          %v2153 = vsel %vm520, 1, 0
          %v2154 = vsel %vm521, 1, 0
          %v2155 = vsel %vm522, 1, 0
          %v2156 = vsel %vm523, 1, 0
          %v2157 = vsel %vm524, 1, 0
          %v2158 = vsel %vm525, 1, 0
          %v2159 = vsel %vm526, 1, 0
          %v2160 = vsel %vm527, 1, 0
          %v2161 = vsel %vm528, 1, 0
          %v2162 = vsel %vm529, 1, 0
          %v2163 = vsel %vm530, 1, 0
          %v2164 = vcvt.s32.f32 %v2148
          %v2165 = vcvt.s32.f32 %v2149
          %v2166 = vcvt.s32.f32 %v2150
          %v2167 = vcvt.s32.f32 %v2151
          %v2168 = vcvt.s32.f32 %v2152
          %v2169 = vcvt.s32.f32 %v2153
          %v2170 = vcvt.s32.f32 %v2154
          %v2171 = vcvt.s32.f32 %v2155
          %v2172 = vcvt.s32.f32 %v2156
          %v2173 = vcvt.s32.f32 %v2157
          %v2174 = vcvt.s32.f32 %v2158
          %v2175 = vcvt.s32.f32 %v2159
          %v2176 = vcvt.s32.f32 %v2160
          %v2177 = vcvt.s32.f32 %v2161
          %v2178 = vcvt.s32.f32 %v2162
          %v2179 = vcvt.s32.f32 %v2163
          %2181 = vset.pattern.permute.xlu0 0
          %2182 = vperm.xlu0 %2181, %v2164
          %v2183 = vpop.permute.xlu0 %2182
          %2186 = vset.pattern.permute.xlu0 0
          %2187 = vperm.xlu0 %2186, %v2165
          %v2188 = vpop.permute.xlu0 %2187
          %2191 = vset.pattern.permute.xlu0 0
          %2192 = vperm.xlu0 %2191, %v2166
          %v2193 = vpop.permute.xlu0 %2192
          %2196 = vset.pattern.permute.xlu0 0
          %2197 = vperm.xlu0 %2196, %v2167
          %v2198 = vpop.permute.xlu0 %2197
          %2201 = vset.pattern.permute.xlu0 0
          %2202 = vperm.xlu0 %2201, %v2168
          %v2203 = vpop.permute.xlu0 %2202
          %2206 = vset.pattern.permute.xlu0 0
          %2207 = vperm.xlu0 %2206, %v2169
          %v2208 = vpop.permute.xlu0 %2207
          %2211 = vset.pattern.permute.xlu0 0
          %2212 = vperm.xlu0 %2211, %v2170
          %v2213 = vpop.permute.xlu0 %2212
          %2216 = vset.pattern.permute.xlu0 0
          %2217 = vperm.xlu0 %2216, %v2171
          %v2218 = vpop.permute.xlu0 %2217
          %2221 = vset.pattern.permute.xlu0 0
          %2222 = vperm.xlu0 %2221, %v2172
          %v2223 = vpop.permute.xlu0 %2222
          %2226 = vset.pattern.permute.xlu0 0
          %2227 = vperm.xlu0 %2226, %v2173
          %v2228 = vpop.permute.xlu0 %2227
          %2231 = vset.pattern.permute.xlu0 0
          %2232 = vperm.xlu0 %2231, %v2174
          %v2233 = vpop.permute.xlu0 %2232
          %2236 = vset.pattern.permute.xlu0 0
          %2237 = vperm.xlu0 %2236, %v2175
          %v2238 = vpop.permute.xlu0 %2237
          %2241 = vset.pattern.permute.xlu0 0
          %2242 = vperm.xlu0 %2241, %v2176
          %v2243 = vpop.permute.xlu0 %2242
          %2246 = vset.pattern.permute.xlu0 0
          %2247 = vperm.xlu0 %2246, %v2177
          %v2248 = vpop.permute.xlu0 %2247
          %2251 = vset.pattern.permute.xlu0 0
          %2252 = vperm.xlu0 %2251, %v2178
          %v2253 = vpop.permute.xlu0 %2252
          %2256 = vset.pattern.permute.xlu0 0
          %2257 = vperm.xlu0 %2256, %v2179
          %v2258 = vpop.permute.xlu0 %2257
          %v2260 = vmul.f32 %v2117, %v2183
          %v2261 = vmul.f32 %v2119, %v2188
          %v2262 = vmul.f32 %v2121, %v2193
          %v2263 = vmul.f32 %v2123, %v2198
          %v2264 = vmul.f32 %v2125, %v2203
          %v2265 = vmul.f32 %v2127, %v2208
          %v2266 = vmul.f32 %v2129, %v2213
          %v2267 = vmul.f32 %v2131, %v2218
          %v2268 = vmul.f32 %v2133, %v2223
          %v2269 = vmul.f32 %v2135, %v2228
          %v2270 = vmul.f32 %v2137, %v2233
          %v2271 = vmul.f32 %v2139, %v2238
          %v2272 = vmul.f32 %v2141, %v2243
          %v2273 = vmul.f32 %v2143, %v2248
          %v2274 = vmul.f32 %v2145, %v2253
          %v2275 = vmul.f32 %v2147, %v2258
          %v2276 = vld [vmem:[#allocation3] sm:$0xff]
          %v2277 = vld [vmem:[#allocation3 + $0x8] sm:$0xff]
          %v2278 = vld [vmem:[#allocation3 + $0x10] sm:$0xff]
          %v2279 = vpack.c.bf16 %v2277, %v2276
          %v2280 = vpack.c.bf16 %v2278, %v2278
          %v2282 = vsel %vm786, %v2280, 0
          %2284 = vmatprep.subr.bf16.mxu0 0
          %2285 = vmatpush1.bf16.msra.mxu0 %v2279
          %2286 = vmatprep.subr.bf16.mxu0 0
          %2287 = vmatpush1.bf16.msra.mxu0 %v2282
          %2288 = vmatprep.subr.bf16.mxu0 0
          %2289 = vmatpush1.bf16.msra.mxu0 0
          %2290 = vmatprep.subr.bf16.mxu0 0
          %2291 = vmatpush1.bf16.msra.mxu0 0
          %2292 = vmatprep.subr.bf16.mxu0 0
          %2293 = vmatpush1.bf16.msra.mxu0 0
          %2294 = vmatprep.subr.bf16.mxu0 0
          %2295 = vmatpush1.bf16.msra.mxu0 0
          %2296 = vmatprep.subr.bf16.mxu0 0
          %2297 = vmatpush1.bf16.msra.mxu0 0
          %2298 = vmatprep.subr.bf16.mxu0 0
          %2299 = vmatpush1.bf16.msra.mxu0 0
          %2300 = vmatprep.subr.bf16.mxu0 0
          %2301 = vmatpush1.bf16.msra.mxu0 0
          %2302 = vmatprep.subr.bf16.mxu0 0
          %2303 = vmatpush1.bf16.msra.mxu0 0
          %2304 = vmatprep.subr.bf16.mxu0 0
          %2305 = vmatpush1.bf16.msra.mxu0 0
          %2306 = vmatprep.subr.bf16.mxu0 0
          %2307 = vmatpush1.bf16.msra.mxu0 0
          %2308 = vmatprep.subr.bf16.mxu0 0
          %2309 = vmatpush1.bf16.msra.mxu0 0
          %2310 = vmatprep.subr.bf16.mxu0 0
          %2311 = vmatpush1.bf16.msra.mxu0 0
          %2312 = vmatprep.subr.bf16.mxu0 0
          %2313 = vmatpush1.bf16.msra.mxu0 0
          %2314 = vmatprep.subr.bf16.mxu0 0
          %2315 = vmatpush1.bf16.msra.mxu0 0
          %2316 = vmatprep.mubr.bf16.mxu0 0
          %2317 = vmatmul.mubr.bf16.gmra.mrb[0].mxu0 %v763
          %v2318 = vpop.f32.mrb[0].mxu0
          %v2319 = vadd.f32 1e-10, %v2318
          %v2320 = vpop.f32.mrb[0].mxu0
          %v2321 = vpop.f32.mrb[0].mxu0
          %v2322 = vadd.f32 1e-10, %v2321
          %v2323 = vpop.f32.mrb[0].mxu0
          %2324 = vmatprep.mubr.bf16.mxu0 0
          %2325 = vmatmul.mubr.bf16.gmra.mrb[0].mxu0 %v766
          %v2326 = vpop.f32.mrb[0].mxu0
          %v2327 = vadd.f32 1e-10, %v2326
          %v2328 = vpop.f32.mrb[0].mxu0
          %v2329 = vpop.f32.mrb[0].mxu0
          %v2330 = vadd.f32 1e-10, %v2329
          %v2331 = vpop.f32.mrb[0].mxu0
          %2332 = vmatprep.mubr.bf16.mxu0 0
          %2333 = vmatmul.mubr.bf16.gmra.mrb[0].mxu0 %v769
          %v2334 = vpop.f32.mrb[0].mxu0
          %v2335 = vadd.f32 1e-10, %v2334
          %v2336 = vpop.f32.mrb[0].mxu0
          %v2337 = vpop.f32.mrb[0].mxu0
          %v2338 = vadd.f32 1e-10, %v2337
          %v2339 = vpop.f32.mrb[0].mxu0
          %2340 = vmatprep.mubr.bf16.mxu0 0
          %2341 = vmatmul.mubr.bf16.gmra.mrb[0].mxu0 %v772
          %v2342 = vpop.f32.mrb[0].mxu0
          %v2343 = vadd.f32 1e-10, %v2342
          %v2344 = vpop.f32.mrb[0].mxu0
          %v2345 = vpop.f32.mrb[0].mxu0
          %v2346 = vadd.f32 1e-10, %v2345
          %v2347 = vpop.f32.mrb[0].mxu0
          %2348 = vmatprep.mubr.bf16.mxu0 0
          %2349 = vmatmul.mubr.bf16.gmra.mrb[0].mxu0 %v775
          %v2350 = vpop.f32.mrb[0].mxu0
          %v2351 = vadd.f32 1e-10, %v2350
          %v2352 = vpop.f32.mrb[0].mxu0
          %v2353 = vpop.f32.mrb[0].mxu0
          %v2354 = vadd.f32 1e-10, %v2353
          %v2355 = vpop.f32.mrb[0].mxu0
          %2356 = vmatprep.mubr.bf16.mxu0 0
          %2357 = vmatmul.mubr.bf16.gmra.mrb[0].mxu0 %v778
          %v2358 = vpop.f32.mrb[0].mxu0
          %v2359 = vadd.f32 1e-10, %v2358
          %v2360 = vpop.f32.mrb[0].mxu0
          %v2361 = vpop.f32.mrb[0].mxu0
          %v2362 = vadd.f32 1e-10, %v2361
          %v2363 = vpop.f32.mrb[0].mxu0
          %2364 = vmatprep.mubr.bf16.mxu0 0
          %2365 = vmatmul.mubr.bf16.gmra.mrb[0].mxu0 %v781
          %v2366 = vpop.f32.mrb[0].mxu0
          %v2367 = vadd.f32 1e-10, %v2366
          %v2368 = vpop.f32.mrb[0].mxu0
          %v2369 = vpop.f32.mrb[0].mxu0
          %v2370 = vadd.f32 1e-10, %v2369
          %v2371 = vpop.f32.mrb[0].mxu0
          %2372 = vmatprep.mubr.bf16.mxu0 0
          %2373 = vmatmul.mubr.bf16.gmra.mrb[0].mxu0 %v784
          %v2374 = vpop.f32.mrb[0].mxu0
          %v2375 = vadd.f32 1e-10, %v2374
          %v2376 = vpop.f32.mrb[0].mxu0
          %v2377 = vpop.f32.mrb[0].mxu0
          %v2378 = vadd.f32 1e-10, %v2377
          %v2379 = vpop.f32.mrb[0].mxu0
          %2380 = vdwg.mxu0
          %v2381 = vrcp.pop %v2319
          %v2382 = vmul.f32 %v2260, %v2381
          %v2383 = vrcp.pop %v2322
          %v2384 = vmul.f32 %v2261, %v2383
          %v2385 = vrcp.pop %v2327
          %v2386 = vmul.f32 %v2262, %v2385
          %v2387 = vrcp.pop %v2330
          %v2388 = vmul.f32 %v2263, %v2387
          %v2389 = vrcp.pop %v2335
          %v2390 = vmul.f32 %v2264, %v2389
          %v2391 = vrcp.pop %v2338
          %v2392 = vmul.f32 %v2265, %v2391
          %v2393 = vrcp.pop %v2343
          %v2394 = vmul.f32 %v2266, %v2393
          %v2395 = vrcp.pop %v2346
          %v2396 = vmul.f32 %v2267, %v2395
          %v2397 = vrcp.pop %v2351
          %v2398 = vmul.f32 %v2268, %v2397
          %v2399 = vrcp.pop %v2354
          %v2400 = vmul.f32 %v2269, %v2399
          %v2401 = vrcp.pop %v2359
          %v2402 = vmul.f32 %v2270, %v2401
          %v2403 = vrcp.pop %v2362
          %v2404 = vmul.f32 %v2271, %v2403
          %v2405 = vrcp.pop %v2367
          %v2406 = vmul.f32 %v2272, %v2405
          %v2407 = vrcp.pop %v2370
          %v2408 = vmul.f32 %v2273, %v2407
          %v2409 = vrcp.pop %v2375
          %v2410 = vmul.f32 %v2274, %v2409
          %v2411 = vrcp.pop %v2378
          %v2412 = vmul.f32 %v2275, %v2411
          %v2413 = vld [vmem:[%s8] sm:$0xf]
          %v2414 = vld [vmem:[%s8 + $0x4] sm:$0xf]
          %v2415 = vld [vmem:[%s8 + $0x8] sm:$0xf]
          %v2416 = vld [vmem:[%s8 + $0xc] sm:$0xf]
          %v2417 = vld [vmem:[%s8 + $0x10] sm:$0xf]
          %v2418 = vld [vmem:[%s8 + $0x14] sm:$0xf]
          %v2419 = vld [vmem:[%s8 + $0x18] sm:$0xf]
          %v2420 = vld [vmem:[%s8 + $0x1c] sm:$0xf]
          %v2425 = vunpack.c.l.b16 %v2417
          %v2426 = vunpack.c.l.b16 %v2418
          %v2427 = vunpack.c.l.b16 %v2419
          %v2428 = vunpack.c.l.b16 %v2420
          %v2429 = vpack.c.b16 %v2426, %v2425
          %v2430 = vpack.c.b16 %v2428, %v2427
          %2433 = vmatprep.subr.bf16.mxu0 0
          %2434 = vmatpush1.bf16.msra.mxu0 %v2429
          %2435 = vmatprep.subr.bf16.mxu0 0
          %2436 = vmatpush1.bf16.msra.mxu0 %v2430
          %2437 = vmatprep.subr.bf16.mxu0 0
          %2438 = vmatpush1.bf16.msra.mxu0 0
          %2439 = vmatprep.subr.bf16.mxu0 0
          %2440 = vmatpush1.bf16.msra.mxu0 0
          %2441 = vmatprep.subr.bf16.mxu0 0
          %2442 = vmatpush1.bf16.msra.mxu0 0
          %2443 = vmatprep.subr.bf16.mxu0 0
          %2444 = vmatpush1.bf16.msra.mxu0 0
          %2445 = vmatprep.subr.bf16.mxu0 0
          %2446 = vmatpush1.bf16.msra.mxu0 0
          %2447 = vmatprep.subr.bf16.mxu0 0
          %2448 = vmatpush1.bf16.msra.mxu0 0
          %2449 = vmatprep.subr.bf16.mxu0 0
          %2450 = vmatpush1.bf16.msra.mxu0 0
          %2451 = vmatprep.subr.bf16.mxu0 0
          %2452 = vmatpush1.bf16.msra.mxu0 0
          %2453 = vmatprep.subr.bf16.mxu0 0
          %2454 = vmatpush1.bf16.msra.mxu0 0
          %2455 = vmatprep.subr.bf16.mxu0 0
          %2456 = vmatpush1.bf16.msra.mxu0 0
          %2457 = vmatprep.subr.bf16.mxu0 0
          %2458 = vmatpush1.bf16.msra.mxu0 0
          %2459 = vmatprep.subr.bf16.mxu0 0
          %2460 = vmatpush1.bf16.msra.mxu0 0
          %2461 = vmatprep.subr.bf16.mxu0 0
          %2462 = vmatpush1.bf16.msra.mxu0 0
          %2463 = vmatprep.subr.bf16.mxu0 0
          %2464 = vmatpush1.bf16.msra.mxu0 0
          %2465 = vmatprep.mubr.bf16.mxu0 0
          %2466 = vmatmul.mubr.bf16.gmra.mrb[0].mxu0 %v1046
          %v2467 = vpop.f32.mrb[0].mxu0
          %v2468 = vadd.f32 0.0, %v2467
          %v2469 = vpop.f32.mrb[0].mxu0
          %v2470 = vpop.f32.mrb[0].mxu0
          %v2471 = vadd.f32 0.0, %v2470
          %v2472 = vpop.f32.mrb[0].mxu0
          %2473 = vmatprep.mubr.bf16.mxu0 0
          %2474 = vmatmul.mubr.bf16.gmra.mrb[0].mxu0 %v1049
          %v2475 = vpop.f32.mrb[0].mxu0
          %v2476 = vadd.f32 0.0, %v2475
          %v2477 = vpop.f32.mrb[0].mxu0
          %v2478 = vpop.f32.mrb[0].mxu0
          %v2479 = vadd.f32 0.0, %v2478
          %v2480 = vpop.f32.mrb[0].mxu0
          %2481 = vmatprep.mubr.bf16.mxu0 0
          %2482 = vmatmul.mubr.bf16.gmra.mrb[0].mxu0 %v1052
          %v2483 = vpop.f32.mrb[0].mxu0
          %v2484 = vadd.f32 0.0, %v2483
          %v2485 = vpop.f32.mrb[0].mxu0
          %v2486 = vpop.f32.mrb[0].mxu0
          %v2487 = vadd.f32 0.0, %v2486
          %v2488 = vpop.f32.mrb[0].mxu0
          %2489 = vmatprep.mubr.bf16.mxu0 0
          %2490 = vmatmul.mubr.bf16.gmra.mrb[0].mxu0 %v1055
          %v2491 = vpop.f32.mrb[0].mxu0
          %v2492 = vadd.f32 0.0, %v2491
          %v2493 = vpop.f32.mrb[0].mxu0
          %v2494 = vpop.f32.mrb[0].mxu0
          %v2495 = vadd.f32 0.0, %v2494
          %v2496 = vpop.f32.mrb[0].mxu0
          %2497 = vmatprep.mubr.bf16.mxu0 0
          %2498 = vmatmul.mubr.bf16.gmra.mrb[0].mxu0 %v1058
          %v2499 = vpop.f32.mrb[0].mxu0
          %v2500 = vadd.f32 0.0, %v2499
          %v2501 = vpop.f32.mrb[0].mxu0
          %v2502 = vpop.f32.mrb[0].mxu0
          %v2503 = vadd.f32 0.0, %v2502
          %v2504 = vpop.f32.mrb[0].mxu0
          %2505 = vmatprep.mubr.bf16.mxu0 0
          %2506 = vmatmul.mubr.bf16.gmra.mrb[0].mxu0 %v1061
          %v2507 = vpop.f32.mrb[0].mxu0
          %v2508 = vadd.f32 0.0, %v2507
          %v2509 = vpop.f32.mrb[0].mxu0
          %v2510 = vpop.f32.mrb[0].mxu0
          %v2511 = vadd.f32 0.0, %v2510
          %v2512 = vpop.f32.mrb[0].mxu0
          %2513 = vmatprep.mubr.bf16.mxu0 0
          %2514 = vmatmul.mubr.bf16.gmra.mrb[0].mxu0 %v1064
          %v2515 = vpop.f32.mrb[0].mxu0
          %v2516 = vadd.f32 0.0, %v2515
          %v2517 = vpop.f32.mrb[0].mxu0
          %v2518 = vpop.f32.mrb[0].mxu0
          %v2519 = vadd.f32 0.0, %v2518
          %v2520 = vpop.f32.mrb[0].mxu0
          %2521 = vmatprep.mubr.bf16.mxu0 0
          %2522 = vmatmul.mubr.bf16.gmra.mrb[0].mxu0 %v1067
          %v2523 = vpop.f32.mrb[0].mxu0
          %v2524 = vadd.f32 0.0, %v2523
          %v2525 = vpop.f32.mrb[0].mxu0
          %v2526 = vpop.f32.mrb[0].mxu0
          %v2527 = vadd.f32 0.0, %v2526
          %v2528 = vpop.f32.mrb[0].mxu0
          %2529 = vdwg.mxu0
          %v2534 = vunpack.c.l.b16 %v2413
          %v2535 = vunpack.c.l.b16 %v2414
          %v2536 = vunpack.c.l.b16 %v2415
          %v2537 = vunpack.c.l.b16 %v2416
          %v2538 = vpack.c.b16 %v2535, %v2534
          %v2539 = vpack.c.b16 %v2537, %v2536
          %2542 = vmatprep.subr.bf16.mxu0 0
          %2543 = vmatpush1.bf16.msra.mxu0 %v2538
          %2544 = vmatprep.subr.bf16.mxu0 0
          %2545 = vmatpush1.bf16.msra.mxu0 %v2539
          %2546 = vmatprep.subr.bf16.mxu0 0
          %2547 = vmatpush1.bf16.msra.mxu0 0
          %2548 = vmatprep.subr.bf16.mxu0 0
          %2549 = vmatpush1.bf16.msra.mxu0 0
          %2550 = vmatprep.subr.bf16.mxu0 0
          %2551 = vmatpush1.bf16.msra.mxu0 0
          %2552 = vmatprep.subr.bf16.mxu0 0
          %2553 = vmatpush1.bf16.msra.mxu0 0
          %2554 = vmatprep.subr.bf16.mxu0 0
          %2555 = vmatpush1.bf16.msra.mxu0 0
          %2556 = vmatprep.subr.bf16.mxu0 0
          %2557 = vmatpush1.bf16.msra.mxu0 0
          %2558 = vmatprep.subr.bf16.mxu0 0
          %2559 = vmatpush1.bf16.msra.mxu0 0
          %2560 = vmatprep.subr.bf16.mxu0 0
          %2561 = vmatpush1.bf16.msra.mxu0 0
          %2562 = vmatprep.subr.bf16.mxu0 0
          %2563 = vmatpush1.bf16.msra.mxu0 0
          %2564 = vmatprep.subr.bf16.mxu0 0
          %2565 = vmatpush1.bf16.msra.mxu0 0
          %2566 = vmatprep.subr.bf16.mxu0 0
          %2567 = vmatpush1.bf16.msra.mxu0 0
          %2568 = vmatprep.subr.bf16.mxu0 0
          %2569 = vmatpush1.bf16.msra.mxu0 0
          %2570 = vmatprep.subr.bf16.mxu0 0
          %2571 = vmatpush1.bf16.msra.mxu0 0
          %2572 = vmatprep.subr.bf16.mxu0 0
          %2573 = vmatpush1.bf16.msra.mxu0 0
          %2574 = vmatprep.mubr.bf16.mxu0 0
          %2575 = vmatmul.mubr.bf16.gmra.mrb[0].mxu0 %v1179
          %v2576 = vpop.f32.mrb[0].mxu0
          %v2577 = vadd.f32 %v2468, %v2576
          %v2578 = vpop.f32.mrb[0].mxu0
          %v2579 = vpop.f32.mrb[0].mxu0
          %v2580 = vadd.f32 %v2471, %v2579
          %v2581 = vpop.f32.mrb[0].mxu0
          %2582 = vmatprep.mubr.bf16.mxu0 0
          %2583 = vmatmul.mubr.bf16.gmra.mrb[0].mxu0 %v1182
          %v2584 = vpop.f32.mrb[0].mxu0
          %v2585 = vadd.f32 %v2476, %v2584
          %v2586 = vpop.f32.mrb[0].mxu0
          %v2587 = vpop.f32.mrb[0].mxu0
          %v2588 = vadd.f32 %v2479, %v2587
          %v2589 = vpop.f32.mrb[0].mxu0
          %2590 = vmatprep.mubr.bf16.mxu0 0
          %2591 = vmatmul.mubr.bf16.gmra.mrb[0].mxu0 %v1185
          %v2592 = vpop.f32.mrb[0].mxu0
          %v2593 = vadd.f32 %v2484, %v2592
          %v2594 = vpop.f32.mrb[0].mxu0
          %v2595 = vpop.f32.mrb[0].mxu0
          %v2596 = vadd.f32 %v2487, %v2595
          %v2597 = vpop.f32.mrb[0].mxu0
          %2598 = vmatprep.mubr.bf16.mxu0 0
          %2599 = vmatmul.mubr.bf16.gmra.mrb[0].mxu0 %v1188
          %v2600 = vpop.f32.mrb[0].mxu0
          %v2601 = vadd.f32 %v2492, %v2600
          %v2602 = vpop.f32.mrb[0].mxu0
          %v2603 = vpop.f32.mrb[0].mxu0
          %v2604 = vadd.f32 %v2495, %v2603
          %v2605 = vpop.f32.mrb[0].mxu0
          %2606 = vmatprep.mubr.bf16.mxu0 0
          %2607 = vmatmul.mubr.bf16.gmra.mrb[0].mxu0 %v1191
          %v2608 = vpop.f32.mrb[0].mxu0
          %v2609 = vadd.f32 %v2500, %v2608
          %v2610 = vpop.f32.mrb[0].mxu0
          %v2611 = vpop.f32.mrb[0].mxu0
          %v2612 = vadd.f32 %v2503, %v2611
          %v2613 = vpop.f32.mrb[0].mxu0
          %2614 = vmatprep.mubr.bf16.mxu0 0
          %2615 = vmatmul.mubr.bf16.gmra.mrb[0].mxu0 %v1194
          %v2616 = vpop.f32.mrb[0].mxu0
          %v2617 = vadd.f32 %v2508, %v2616
          %v2618 = vpop.f32.mrb[0].mxu0
          %v2619 = vpop.f32.mrb[0].mxu0
          %v2620 = vadd.f32 %v2511, %v2619
          %v2621 = vpop.f32.mrb[0].mxu0
          %2622 = vmatprep.mubr.bf16.mxu0 0
          %2623 = vmatmul.mubr.bf16.gmra.mrb[0].mxu0 %v1197
          %v2624 = vpop.f32.mrb[0].mxu0
          %v2625 = vadd.f32 %v2516, %v2624
          %v2626 = vpop.f32.mrb[0].mxu0
          %v2627 = vpop.f32.mrb[0].mxu0
          %v2628 = vadd.f32 %v2519, %v2627
          %v2629 = vpop.f32.mrb[0].mxu0
          %2630 = vmatprep.mubr.bf16.mxu0 0
          %2631 = vmatmul.mubr.bf16.gmra.mrb[0].mxu0 %v1200
          %v2632 = vpop.f32.mrb[0].mxu0
          %v2633 = vadd.f32 %v2524, %v2632
          %v2634 = vpop.f32.mrb[0].mxu0
          %v2635 = vpop.f32.mrb[0].mxu0
          %v2636 = vadd.f32 %v2527, %v2635
          %v2637 = vpop.f32.mrb[0].mxu0
          %2638 = vdwg.mxu0
          %v2639 = vld [vmem:[%s9] sm:$0x1]
          %v2641 = vlaneseq
          %v2642 = vshrl.u32 %v2641, 7
          %v2643 = vsub.s32 0, %v2642
          %v2644 = vrot.slane %v2639, %v2643
          %v2646 = vadd.f32 %v2577, %v2644
          %v2647 = vadd.f32 %v2580, %v2644
          %v2648 = vadd.f32 %v2585, %v2644
          %v2649 = vadd.f32 %v2588, %v2644
          %v2650 = vadd.f32 %v2593, %v2644
          %v2651 = vadd.f32 %v2596, %v2644
          %v2652 = vadd.f32 %v2601, %v2644
          %v2653 = vadd.f32 %v2604, %v2644
          %v2654 = vadd.f32 %v2609, %v2644
          %v2655 = vadd.f32 %v2612, %v2644
          %v2656 = vadd.f32 %v2617, %v2644
          %v2657 = vadd.f32 %v2620, %v2644
          %v2658 = vadd.f32 %v2625, %v2644
          %v2659 = vadd.f32 %v2628, %v2644
          %v2660 = vadd.f32 %v2633, %v2644
          %v2661 = vadd.f32 %v2636, %v2644
          %vm2662 = vcmp.gt.f32.partialorder %v2646, 0.0
          %vm2663 = vcmp.gt.f32.partialorder %v2647, 0.0
          %vm2664 = vcmp.gt.f32.partialorder %v2648, 0.0
          %vm2665 = vcmp.gt.f32.partialorder %v2649, 0.0
          %vm2666 = vcmp.gt.f32.partialorder %v2650, 0.0
          %vm2667 = vcmp.gt.f32.partialorder %v2651, 0.0
          %vm2668 = vcmp.gt.f32.partialorder %v2652, 0.0
          %vm2669 = vcmp.gt.f32.partialorder %v2653, 0.0
          %vm2670 = vcmp.gt.f32.partialorder %v2654, 0.0
          %vm2671 = vcmp.gt.f32.partialorder %v2655, 0.0
          %vm2672 = vcmp.gt.f32.partialorder %v2656, 0.0
          %vm2673 = vcmp.gt.f32.partialorder %v2657, 0.0
          %vm2674 = vcmp.gt.f32.partialorder %v2658, 0.0
          %vm2675 = vcmp.gt.f32.partialorder %v2659, 0.0
          %vm2676 = vcmp.gt.f32.partialorder %v2660, 0.0
          %vm2677 = vcmp.gt.f32.partialorder %v2661, 0.0
          %v2678 = vmul.f32 %v2646, 0.01
          %v2679 = vmul.f32 %v2647, 0.01
          %v2680 = vmul.f32 %v2648, 0.01
          %v2681 = vmul.f32 %v2649, 0.01
          %v2682 = vmul.f32 %v2650, 0.01
          %v2683 = vmul.f32 %v2651, 0.01
          %v2684 = vmul.f32 %v2652, 0.01
          %v2685 = vmul.f32 %v2653, 0.01
          %v2686 = vmul.f32 %v2654, 0.01
          %v2687 = vmul.f32 %v2655, 0.01
          %v2688 = vmul.f32 %v2656, 0.01
          %v2689 = vmul.f32 %v2657, 0.01
          %v2690 = vmul.f32 %v2658, 0.01
          %v2691 = vmul.f32 %v2659, 0.01
          %v2692 = vmul.f32 %v2660, 0.01
          %v2693 = vmul.f32 %v2661, 0.01
          %v2694 = vsel %vm2662, %v2646, %v2678
          %v2695 = vsel %vm2663, %v2647, %v2679
          %v2696 = vsel %vm2664, %v2648, %v2680
          %v2697 = vsel %vm2665, %v2649, %v2681
          %v2698 = vsel %vm2666, %v2650, %v2682
          %v2699 = vsel %vm2667, %v2651, %v2683
          %v2700 = vsel %vm2668, %v2652, %v2684
          %v2701 = vsel %vm2669, %v2653, %v2685
          %v2702 = vsel %vm2670, %v2654, %v2686
          %v2703 = vsel %vm2671, %v2655, %v2687
          %v2704 = vsel %vm2672, %v2656, %v2688
          %v2705 = vsel %vm2673, %v2657, %v2689
          %v2706 = vsel %vm2674, %v2658, %v2690
          %v2707 = vsel %vm2675, %v2659, %v2691
          %v2708 = vsel %vm2676, %v2660, %v2692
          %v2709 = vsel %vm2677, %v2661, %v2693
          %2711 = vset.pattern.permute.xlu0 0
          %2712 = vperm.xlu0 %2711, %v2382
          %v2713 = vpop.permute.xlu0 %2712
          %2716 = vset.pattern.permute.xlu0 0
          %2717 = vperm.xlu0 %2716, %v2384
          %v2718 = vpop.permute.xlu0 %2717
          %2721 = vset.pattern.permute.xlu0 0
          %2722 = vperm.xlu0 %2721, %v2386
          %v2723 = vpop.permute.xlu0 %2722
          %2726 = vset.pattern.permute.xlu0 0
          %2727 = vperm.xlu0 %2726, %v2388
          %v2728 = vpop.permute.xlu0 %2727
          %2731 = vset.pattern.permute.xlu0 0
          %2732 = vperm.xlu0 %2731, %v2390
          %v2733 = vpop.permute.xlu0 %2732
          %2736 = vset.pattern.permute.xlu0 0
          %2737 = vperm.xlu0 %2736, %v2392
          %v2738 = vpop.permute.xlu0 %2737
          %2741 = vset.pattern.permute.xlu0 0
          %2742 = vperm.xlu0 %2741, %v2394
          %v2743 = vpop.permute.xlu0 %2742
          %2746 = vset.pattern.permute.xlu0 0
          %2747 = vperm.xlu0 %2746, %v2396
          %v2748 = vpop.permute.xlu0 %2747
          %2751 = vset.pattern.permute.xlu0 0
          %2752 = vperm.xlu0 %2751, %v2398
          %v2753 = vpop.permute.xlu0 %2752
          %2756 = vset.pattern.permute.xlu0 0
          %2757 = vperm.xlu0 %2756, %v2400
          %v2758 = vpop.permute.xlu0 %2757
          %2761 = vset.pattern.permute.xlu0 0
          %2762 = vperm.xlu0 %2761, %v2402
          %v2763 = vpop.permute.xlu0 %2762
          %2766 = vset.pattern.permute.xlu0 0
          %2767 = vperm.xlu0 %2766, %v2404
          %v2768 = vpop.permute.xlu0 %2767
          %2771 = vset.pattern.permute.xlu0 0
          %2772 = vperm.xlu0 %2771, %v2406
          %v2773 = vpop.permute.xlu0 %2772
          %2776 = vset.pattern.permute.xlu0 0
          %2777 = vperm.xlu0 %2776, %v2408
          %v2778 = vpop.permute.xlu0 %2777
          %2781 = vset.pattern.permute.xlu0 0
          %2782 = vperm.xlu0 %2781, %v2410
          %v2783 = vpop.permute.xlu0 %2782
          %2786 = vset.pattern.permute.xlu0 0
          %2787 = vperm.xlu0 %2786, %v2412
          %v2788 = vpop.permute.xlu0 %2787
          %2790 = vset.pattern.permute.xlu0 1
          %2791 = vperm.xlu0 %2790, %v2382
          %v2792 = vpop.permute.xlu0 %2791
          %2794 = vset.pattern.permute.xlu0 1
          %2795 = vperm.xlu0 %2794, %v2384
          %v2796 = vpop.permute.xlu0 %2795
          %2798 = vset.pattern.permute.xlu0 1
          %2799 = vperm.xlu0 %2798, %v2386
          %v2800 = vpop.permute.xlu0 %2799
          %2802 = vset.pattern.permute.xlu0 1
          %2803 = vperm.xlu0 %2802, %v2388
          %v2804 = vpop.permute.xlu0 %2803
          %2806 = vset.pattern.permute.xlu0 1
          %2807 = vperm.xlu0 %2806, %v2390
          %v2808 = vpop.permute.xlu0 %2807
          %2810 = vset.pattern.permute.xlu0 1
          %2811 = vperm.xlu0 %2810, %v2392
          %v2812 = vpop.permute.xlu0 %2811
          %2814 = vset.pattern.permute.xlu0 1
          %2815 = vperm.xlu0 %2814, %v2394
          %v2816 = vpop.permute.xlu0 %2815
          %2818 = vset.pattern.permute.xlu0 1
          %2819 = vperm.xlu0 %2818, %v2396
          %v2820 = vpop.permute.xlu0 %2819
          %2822 = vset.pattern.permute.xlu0 1
          %2823 = vperm.xlu0 %2822, %v2398
          %v2824 = vpop.permute.xlu0 %2823
          %2826 = vset.pattern.permute.xlu0 1
          %2827 = vperm.xlu0 %2826, %v2400
          %v2828 = vpop.permute.xlu0 %2827
          %2830 = vset.pattern.permute.xlu0 1
          %2831 = vperm.xlu0 %2830, %v2402
          %v2832 = vpop.permute.xlu0 %2831
          %2834 = vset.pattern.permute.xlu0 1
          %2835 = vperm.xlu0 %2834, %v2404
          %v2836 = vpop.permute.xlu0 %2835
          %2838 = vset.pattern.permute.xlu0 1
          %2839 = vperm.xlu0 %2838, %v2406
          %v2840 = vpop.permute.xlu0 %2839
          %2842 = vset.pattern.permute.xlu0 1
          %2843 = vperm.xlu0 %2842, %v2408
          %v2844 = vpop.permute.xlu0 %2843
          %2846 = vset.pattern.permute.xlu0 1
          %2847 = vperm.xlu0 %2846, %v2410
          %v2848 = vpop.permute.xlu0 %2847
          %2850 = vset.pattern.permute.xlu0 1
          %2851 = vperm.xlu0 %2850, %v2412
          %v2852 = vpop.permute.xlu0 %2851
          %2854 = vset.pattern.permute.xlu0 2
          %2855 = vperm.xlu0 %2854, %v2382
          %v2856 = vpop.permute.xlu0 %2855
          %2858 = vset.pattern.permute.xlu0 2
          %2859 = vperm.xlu0 %2858, %v2384
          %v2860 = vpop.permute.xlu0 %2859
          %2862 = vset.pattern.permute.xlu0 2
          %2863 = vperm.xlu0 %2862, %v2386
          %v2864 = vpop.permute.xlu0 %2863
          %2866 = vset.pattern.permute.xlu0 2
          %2867 = vperm.xlu0 %2866, %v2388
          %v2868 = vpop.permute.xlu0 %2867
          %2870 = vset.pattern.permute.xlu0 2
          %2871 = vperm.xlu0 %2870, %v2390
          %v2872 = vpop.permute.xlu0 %2871
          %2874 = vset.pattern.permute.xlu0 2
          %2875 = vperm.xlu0 %2874, %v2392
          %v2876 = vpop.permute.xlu0 %2875
          %2878 = vset.pattern.permute.xlu0 2
          %2879 = vperm.xlu0 %2878, %v2394
          %v2880 = vpop.permute.xlu0 %2879
          %2882 = vset.pattern.permute.xlu0 2
          %2883 = vperm.xlu0 %2882, %v2396
          %v2884 = vpop.permute.xlu0 %2883
          %2886 = vset.pattern.permute.xlu0 2
          %2887 = vperm.xlu0 %2886, %v2398
          %v2888 = vpop.permute.xlu0 %2887
          %2890 = vset.pattern.permute.xlu0 2
          %2891 = vperm.xlu0 %2890, %v2400
          %v2892 = vpop.permute.xlu0 %2891
          %2894 = vset.pattern.permute.xlu0 2
          %2895 = vperm.xlu0 %2894, %v2402
          %v2896 = vpop.permute.xlu0 %2895
          %2898 = vset.pattern.permute.xlu0 2
          %2899 = vperm.xlu0 %2898, %v2404
          %v2900 = vpop.permute.xlu0 %2899
          %2902 = vset.pattern.permute.xlu0 2
          %2903 = vperm.xlu0 %2902, %v2406
          %v2904 = vpop.permute.xlu0 %2903
          %2906 = vset.pattern.permute.xlu0 2
          %2907 = vperm.xlu0 %2906, %v2408
          %v2908 = vpop.permute.xlu0 %2907
          %2910 = vset.pattern.permute.xlu0 2
          %2911 = vperm.xlu0 %2910, %v2410
          %v2912 = vpop.permute.xlu0 %2911
          %2914 = vset.pattern.permute.xlu0 2
          %2915 = vperm.xlu0 %2914, %v2412
          %v2916 = vpop.permute.xlu0 %2915
          %v2918 = vsel %vm1044, %v2713, %v2792
          %v2919 = vsel %vm1044, %v2718, %v2796
          %v2920 = vsel %vm1044, %v2723, %v2800
          %v2921 = vsel %vm1044, %v2728, %v2804
          %v2922 = vsel %vm1044, %v2733, %v2808
          %v2923 = vsel %vm1044, %v2738, %v2812
          %v2924 = vsel %vm1044, %v2743, %v2816
          %v2925 = vsel %vm1044, %v2748, %v2820
          %v2926 = vsel %vm1044, %v2753, %v2824
          %v2927 = vsel %vm1044, %v2758, %v2828
          %v2928 = vsel %vm1044, %v2763, %v2832
          %v2929 = vsel %vm1044, %v2768, %v2836
          %v2930 = vsel %vm1044, %v2773, %v2840
          %v2931 = vsel %vm1044, %v2778, %v2844
          %v2932 = vsel %vm1044, %v2783, %v2848
          %v2933 = vsel %vm1044, %v2788, %v2852
          %vm2934 = vcmask 523264
          %v2935 = vsel %vm2934, %v2918, %v2856
          %v2936 = vsel %vm2934, %v2919, %v2860
          %v2937 = vsel %vm2934, %v2920, %v2864
          %v2938 = vsel %vm2934, %v2921, %v2868
          %v2939 = vsel %vm2934, %v2922, %v2872
          %v2940 = vsel %vm2934, %v2923, %v2876
          %v2941 = vsel %vm2934, %v2924, %v2880
          %v2942 = vsel %vm2934, %v2925, %v2884
          %v2943 = vsel %vm2934, %v2926, %v2888
          %v2944 = vsel %vm2934, %v2927, %v2892
          %v2945 = vsel %vm2934, %v2928, %v2896
          %v2946 = vsel %vm2934, %v2929, %v2900
          %v2947 = vsel %vm2934, %v2930, %v2904
          %v2948 = vsel %vm2934, %v2931, %v2908
          %v2949 = vsel %vm2934, %v2932, %v2912
          %v2950 = vsel %vm2934, %v2933, %v2916
          %v2951 = vmul.f32 %v2694, %v2935
          %v2952 = vmul.f32 %v2695, %v2936
          %v2953 = vmul.f32 %v2696, %v2937
          %v2954 = vmul.f32 %v2697, %v2938
          %v2955 = vmul.f32 %v2698, %v2939
          %v2956 = vmul.f32 %v2699, %v2940
          %v2957 = vmul.f32 %v2700, %v2941
          %v2958 = vmul.f32 %v2701, %v2942
          %v2959 = vmul.f32 %v2702, %v2943
          %v2960 = vmul.f32 %v2703, %v2944
          %v2961 = vmul.f32 %v2704, %v2945
          %v2962 = vmul.f32 %v2705, %v2946
          %v2963 = vmul.f32 %v2706, %v2947
          %v2964 = vmul.f32 %v2707, %v2948
          %v2965 = vmul.f32 %v2708, %v2949
          %v2966 = vmul.f32 %v2709, %v2950
          %v2967 = vpack.c.bf16 %v2952, %v2951
          %v2968 = vpack.c.bf16 %v2954, %v2953
          %v2969 = vpack.c.bf16 %v2956, %v2955
          %v2970 = vpack.c.bf16 %v2958, %v2957
          %v2971 = vpack.c.bf16 %v2960, %v2959
          %v2972 = vpack.c.bf16 %v2962, %v2961
          %v2973 = vpack.c.bf16 %v2964, %v2963
          %v2974 = vpack.c.bf16 %v2966, %v2965
          %v2975 = vld [vmem:[%s10] sm:$0xf]
          %v2976 = vld [vmem:[%s10 + $0x4] sm:$0xf]
          %v2977 = vld [vmem:[%s10 + $0x8] sm:$0xf]
          %v2978 = vld [vmem:[%s10 + $0xc] sm:$0xf]
          %v2979 = vld [vmem:[%s10 + $0x10] sm:$0xf]
          %v2980 = vld [vmem:[%s10 + $0x14] sm:$0xf]
          %v2981 = vld [vmem:[%s10 + $0x18] sm:$0xf]
          %v2982 = vld [vmem:[%s10 + $0x1c] sm:$0xf]
          %v2983 = vld [vmem:[%s10 + $0x20] sm:$0xf]
          %v2984 = vld [vmem:[%s10 + $0x24] sm:$0xf]
          %v2985 = vld [vmem:[%s10 + $0x28] sm:$0xf]
          %v2986 = vld [vmem:[%s10 + $0x2c] sm:$0xf]
          %v2987 = vpack.c.bf16 %v2384, %v2382
          %v2988 = vpack.c.bf16 %v2388, %v2386
          %v2989 = vpack.c.bf16 %v2392, %v2390
          %v2990 = vpack.c.bf16 %v2396, %v2394
          %v2991 = vpack.c.bf16 %v2400, %v2398
          %v2992 = vpack.c.bf16 %v2404, %v2402
          %v2993 = vpack.c.bf16 %v2408, %v2406
          %v2994 = vpack.c.bf16 %v2412, %v2410
          %v2995 = vld [vmem:[%s11] sm:$0x3]
          %vm2996 = vcmask 23552
          %v2998 = vsel %vm2996, %v2987, 0
          %v3001 = vsel %vm2996, %v2988, 0
          %v3004 = vsel %vm2996, %v2989, 0
          %v3007 = vsel %vm2996, %v2990, 0
          %v3010 = vsel %vm2996, %v2991, 0
          %v3013 = vsel %vm2996, %v2992, 0
          %v3016 = vsel %vm2996, %v2993, 0
          %v3019 = vsel %vm2996, %v2994, 0
          %vm3021 = vcmask 1040384
          %vm3022 = vcmask 1041408
          %v3023 = vsel %vm3021, 4294967295, 65535
          %v3024 = vsel %vm3022, %v3023, 0
          %v3026 = vand.u32 %v2995, %v3024
          %3028 = vmatprep.subr.bf16.mxu0 0
          %3029 = vmatpush1.bf16.msra.mxu0 %v3026
          %3030 = vmatprep.subr.bf16.mxu0 0
          %3031 = vmatpush1.bf16.msra.mxu0 0
          %3032 = vmatprep.subr.bf16.mxu0 0
          %3033 = vmatpush1.bf16.msra.mxu0 0
          %3034 = vmatprep.subr.bf16.mxu0 0
          %3035 = vmatpush1.bf16.msra.mxu0 0
          %3036 = vmatprep.subr.bf16.mxu0 0
          %3037 = vmatpush1.bf16.msra.mxu0 0
          %3038 = vmatprep.subr.bf16.mxu0 0
          %3039 = vmatpush1.bf16.msra.mxu0 0
          %3040 = vmatprep.subr.bf16.mxu0 0
          %3041 = vmatpush1.bf16.msra.mxu0 0
          %3042 = vmatprep.subr.bf16.mxu0 0
          %3043 = vmatpush1.bf16.msra.mxu0 0
          %3044 = vmatprep.subr.bf16.mxu0 0
          %3045 = vmatpush1.bf16.msra.mxu0 0
          %3046 = vmatprep.subr.bf16.mxu0 0
          %3047 = vmatpush1.bf16.msra.mxu0 0
          %3048 = vmatprep.subr.bf16.mxu0 0
          %3049 = vmatpush1.bf16.msra.mxu0 0
          %3050 = vmatprep.subr.bf16.mxu0 0
          %3051 = vmatpush1.bf16.msra.mxu0 0
          %3052 = vmatprep.subr.bf16.mxu0 0
          %3053 = vmatpush1.bf16.msra.mxu0 0
          %3054 = vmatprep.subr.bf16.mxu0 0
          %3055 = vmatpush1.bf16.msra.mxu0 0
          %3056 = vmatprep.subr.bf16.mxu0 0
          %3057 = vmatpush1.bf16.msra.mxu0 0
          %3058 = vmatprep.subr.bf16.mxu0 0
          %3059 = vmatpush1.bf16.msra.mxu0 0
          %3060 = vmatprep.mubr.bf16.mxu0 0
          %3061 = vmatmul.mubr.bf16.gmra.mrb[0].mxu0 %v2998
          %v3062 = vpop.f32.mrb[0].mxu0
          %v3063 = vadd.f32 0.0, %v3062
          %v3064 = vpop.f32.mrb[0].mxu0
          %v3065 = vpop.f32.mrb[0].mxu0
          %v3066 = vadd.f32 0.0, %v3065
          %v3067 = vpop.f32.mrb[0].mxu0
          %3068 = vmatprep.mubr.bf16.mxu0 0
          %3069 = vmatmul.mubr.bf16.gmra.mrb[0].mxu0 %v3001
          %v3070 = vpop.f32.mrb[0].mxu0
          %v3071 = vadd.f32 0.0, %v3070
          %v3072 = vpop.f32.mrb[0].mxu0
          %v3073 = vpop.f32.mrb[0].mxu0
          %v3074 = vadd.f32 0.0, %v3073
          %v3075 = vpop.f32.mrb[0].mxu0
          %3076 = vmatprep.mubr.bf16.mxu0 0
          %3077 = vmatmul.mubr.bf16.gmra.mrb[0].mxu0 %v3004
          %v3078 = vpop.f32.mrb[0].mxu0
          %v3079 = vadd.f32 0.0, %v3078
          %v3080 = vpop.f32.mrb[0].mxu0
          %v3081 = vpop.f32.mrb[0].mxu0
          %v3082 = vadd.f32 0.0, %v3081
          %v3083 = vpop.f32.mrb[0].mxu0
          %3084 = vmatprep.mubr.bf16.mxu0 0
          %3085 = vmatmul.mubr.bf16.gmra.mrb[0].mxu0 %v3007
          %v3086 = vpop.f32.mrb[0].mxu0
          %v3087 = vadd.f32 0.0, %v3086
          %v3088 = vpop.f32.mrb[0].mxu0
          %v3089 = vpop.f32.mrb[0].mxu0
          %v3090 = vadd.f32 0.0, %v3089
          %v3091 = vpop.f32.mrb[0].mxu0
          %3092 = vmatprep.mubr.bf16.mxu0 0
          %3093 = vmatmul.mubr.bf16.gmra.mrb[0].mxu0 %v3010
          %v3094 = vpop.f32.mrb[0].mxu0
          %v3095 = vadd.f32 0.0, %v3094
          %v3096 = vpop.f32.mrb[0].mxu0
          %v3097 = vpop.f32.mrb[0].mxu0
          %v3098 = vadd.f32 0.0, %v3097
          %v3099 = vpop.f32.mrb[0].mxu0
          %3100 = vmatprep.mubr.bf16.mxu0 0
          %3101 = vmatmul.mubr.bf16.gmra.mrb[0].mxu0 %v3013
          %v3102 = vpop.f32.mrb[0].mxu0
          %v3103 = vadd.f32 0.0, %v3102
          %v3104 = vpop.f32.mrb[0].mxu0
          %v3105 = vpop.f32.mrb[0].mxu0
          %v3106 = vadd.f32 0.0, %v3105
          %v3107 = vpop.f32.mrb[0].mxu0
          %3108 = vmatprep.mubr.bf16.mxu0 0
          %3109 = vmatmul.mubr.bf16.gmra.mrb[0].mxu0 %v3016
          %v3110 = vpop.f32.mrb[0].mxu0
          %v3111 = vadd.f32 0.0, %v3110
          %v3112 = vpop.f32.mrb[0].mxu0
          %v3113 = vpop.f32.mrb[0].mxu0
          %v3114 = vadd.f32 0.0, %v3113
          %v3115 = vpop.f32.mrb[0].mxu0
          %3116 = vmatprep.mubr.bf16.mxu0 0
          %3117 = vmatmul.mubr.bf16.gmra.mrb[0].mxu0 %v3019
          %v3118 = vpop.f32.mrb[0].mxu0
          %v3119 = vadd.f32 0.0, %v3118
          %v3120 = vpop.f32.mrb[0].mxu0
          %v3121 = vpop.f32.mrb[0].mxu0
          %v3122 = vadd.f32 0.0, %v3121
          %v3123 = vpop.f32.mrb[0].mxu0
          %3124 = vdwg.mxu0
          %v3137 = vunpack.c.l.b16 %v2975
          %v3138 = vunpack.c.l.b16 %v2976
          %v3139 = vunpack.c.l.b16 %v2977
          %v3140 = vunpack.c.l.b16 %v2978
          %v3141 = vunpack.c.l.b16 %v2979
          %v3142 = vunpack.c.l.b16 %v2980
          %v3143 = vunpack.c.l.b16 %v2981
          %v3144 = vunpack.c.l.b16 %v2982
          %v3145 = vunpack.c.l.b16 %v2983
          %v3146 = vunpack.c.l.b16 %v2984
          %v3147 = vunpack.c.l.b16 %v2985
          %v3148 = vunpack.c.l.b16 %v2986
          %v3149 = vpack.c.b16 %v3138, %v3137
          %v3150 = vpack.c.b16 %v3140, %v3139
          %v3151 = vpack.c.b16 %v3142, %v3141
          %v3152 = vpack.c.b16 %v3144, %v3143
          %v3153 = vpack.c.b16 %v3146, %v3145
          %v3154 = vpack.c.b16 %v3148, %v3147
          %v3162 = vsel %vm1433, %v2967, 0
          %v3165 = vsel %vm1433, %v2968, 0
          %v3168 = vsel %vm1433, %v2969, 0
          %v3171 = vsel %vm1433, %v2970, 0
          %v3174 = vsel %vm1433, %v2971, 0
          %v3177 = vsel %vm1433, %v2972, 0
          %v3180 = vsel %vm1433, %v2973, 0
          %v3183 = vsel %vm1433, %v2974, 0
          %3185 = vmatprep.subr.bf16.mxu0 0
          %3186 = vmatpush1.bf16.msra.mxu0 %v3149
          %3187 = vmatprep.subr.bf16.mxu0 0
          %3188 = vmatpush1.bf16.msra.mxu0 %v3150
          %3189 = vmatprep.subr.bf16.mxu0 0
          %3190 = vmatpush1.bf16.msra.mxu0 %v3151
          %3191 = vmatprep.subr.bf16.mxu0 0
          %3192 = vmatpush1.bf16.msra.mxu0 %v3152
          %3193 = vmatprep.subr.bf16.mxu0 0
          %3194 = vmatpush1.bf16.msra.mxu0 %v3153
          %3195 = vmatprep.subr.bf16.mxu0 0
          %3196 = vmatpush1.bf16.msra.mxu0 %v3154
          %3197 = vmatprep.subr.bf16.mxu0 0
          %3198 = vmatpush1.bf16.msra.mxu0 0
          %3199 = vmatprep.subr.bf16.mxu0 0
          %3200 = vmatpush1.bf16.msra.mxu0 0
          %3201 = vmatprep.subr.bf16.mxu0 0
          %3202 = vmatpush1.bf16.msra.mxu0 0
          %3203 = vmatprep.subr.bf16.mxu0 0
          %3204 = vmatpush1.bf16.msra.mxu0 0
          %3205 = vmatprep.subr.bf16.mxu0 0
          %3206 = vmatpush1.bf16.msra.mxu0 0
          %3207 = vmatprep.subr.bf16.mxu0 0
          %3208 = vmatpush1.bf16.msra.mxu0 0
          %3209 = vmatprep.subr.bf16.mxu0 0
          %3210 = vmatpush1.bf16.msra.mxu0 0
          %3211 = vmatprep.subr.bf16.mxu0 0
          %3212 = vmatpush1.bf16.msra.mxu0 0
          %3213 = vmatprep.subr.bf16.mxu0 0
          %3214 = vmatpush1.bf16.msra.mxu0 0
          %3215 = vmatprep.subr.bf16.mxu0 0
          %3216 = vmatpush1.bf16.msra.mxu0 0
          %3217 = vmatprep.mubr.bf16.mxu0 0
          %3218 = vmatmul.mubr.bf16.gmra.mrb[0].mxu0 %v3162
          %v3219 = vpop.f32.mrb[0].mxu0
          %v3220 = vadd.f32 %v3063, %v3219
          %v3221 = vpop.f32.mrb[0].mxu0
          %v3222 = vpop.f32.mrb[0].mxu0
          %v3223 = vadd.f32 %v3066, %v3222
          %v3224 = vpop.f32.mrb[0].mxu0
          %3225 = vmatprep.mubr.bf16.mxu0 0
          %3226 = vmatmul.mubr.bf16.gmra.mrb[0].mxu0 %v3165
          %v3227 = vpop.f32.mrb[0].mxu0
          %v3228 = vadd.f32 %v3071, %v3227
          %v3229 = vpop.f32.mrb[0].mxu0
          %v3230 = vpop.f32.mrb[0].mxu0
          %v3231 = vadd.f32 %v3074, %v3230
          %v3232 = vpop.f32.mrb[0].mxu0
          %3233 = vmatprep.mubr.bf16.mxu0 0
          %3234 = vmatmul.mubr.bf16.gmra.mrb[0].mxu0 %v3168
          %v3235 = vpop.f32.mrb[0].mxu0
          %v3236 = vadd.f32 %v3079, %v3235
          %v3237 = vpop.f32.mrb[0].mxu0
          %v3238 = vpop.f32.mrb[0].mxu0
          %v3239 = vadd.f32 %v3082, %v3238
          %v3240 = vpop.f32.mrb[0].mxu0
          %3241 = vmatprep.mubr.bf16.mxu0 0
          %3242 = vmatmul.mubr.bf16.gmra.mrb[0].mxu0 %v3171
          %v3243 = vpop.f32.mrb[0].mxu0
          %v3244 = vadd.f32 %v3087, %v3243
          %v3245 = vpop.f32.mrb[0].mxu0
          %v3246 = vpop.f32.mrb[0].mxu0
          %v3247 = vadd.f32 %v3090, %v3246
          %v3248 = vpop.f32.mrb[0].mxu0
          %3249 = vmatprep.mubr.bf16.mxu0 0
          %3250 = vmatmul.mubr.bf16.gmra.mrb[0].mxu0 %v3174
          %v3251 = vpop.f32.mrb[0].mxu0
          %v3252 = vadd.f32 %v3095, %v3251
          %v3253 = vpop.f32.mrb[0].mxu0
          %v3254 = vpop.f32.mrb[0].mxu0
          %v3255 = vadd.f32 %v3098, %v3254
          %v3256 = vpop.f32.mrb[0].mxu0
          %3257 = vmatprep.mubr.bf16.mxu0 0
          %3258 = vmatmul.mubr.bf16.gmra.mrb[0].mxu0 %v3177
          %v3259 = vpop.f32.mrb[0].mxu0
          %v3260 = vadd.f32 %v3103, %v3259
          %v3261 = vpop.f32.mrb[0].mxu0
          %v3262 = vpop.f32.mrb[0].mxu0
          %v3263 = vadd.f32 %v3106, %v3262
          %v3264 = vpop.f32.mrb[0].mxu0
          %3265 = vmatprep.mubr.bf16.mxu0 0
          %3266 = vmatmul.mubr.bf16.gmra.mrb[0].mxu0 %v3180
          %v3267 = vpop.f32.mrb[0].mxu0
          %v3268 = vadd.f32 %v3111, %v3267
          %v3269 = vpop.f32.mrb[0].mxu0
          %v3270 = vpop.f32.mrb[0].mxu0
          %v3271 = vadd.f32 %v3114, %v3270
          %v3272 = vpop.f32.mrb[0].mxu0
          %3273 = vmatprep.mubr.bf16.mxu0 0
          %3274 = vmatmul.mubr.bf16.gmra.mrb[0].mxu0 %v3183
          %v3275 = vpop.f32.mrb[0].mxu0
          %v3276 = vadd.f32 %v3119, %v3275
          %v3277 = vpop.f32.mrb[0].mxu0
          %v3278 = vpop.f32.mrb[0].mxu0
          %v3279 = vadd.f32 %v3122, %v3278
          %v3280 = vpop.f32.mrb[0].mxu0
          %3281 = vdwg.mxu0
          %v3282 = vld [vmem:[#allocation4] sm:$0xff]
          %v3283 = vld [vmem:[#allocation4 + $0x8] sm:$0xff]
          %v3284 = vld [vmem:[#allocation4 + $0x10] sm:$0xff]
          %v3285 = vpack.c.bf16 %v3223, %v3220
          %v3286 = vpack.c.bf16 %v3231, %v3228
          %v3287 = vpack.c.bf16 %v3239, %v3236
          %v3288 = vpack.c.bf16 %v3247, %v3244
          %v3289 = vpack.c.bf16 %v3255, %v3252
          %v3290 = vpack.c.bf16 %v3263, %v3260
          %v3291 = vpack.c.bf16 %v3271, %v3268
          %v3292 = vpack.c.bf16 %v3279, %v3276
          %3293 = vmatprep.subr.bf16.mxu0 0
          %3294 = vmatpush1.bf16.msra.mxu0 %v3285
          %3295 = vmatprep.subr.bf16.mxu0 0
          %3296 = vmatpush1.bf16.msra.mxu0 %v3286
          %3297 = vmatprep.subr.bf16.mxu0 0
          %3298 = vmatpush1.bf16.msra.mxu0 %v3287
          %3299 = vmatprep.subr.bf16.mxu0 0
          %3300 = vmatpush1.bf16.msra.mxu0 %v3288
          %3301 = vmatprep.subr.bf16.mxu0 0
          %3302 = vmatpush1.bf16.msra.mxu0 %v3289
          %3303 = vmatprep.subr.bf16.mxu0 0
          %3304 = vmatpush1.bf16.msra.mxu0 %v3290
          %3305 = vmatprep.subr.bf16.mxu0 0
          %3306 = vmatpush1.bf16.msra.mxu0 %v3291
          %3307 = vmatprep.subr.bf16.mxu0 0
          %3308 = vmatpush1.bf16.msra.mxu0 %v3292
          %3309 = vmatprep.subr.bf16.mxu0 0
          %3310 = vmatpush1.bf16.msra.mxu0 0
          %3311 = vmatprep.subr.bf16.mxu0 0
          %3312 = vmatpush1.bf16.msra.mxu0 0
          %3313 = vmatprep.subr.bf16.mxu0 0
          %3314 = vmatpush1.bf16.msra.mxu0 0
          %3315 = vmatprep.subr.bf16.mxu0 0
          %3316 = vmatpush1.bf16.msra.mxu0 0
          %3317 = vmatprep.subr.bf16.mxu0 0
          %3318 = vmatpush1.bf16.msra.mxu0 0
          %3319 = vmatprep.subr.bf16.mxu0 0
          %3320 = vmatpush1.bf16.msra.mxu0 0
          %3321 = vmatprep.subr.bf16.mxu0 0
          %3322 = vmatpush1.bf16.msra.mxu0 0
          %3323 = vmatprep.subr.bf16.mxu0 0
          %3324 = vmatpush1.bf16.msra.mxu0 0
          %3325 = vmatprep.mubr.bf16.mxu0 0
          %3326 = vmatmul.mubr.bf16.gmra.mrb[0].mxu0 %v759
          %v3327 = vpop.f32.mrb[0].mxu0
          %v3328 = vadd.f32 0.0, %v3327
          %v3329 = vpop.f32.mrb[0].mxu0
          %v3330 = vpop.f32.mrb[0].mxu0
          %v3331 = vadd.f32 0.0, %v3330
          %v3332 = vpop.f32.mrb[0].mxu0
          %3333 = vmatprep.mubr.bf16.mxu0 0
          %3334 = vmatmul.mubr.bf16.gmra.mrb[0].mxu0 %v760
          %v3335 = vpop.f32.mrb[0].mxu0
          %v3336 = vadd.f32 0.0, %v3335
          %v3337 = vpop.f32.mrb[0].mxu0
          %v3338 = vpop.f32.mrb[0].mxu0
          %v3339 = vpop.f32.mrb[0].mxu0
          %3340 = vdwg.mxu0
          %v3341 = vmul.f32 %v3328, 0.33333334
          %v3342 = vmul.f32 %v3331, 0.33333334
          %v3343 = vmul.f32 %v3336, 0.33333334
          %v3344 = vadd.f32 %v3282, %v3341
          %v3345 = vadd.f32 %v3283, %v3342
          %v3346 = vadd.f32 %v3284, %v3343
          %3347 = vst.msk [vmem:[#allocation4] sm:$0xff] %vm1044, %v3344
          %3348 = vst.msk [vmem:[#allocation4 + $0x8] sm:$0xff] %vm1044, %v3345
          %3349 = vst.msk [vmem:[#allocation4 + $0x10] sm:$0xff] %vm1044, %v3346
        $region84: #{tpu_custom_call.1} parent=71 // pred_fallthru
          _
        // Predicated region
        $region85: #{tpu_custom_call.1} parent=71 // pred_check
          %p3350 = pneg %p338
        $region86: #{tpu_custom_call.1} parent=71 // pred_check_branch
          %3352 = sbr.rel (%p3350) target = $region88
        $region87: #{tpu_custom_call.1} parent=71 // pred_region
          %s3354 = ssub.s32 384, 384
          %3355 = vsyncadd [#allocation5], %s3354
          %s3356 = sshll.u32 [#allocation4], 4
          %s3357 = int_to_ptr.vmem [resolvable:$true] %s3356
          %3362 = dma.vmem_to_hbm [thread:$0]  %s3357, 384, %s13, [#allocation5], 128, 128, 8
        $region88: #{tpu_custom_call.1} parent=71 // pred_fallthru
          _
        // Predicated region
        $region89: #{tpu_custom_call.1} parent=71 // pred_check
          %p3363 = pneg %p338
        $region90: #{tpu_custom_call.1} parent=71 // pred_check_branch
          %3365 = sbr.rel (%p3363) target = $region92
        $region91: #{tpu_custom_call.1} parent=71 // pred_region
          %3366 = dma.done [#allocation5], 384
        $region92: #{tpu_custom_call.1} parent=71 // pred_fallthru
          _
      $region72: #{tpu_custom_call.1} parent=5 // pred_fallthru
        _
      %p3367 = scmp.le.s32.totalorder 2, %s20
      // Predicated region
      $region93: #{tpu_custom_call.1} parent=5 // pred_check
        %p3368 = pneg %p3367
      $region94: #{tpu_custom_call.1} parent=5 // pred_check_branch
        %3370 = sbr.rel (%p3368) target = $region96
      $region95: #{tpu_custom_call.1} parent=5 // pred_region
        %s3371 = ssub.s32 %s20, 2
      $region96: #{tpu_custom_call.1} parent=5 // pred_fallthru
        _
    $region6: #{tpu_custom_call.1} parent=1 // loop_footer
      %s24 = sadd.s32 1, %s20
    $region7: #{tpu_custom_call.1} parent=1 // loop_footer_branch
      %19 = sbr.rel target = $region3
    $region8: #{tpu_custom_call.1} parent=1 // loop_exit
      _
    %3372 = vsyncpa [#allocation5], 1
    %s3373 = scalar_lea.sflag [#allocation5], 1
    %3374 = vsyncpa %s3373, 1

</llo_original>
